<compile_context>
chip_gen: v6e
topology: v6e:2x2x1
jax: 0.10.0
libtpu: 0.0.40
codegen_flags: <defaults>
</compile_context>

<pallas_src>
import functools

import jax
import jax.numpy as jnp
from jax.experimental import pallas as pl
from jax.experimental.pallas import tpu as pltpu


# ----------------------------------------------------------------------------
# Generic tiled matmul + bias kernel:  (M, K) @ (K, N) + (1, N) -> (M, N)
# Reused for: encoder patch projection, u_hs precompute, init_h / init_c, and
# the hoisted vocabulary projection.
# ----------------------------------------------------------------------------
def _matmul_bias_kernel(x_ref, w_ref, b_ref, o_ref):
    x = x_ref[...].astype(w_ref.dtype)        # bf16 operands, f32 accumulation
    o_ref[...] = (
        jnp.dot(x, w_ref[...], preferred_element_type=jnp.float32) + b_ref[...]
    ).astype(o_ref.dtype)


def matmul_bias(x, w, b, *, row_tile=256, out_dtype=jnp.float32):
    M, K = x.shape
    N = w.shape[1]
    rm = M if M <= row_tile else row_tile     # full rows or 256-row tiles
    grid = (pl.cdiv(M, rm),)
    return pl.pallas_call(
        _matmul_bias_kernel,
        grid=grid,
        in_specs=[
            pl.BlockSpec((rm, K), lambda i: (i, 0)),
            pl.BlockSpec((K, N), lambda i: (0, 0)),
            pl.BlockSpec((1, N), lambda i: (0, 0)),
        ],
        out_specs=pl.BlockSpec((rm, N), lambda i: (i, 0)),
        out_shape=jax.ShapeDtypeStruct((M, N), out_dtype),
        compiler_params=pltpu.CompilerParams(
            dimension_semantics=("parallel",),
        ),
    )(x, w, b)


# ----------------------------------------------------------------------------
# Encoder: patch-projection conv (kernel = stride = patch) as a matmul
# ----------------------------------------------------------------------------
def encoder_forward(images, w_enc, b_enc, patch):
    B, C, H, W = images.shape
    gh, gw = H // patch, W // patch
    P = gh * gw
    # NCHW -> NHWC -> (B*P, patch*patch*C)
    x = jnp.transpose(images, (0, 2, 3, 1))
    x = x.reshape(B, gh, patch, gw, patch, C)
    x = jnp.transpose(x, (0, 1, 3, 2, 4, 5)).reshape(B * P, patch * patch * C)
    enc_dim = w_enc.shape[1]
    feats = matmul_bias(x, w_enc, b_enc)                  # (B*P, ENC) f32
    return feats.reshape(B, P, enc_dim)


# ----------------------------------------------------------------------------
# Recurrent decoder kernel: one grid step == a block of `tb` timesteps.
# h/c persist in VMEM scratch across the (sequential) time grid axis.
# ----------------------------------------------------------------------------
def _decoder_block_kernel(
    embeds_ref,                 # (Tb, B, E)    bf16  -- this block's embeddings
    feats_ref,                  # (B, P, ENC)   f32   -- loop-invariant
    u_hs_ref,                   # (B, P, ATT)   f32   -- precomputed U(features)
    h0_ref, c0_ref,             # (B, DEC)      f32   -- precomputed init_h/c
    w_w_ref, w_b_ref,           # (DEC, ATT) bf16, (1, ATT) f32
    a_w_ref, a_b_ref,           # (1, ATT) f32, (1, 1) f32
    wih_e_ref,                  # (E, 4*DEC)    bf16
    wih_c_ref,                  # (ENC, 4*DEC)  bf16
    bih_ref,                    # (1, 4*DEC)    f32
    whh_ref,                    # (DEC, 4*DEC)  bf16
    bhh_ref,                    # (1, 4*DEC)    f32
    h_out_ref,                  # (Tb, B, DEC)  f32   output: hidden states
    alphas_ref,                 # (Tb, B, P)    f32   output: attention weights
    h_sc, c_sc,                 # VMEM scratch (B, DEC) f32
):
    tb = embeds_ref.shape[0]
    D = h_sc.shape[-1]

    # init_hidden_state(features) only before the very first timestep
    @pl.when(pl.program_id(0) == 0)
    def _():
        h_sc[...] = h0_ref[...]
        c_sc[...] = c0_ref[...]

    # loop-invariant loads, hoisted out of the unrolled time loop
    feats = feats_ref[...]                    # (B, P, ENC)
    u_hs = u_hs_ref[...]                      # (B, P, ATT)
    a_row = a_w_ref[...]                      # (1, ATT)
    a_b = a_b_ref[...]                        # (1, 1)

    # fully unrolled small time block (tb <= 4): amortizes per-step overhead
    for tt in range(tb):
        h = h_sc[...]
        c = c_sc[...]

        # --- Bahdanau attention (scores via VPU mul + lane reduce, no MXU) --
        w_ah = (
            jnp.dot(h.astype(w_w_ref.dtype), w_w_ref[...],
                    preferred_element_type=jnp.float32)
            + w_b_ref[...]
        )                                                  # (B, ATT)
        combined = jnp.tanh(u_hs + w_ah[:, None, :])       # (B, P, ATT)
        scores = jnp.sum(combined * a_row, axis=-1) + a_b  # (B, P)
        scores = scores - jnp.max(scores, axis=1, keepdims=True)
        e = jnp.exp(scores)
        alpha = e * pl.reciprocal(
            jnp.sum(e, axis=1, keepdims=True), approx=True
        )                                                  # (B, P)
        context = jnp.sum(feats * alpha[:, :, None], axis=1)   # (B, ENC)

        # --- LSTMCell (PyTorch gate order: i, f, g, o) ----------------------
        emb = embeds_ref[tt]                               # (B, E) bf16
        gates = (
            jnp.dot(emb, wih_e_ref[...], preferred_element_type=jnp.float32)
            + jnp.dot(context.astype(wih_c_ref.dtype), wih_c_ref[...],
                      preferred_element_type=jnp.float32)
            + bih_ref[...]
            + jnp.dot(h.astype(whh_ref.dtype), whh_ref[...],
                      preferred_element_type=jnp.float32)
            + bhh_ref[...]
        )                                                  # (B, 4*DEC) f32
        i_g = jax.nn.sigmoid(gates[:, 0 * D:1 * D])
        f_g = jax.nn.sigmoid(gates[:, 1 * D:2 * D])
        g_g = jnp.tanh(gates[:, 2 * D:3 * D])
        o_g = jax.nn.sigmoid(gates[:, 3 * D:4 * D])
        c_new = f_g * c + i_g * g_g
        h_new = o_g * jnp.tanh(c_new)

        h_sc[...] = h_new
        c_sc[...] = c_new
        h_out_ref[tt] = h_new                 # vocab projection hoisted out
        alphas_ref[tt] = alpha


def decoder_forward(features, captions, params):
    B, P, ENC = features.shape
    T = captions.shape[1] - 1                 # seq_length = len(captions[0]) - 1
    DEC = params["whh"].shape[0]
    ATT = params["u_w"].shape[1]
    V = params["fc_w"].shape[1]
    E = params["emb_table"].shape[1]

    # timestep block size (must divide T)
    tb = 1
    for cand in (4, 2):
        if T % cand == 0:
            tb = cand
            break

    # Embedding lookup (glue) + time-major layout (T, B, E)
    embeds = jnp.take(params["emb_table"], captions[:, :T], axis=0)  # (B,T,E)
    embeds = jnp.transpose(embeds, (1, 0, 2))                        # (T,B,E)

    # ---- loop-invariant precomputes, hoisted out of the recurrence ---------
    u_hs = matmul_bias(
        features.reshape(B * P, ENC), params["u_w"], params["u_b"]
    ).reshape(B, P, ATT)
    mean_f = jnp.mean(features, axis=1)                              # (B, ENC)
    h0 = matmul_bias(mean_f, params["ih_w"], params["ih_b"])         # (B, DEC)
    c0 = matmul_bias(mean_f, params["ic_w"], params["ic_b"])         # (B, DEC)

    a_row = params["a_w"].reshape(1, ATT).astype(jnp.float32)        # (1, ATT)
    a_b = params["a_b"]                                              # (1, 1)

    consts = [
        features, u_hs, h0, c0,
        params["w_w"], params["w_b"], a_row, a_b,
        params["wih_emb"], params["wih_ctx"], params["bih"],
        params["whh"], params["bhh"],
    ]

    def _const_spec(arr):
        nd = arr.ndim
        return pl.BlockSpec(arr.shape, lambda t: (0,) * nd)

    in_specs = [pl.BlockSpec((tb, B, E), lambda t: (t, 0, 0))] + [
        _const_spec(a) for a in consts
    ]
    out_specs = (
        pl.BlockSpec((tb, B, DEC), lambda t: (t, 0, 0)),             # hidden
        pl.BlockSpec((tb, B, P), lambda t: (t, 0, 0)),               # alphas
    )

    h_all, alphas_tb = pl.pallas_call(
        _decoder_block_kernel,
        grid=(T // tb,),
        in_specs=in_specs,
        out_specs=out_specs,
        out_shape=(
            jax.ShapeDtypeStruct((T, B, DEC), jnp.float32),
            jax.ShapeDtypeStruct((T, B, P), jnp.float32),
        ),
        scratch_shapes=[
            pltpu.VMEM((B, DEC), jnp.float32),   # h state
            pltpu.VMEM((B, DEC), jnp.float32),   # c state
        ],
        compiler_params=pltpu.CompilerParams(
            dimension_semantics=("arbitrary",),  # recurrence -> sequential
            vmem_limit_bytes=48 * 1024 * 1024,
        ),
    )(embeds, *consts)

    # ---- hoisted vocabulary projection: one big (T*B, DEC) @ (DEC, V) ------
    preds_flat = matmul_bias(
        h_all.reshape(T * B, DEC), params["fc_w"], params["fc_b"]
    )                                                                # (T*B, V)
    preds = jnp.transpose(preds_flat.reshape(T, B, V), (1, 0, 2))    # (B, T, V)
    alphas = jnp.transpose(alphas_tb, (1, 0, 2))                     # (B, T, P)
    return preds, alphas


# ----------------------------------------------------------------------------
# Parameter construction (deterministic) and full forward
# ----------------------------------------------------------------------------
def make_params(key, *, embed_size, vocab_size, attention_dim, encoder_dim,
                decoder_dim, in_chan, patch):
    ks = jax.random.split(key, 20)

    def n(i, shape, dtype=jnp.float32, s=0.05):
        return (s * jax.random.normal(ks[i], shape)).astype(dtype)

    bf16 = jnp.bfloat16
    return {
        # encoder patch-projection ("conv" with kernel = stride = patch)
        "enc_w": n(0, (patch * patch * in_chan, encoder_dim), bf16),
        "enc_b": n(1, (1, encoder_dim)),
        # embedding table
        "emb_table": n(2, (vocab_size, embed_size), bf16),
        # attention U, W, A
        "u_w": n(3, (encoder_dim, attention_dim), bf16),
        "u_b": n(4, (1, attention_dim)),
        "w_w": n(5, (decoder_dim, attention_dim), bf16),
        "w_b": n(6, (1, attention_dim)),
        "a_w": n(7, (attention_dim, 1)),
        "a_b": n(8, (1, 1)),
        # init_h / init_c
        "ih_w": n(9, (encoder_dim, decoder_dim), bf16),
        "ih_b": n(10, (1, decoder_dim)),
        "ic_w": n(11, (encoder_dim, decoder_dim), bf16),
        "ic_b": n(12, (1, decoder_dim)),
        # LSTMCell input->hidden weight, pre-split into (embedding | context)
        "wih_emb": n(13, (embed_size, 4 * decoder_dim), bf16),
        "wih_ctx": n(14, (encoder_dim, 4 * decoder_dim), bf16),
        "bih": n(15, (1, 4 * decoder_dim)),
        "whh": n(16, (decoder_dim, 4 * decoder_dim), bf16),
        "bhh": n(17, (1, 4 * decoder_dim)),
        # output fc (dropout == identity in eval)
        "fc_w": n(18, (decoder_dim, vocab_size), bf16),
        "fc_b": n(19, (1, vocab_size)),
    }


def encoder_decoder_forward(images, captions, params, *, patch):
    features = encoder_forward(images, params["enc_w"], params["enc_b"], patch)
    preds, alphas = decoder_forward(features, captions, params)
    return preds, alphas


if __name__ == "__main__":
    # Small, forward-consistent shapes
    B, C, H, W = 2, 3, 16, 16
    patch = 4                                  # -> P = (H/patch)*(W/patch) = 16
    embed_size, vocab_size = 32, 64
    attention_dim, encoder_dim, decoder_dim = 32, 32, 32
    T_plus_1 = 9                               # captions length -> seq_length = 8

    key = jax.random.PRNGKey(0)
    k_img, k_cap, k_par = jax.random.split(key, 3)
    images = jax.random.normal(k_img, (B, C, H, W), dtype=jnp.float32)
    captions = jax.random.randint(k_cap, (B, T_plus_1), 0, vocab_size,
                                  dtype=jnp.int32)

    params = make_params(
        k_par, embed_size=embed_size, vocab_size=vocab_size,
        attention_dim=attention_dim, encoder_dim=encoder_dim,
        decoder_dim=decoder_dim, in_chan=C, patch=patch,
    )

    fwd = jax.jit(functools.partial(encoder_decoder_forward, patch=patch))
    preds, alphas = fwd(images, captions, params)
    jax.block_until_ready((preds, alphas))

    assert preds.shape == (B, T_plus_1 - 1, vocab_size)
    assert alphas.shape == (B, T_plus_1 - 1, (H // patch) * (W // patch))
    assert bool(jnp.all(jnp.isfinite(preds))) and bool(jnp.all(jnp.isfinite(alphas)))
    print("KERNEL_OK")
</pallas_src>

<mosaic_0001>
module attributes {stable_mosaic.version = 11 : i64} {
  func.func @_matmul_bias_kernel(%arg0: i32, %arg1: memref<32x48xf32, #tpu.memory_space<vmem>>, %arg2: memref<48x32xbf16, #tpu.memory_space<vmem>>, %arg3: memref<1x32xf32, #tpu.memory_space<vmem>>, %arg4: memref<32x32xf32, #tpu.memory_space<vmem>>) attributes {dimension_semantics = [#tpu.dimension_semantics<parallel>], iteration_bounds = array<i64: 1>, scalar_prefetch = 0 : i64, scratch_operands = 0 : i64, tpu.core_type = #tpu.core_type<tc>, window_params = [{transform_indices = @transform_0, window_bounds = array<i64: 32, 48>}, {pipeline_mode = #tpu.pipeline_mode<synchronous>, transform_indices = @transform_1, window_bounds = array<i64: 48, 32>}, {pipeline_mode = #tpu.pipeline_mode<synchronous>, transform_indices = @transform_2, window_bounds = array<i64: 1, 32>}, {transform_indices = @transform_3, window_bounds = array<i64: 32, 32>}]} {
    %c0 = arith.constant 0 : index
    %c0_0 = arith.constant 0 : index
    %0 = vector.load %arg1[%c0, %c0_0] : memref<32x48xf32, #tpu.memory_space<vmem>>, vector<32x48xf32>
    %1 = arith.truncf %0 : vector<32x48xf32> to vector<32x48xbf16>
    %c0_1 = arith.constant 0 : index
    %c0_2 = arith.constant 0 : index
    %2 = vector.load %arg2[%c0_1, %c0_2] : memref<48x32xbf16, #tpu.memory_space<vmem>>, vector<48x32xbf16>
    %cst = arith.constant dense<0.000000e+00> : vector<32x32xf32>
    %3 = tpu.matmul %1, %2, %cst {dimension_numbers = #tpu.dot_dimension_numbers<[1], [0], [0], [1], [0, 0, 1, 1], [], []>} : vector<32x48xbf16>, vector<48x32xbf16>, vector<32x32xf32> -> vector<32x32xf32>
    %c0_3 = arith.constant 0 : index
    %c0_4 = arith.constant 0 : index
    %4 = vector.load %arg3[%c0_3, %c0_4] : memref<1x32xf32, #tpu.memory_space<vmem>>, vector<1x32xf32>
    %5 = vector.broadcast %4 : vector<1x32xf32> to vector<32x32xf32>
    %6 = arith.addf %3, %5 : vector<32x32xf32>
    %c0_5 = arith.constant 0 : index
    %c0_6 = arith.constant 0 : index
    %7 = vector.load %arg4[%c0_5, %c0_6] : memref<32x32xf32, #tpu.memory_space<vmem>>, vector<32x32xf32>
    tpu.vector_store %arg4[%c0_5, %c0_6], %6 {strides = array<i32>} : memref<32x32xf32, #tpu.memory_space<vmem>>, vector<32x32xf32>,
    return
  }
  func.func @transform_0(%arg0: i32) -> (i32, i32) {
    %c0_i32 = arith.constant 0 : i32
    %c0_i32_0 = arith.constant 0 : i32
    return %arg0, %c0_i32 : i32, i32
  }
  func.func @transform_1(%arg0: i32) -> (i32, i32) {
    %c0_i32 = arith.constant 0 : i32
    %c0_i32_0 = arith.constant 0 : i32
    %c0_i32_1 = arith.constant 0 : i32
    return %c0_i32, %c0_i32_0 : i32, i32
  }
  func.func @transform_2(%arg0: i32) -> (i32, i32) {
    %c0_i32 = arith.constant 0 : i32
    %c0_i32_0 = arith.constant 0 : i32
    %c0_i32_1 = arith.constant 0 : i32
    return %c0_i32, %c0_i32_0 : i32, i32
  }
  func.func @transform_3(%arg0: i32) -> (i32, i32) {
    %c0_i32 = arith.constant 0 : i32
    %c0_i32_0 = arith.constant 0 : i32
    return %arg0, %c0_i32 : i32, i32
  }
}

module attributes {stable_mosaic.version = 11 : i64} {
  func.func @_matmul_bias_kernel(%arg0: i32, %arg1: memref<2x32xf32, #tpu.memory_space<vmem>>, %arg2: memref<32x32xbf16, #tpu.memory_space<vmem>>, %arg3: memref<1x32xf32, #tpu.memory_space<vmem>>, %arg4: memref<2x32xf32, #tpu.memory_space<vmem>>) attributes {dimension_semantics = [#tpu.dimension_semantics<parallel>], iteration_bounds = array<i64: 1>, scalar_prefetch = 0 : i64, scratch_operands = 0 : i64, tpu.core_type = #tpu.core_type<tc>, window_params = [{transform_indices = @transform_0, window_bounds = array<i64: 2, 32>}, {pipeline_mode = #tpu.pipeline_mode<synchronous>, transform_indices = @transform_1, window_bounds = array<i64: 32, 32>}, {pipeline_mode = #tpu.pipeline_mode<synchronous>, transform_indices = @transform_2, window_bounds = array<i64: 1, 32>}, {transform_indices = @transform_3, window_bounds = array<i64: 2, 32>}]} {
    %c0 = arith.constant 0 : index
    %c0_0 = arith.constant 0 : index
    %0 = vector.load %arg1[%c0, %c0_0] : memref<2x32xf32, #tpu.memory_space<vmem>>, vector<2x32xf32>
    %1 = arith.truncf %0 : vector<2x32xf32> to vector<2x32xbf16>
    %c0_1 = arith.constant 0 : index
    %c0_2 = arith.constant 0 : index
    %2 = vector.load %arg2[%c0_1, %c0_2] : memref<32x32xbf16, #tpu.memory_space<vmem>>, vector<32x32xbf16>
    %cst = arith.constant dense<0.000000e+00> : vector<2x32xf32>
    %3 = tpu.matmul %1, %2, %cst {dimension_numbers = #tpu.dot_dimension_numbers<[1], [0], [0], [1], [0, 0, 1, 1], [], []>} : vector<2x32xbf16>, vector<32x32xbf16>, vector<2x32xf32> -> vector<2x32xf32>
    %c0_3 = arith.constant 0 : index
    %c0_4 = arith.constant 0 : index
    %4 = vector.load %arg3[%c0_3, %c0_4] : memref<1x32xf32, #tpu.memory_space<vmem>>, vector<1x32xf32>
    %5 = vector.broadcast %4 : vector<1x32xf32> to vector<2x32xf32>
    %6 = arith.addf %3, %5 : vector<2x32xf32>
    %c0_5 = arith.constant 0 : index
    %c0_6 = arith.constant 0 : index
    %7 = vector.load %arg4[%c0_5, %c0_6] : memref<2x32xf32, #tpu.memory_space<vmem>>, vector<2x32xf32>
    tpu.vector_store %arg4[%c0_5, %c0_6], %6 {strides = array<i32>} : memref<2x32xf32, #tpu.memory_space<vmem>>, vector<2x32xf32>,
    return
  }
  func.func @transform_0(%arg0: i32) -> (i32, i32) {
    %c0_i32 = arith.constant 0 : i32
    %c0_i32_0 = arith.constant 0 : i32
    return %arg0, %c0_i32 : i32, i32
  }
  func.func @transform_1(%arg0: i32) -> (i32, i32) {
    %c0_i32 = arith.constant 0 : i32
    %c0_i32_0 = arith.constant 0 : i32
    %c0_i32_1 = arith.constant 0 : i32
    return %c0_i32, %c0_i32_0 : i32, i32
  }
  func.func @transform_2(%arg0: i32) -> (i32, i32) {
    %c0_i32 = arith.constant 0 : i32
    %c0_i32_0 = arith.constant 0 : i32
    %c0_i32_1 = arith.constant 0 : i32
    return %c0_i32, %c0_i32_0 : i32, i32
  }
  func.func @transform_3(%arg0: i32) -> (i32, i32) {
    %c0_i32 = arith.constant 0 : i32
    %c0_i32_0 = arith.constant 0 : i32
    return %arg0, %c0_i32 : i32, i32
  }
}

module attributes {stable_mosaic.version = 11 : i64} {
  func.func @_matmul_bias_kernel(%arg0: i32, %arg1: memref<32x32xf32, #tpu.memory_space<vmem>>, %arg2: memref<32x32xbf16, #tpu.memory_space<vmem>>, %arg3: memref<1x32xf32, #tpu.memory_space<vmem>>, %arg4: memref<32x32xf32, #tpu.memory_space<vmem>>) attributes {dimension_semantics = [#tpu.dimension_semantics<parallel>], iteration_bounds = array<i64: 1>, scalar_prefetch = 0 : i64, scratch_operands = 0 : i64, tpu.core_type = #tpu.core_type<tc>, window_params = [{transform_indices = @transform_0, window_bounds = array<i64: 32, 32>}, {pipeline_mode = #tpu.pipeline_mode<synchronous>, transform_indices = @transform_1, window_bounds = array<i64: 32, 32>}, {pipeline_mode = #tpu.pipeline_mode<synchronous>, transform_indices = @transform_2, window_bounds = array<i64: 1, 32>}, {transform_indices = @transform_3, window_bounds = array<i64: 32, 32>}]} {
    %c0 = arith.constant 0 : index
    %c0_0 = arith.constant 0 : index
    %0 = vector.load %arg1[%c0, %c0_0] : memref<32x32xf32, #tpu.memory_space<vmem>>, vector<32x32xf32>
    %1 = arith.truncf %0 : vector<32x32xf32> to vector<32x32xbf16>
    %c0_1 = arith.constant 0 : index
    %c0_2 = arith.constant 0 : index
    %2 = vector.load %arg2[%c0_1, %c0_2] : memref<32x32xbf16, #tpu.memory_space<vmem>>, vector<32x32xbf16>
    %cst = arith.constant dense<0.000000e+00> : vector<32x32xf32>
    %3 = tpu.matmul %1, %2, %cst {dimension_numbers = #tpu.dot_dimension_numbers<[1], [0], [0], [1], [0, 0, 1, 1], [], []>} : vector<32x32xbf16>, vector<32x32xbf16>, vector<32x32xf32> -> vector<32x32xf32>
    %c0_3 = arith.constant 0 : index
    %c0_4 = arith.constant 0 : index
    %4 = vector.load %arg3[%c0_3, %c0_4] : memref<1x32xf32, #tpu.memory_space<vmem>>, vector<1x32xf32>
    %5 = vector.broadcast %4 : vector<1x32xf32> to vector<32x32xf32>
    %6 = arith.addf %3, %5 : vector<32x32xf32>
    %c0_5 = arith.constant 0 : index
    %c0_6 = arith.constant 0 : index
    %7 = vector.load %arg4[%c0_5, %c0_6] : memref<32x32xf32, #tpu.memory_space<vmem>>, vector<32x32xf32>
    tpu.vector_store %arg4[%c0_5, %c0_6], %6 {strides = array<i32>} : memref<32x32xf32, #tpu.memory_space<vmem>>, vector<32x32xf32>,
    return
  }
  func.func @transform_0(%arg0: i32) -> (i32, i32) {
    %c0_i32 = arith.constant 0 : i32
    %c0_i32_0 = arith.constant 0 : i32
    return %arg0, %c0_i32 : i32, i32
  }
  func.func @transform_1(%arg0: i32) -> (i32, i32) {
    %c0_i32 = arith.constant 0 : i32
    %c0_i32_0 = arith.constant 0 : i32
    %c0_i32_1 = arith.constant 0 : i32
    return %c0_i32, %c0_i32_0 : i32, i32
  }
  func.func @transform_2(%arg0: i32) -> (i32, i32) {
    %c0_i32 = arith.constant 0 : i32
    %c0_i32_0 = arith.constant 0 : i32
    %c0_i32_1 = arith.constant 0 : i32
    return %c0_i32, %c0_i32_0 : i32, i32
  }
  func.func @transform_3(%arg0: i32) -> (i32, i32) {
    %c0_i32 = arith.constant 0 : i32
    %c0_i32_0 = arith.constant 0 : i32
    return %arg0, %c0_i32 : i32, i32
  }
}

module attributes {stable_mosaic.version = 11 : i64} {
  func.func @_matmul_bias_kernel(%arg0: i32, %arg1: memref<16x32xf32, #tpu.memory_space<vmem>>, %arg2: memref<32x64xbf16, #tpu.memory_space<vmem>>, %arg3: memref<1x64xf32, #tpu.memory_space<vmem>>, %arg4: memref<16x64xf32, #tpu.memory_space<vmem>>) attributes {dimension_semantics = [#tpu.dimension_semantics<parallel>], iteration_bounds = array<i64: 1>, scalar_prefetch = 0 : i64, scratch_operands = 0 : i64, tpu.core_type = #tpu.core_type<tc>, window_params = [{transform_indices = @transform_0, window_bounds = array<i64: 16, 32>}, {pipeline_mode = #tpu.pipeline_mode<synchronous>, transform_indices = @transform_1, window_bounds = array<i64: 32, 64>}, {pipeline_mode = #tpu.pipeline_mode<synchronous>, transform_indices = @transform_2, window_bounds = array<i64: 1, 64>}, {transform_indices = @transform_3, window_bounds = array<i64: 16, 64>}]} {
    %c0 = arith.constant 0 : index
    %c0_0 = arith.constant 0 : index
    %0 = vector.load %arg1[%c0, %c0_0] : memref<16x32xf32, #tpu.memory_space<vmem>>, vector<16x32xf32>
    %1 = arith.truncf %0 : vector<16x32xf32> to vector<16x32xbf16>
    %c0_1 = arith.constant 0 : index
    %c0_2 = arith.constant 0 : index
    %2 = vector.load %arg2[%c0_1, %c0_2] : memref<32x64xbf16, #tpu.memory_space<vmem>>, vector<32x64xbf16>
    %cst = arith.constant dense<0.000000e+00> : vector<16x64xf32>
    %3 = tpu.matmul %1, %2, %cst {dimension_numbers = #tpu.dot_dimension_numbers<[1], [0], [0], [1], [0, 0, 1, 1], [], []>} : vector<16x32xbf16>, vector<32x64xbf16>, vector<16x64xf32> -> vector<16x64xf32>
    %c0_3 = arith.constant 0 : index
    %c0_4 = arith.constant 0 : index
    %4 = vector.load %arg3[%c0_3, %c0_4] : memref<1x64xf32, #tpu.memory_space<vmem>>, vector<1x64xf32>
    %5 = vector.broadcast %4 : vector<1x64xf32> to vector<16x64xf32>
    %6 = arith.addf %3, %5 : vector<16x64xf32>
    %c0_5 = arith.constant 0 : index
    %c0_6 = arith.constant 0 : index
    %7 = vector.load %arg4[%c0_5, %c0_6] : memref<16x64xf32, #tpu.memory_space<vmem>>, vector<16x64xf32>
    tpu.vector_store %arg4[%c0_5, %c0_6], %6 {strides = array<i32>} : memref<16x64xf32, #tpu.memory_space<vmem>>, vector<16x64xf32>,
    return
  }
  func.func @transform_0(%arg0: i32) -> (i32, i32) {
    %c0_i32 = arith.constant 0 : i32
    %c0_i32_0 = arith.constant 0 : i32
    return %arg0, %c0_i32 : i32, i32
  }
  func.func @transform_1(%arg0: i32) -> (i32, i32) {
    %c0_i32 = arith.constant 0 : i32
    %c0_i32_0 = arith.constant 0 : i32
    %c0_i32_1 = arith.constant 0 : i32
    return %c0_i32, %c0_i32_0 : i32, i32
  }
  func.func @transform_2(%arg0: i32) -> (i32, i32) {
    %c0_i32 = arith.constant 0 : i32
    %c0_i32_0 = arith.constant 0 : i32
    %c0_i32_1 = arith.constant 0 : i32
    return %c0_i32, %c0_i32_0 : i32, i32
  }
  func.func @transform_3(%arg0: i32) -> (i32, i32) {
    %c0_i32 = arith.constant 0 : i32
    %c0_i32_0 = arith.constant 0 : i32
    return %arg0, %c0_i32 : i32, i32
  }
}

module attributes {stable_mosaic.version = 11 : i64} {
  func.func @_decoder_block_kernel(%arg0: i32, %arg1: memref<4x2x32xbf16, #tpu.memory_space<vmem>>, %arg2: memref<2x16x32xf32, #tpu.memory_space<vmem>>, %arg3: memref<2x16x32xf32, #tpu.memory_space<vmem>>, %arg4: memref<2x32xf32, #tpu.memory_space<vmem>>, %arg5: memref<2x32xf32, #tpu.memory_space<vmem>>, %arg6: memref<32x32xbf16, #tpu.memory_space<vmem>>, %arg7: memref<1x32xf32, #tpu.memory_space<vmem>>, %arg8: memref<1x32xf32, #tpu.memory_space<vmem>>, %arg9: memref<1x1xf32, #tpu.memory_space<vmem>>, %arg10: memref<32x128xbf16, #tpu.memory_space<vmem>>, %arg11: memref<32x128xbf16, #tpu.memory_space<vmem>>, %arg12: memref<1x128xf32, #tpu.memory_space<vmem>>, %arg13: memref<32x128xbf16, #tpu.memory_space<vmem>>, %arg14: memref<1x128xf32, #tpu.memory_space<vmem>>, %arg15: memref<4x2x32xf32, #tpu.memory_space<vmem>>, %arg16: memref<4x2x16xf32, #tpu.memory_space<vmem>>, %arg17: memref<2x32xf32, #tpu.memory_space<vmem>>, %arg18: memref<2x32xf32, #tpu.memory_space<vmem>>) attributes {dimension_semantics = [#tpu.dimension_semantics<arbitrary>], iteration_bounds = array<i64: 2>, scalar_prefetch = 0 : i64, scratch_operands = 2 : i64, tpu.core_type = #tpu.core_type<tc>, window_params = [{transform_indices = @transform_0, window_bounds = array<i64: 4, 2, 32>}, {pipeline_mode = #tpu.pipeline_mode<synchronous>, transform_indices = @transform_1, window_bounds = array<i64: 2, 16, 32>}, {pipeline_mode = #tpu.pipeline_mode<synchronous>, transform_indices = @transform_2, window_bounds = array<i64: 2, 16, 32>}, {pipeline_mode = #tpu.pipeline_mode<synchronous>, transform_indices = @transform_3, window_bounds = array<i64: 2, 32>}, {pipeline_mode = #tpu.pipeline_mode<synchronous>, transform_indices = @transform_4, window_bounds = array<i64: 2, 32>}, {pipeline_mode = #tpu.pipeline_mode<synchronous>, transform_indices = @transform_5, window_bounds = array<i64: 32, 32>}, {pipeline_mode = #tpu.pipeline_mode<synchronous>, transform_indices = @transform_6, window_bounds = array<i64: 1, 32>}, {pipeline_mode = #tpu.pipeline_mode<synchronous>, transform_indices = @transform_7, window_bounds = array<i64: 1, 32>}, {pipeline_mode = #tpu.pipeline_mode<synchronous>, transform_indices = @transform_8, window_bounds = array<i64: 1, 1>}, {pipeline_mode = #tpu.pipeline_mode<synchronous>, transform_indices = @transform_9, window_bounds = array<i64: 32, 128>}, {pipeline_mode = #tpu.pipeline_mode<synchronous>, transform_indices = @transform_10, window_bounds = array<i64: 32, 128>}, {pipeline_mode = #tpu.pipeline_mode<synchronous>, transform_indices = @transform_11, window_bounds = array<i64: 1, 128>}, {pipeline_mode = #tpu.pipeline_mode<synchronous>, transform_indices = @transform_12, window_bounds = array<i64: 32, 128>}, {pipeline_mode = #tpu.pipeline_mode<synchronous>, transform_indices = @transform_13, window_bounds = array<i64: 1, 128>}, {transform_indices = @transform_14, window_bounds = array<i64: 4, 2, 32>}, {transform_indices = @transform_15, window_bounds = array<i64: 4, 2, 16>}]} {
    %c0_i32 = arith.constant 0 : i32
    %0 = arith.cmpi eq, %arg0, %c0_i32 : i32
    %1 = arith.extui %0 : i1 to i32
    %c0_i32_0 = arith.constant 0 : i32
    %2 = arith.cmpi ne, %1, %c0_i32_0 : i32
    scf.if %2 {
      %c0_174 = arith.constant 0 : index
      %c0_175 = arith.constant 0 : index
      %339 = vector.load %arg4[%c0_174, %c0_175] : memref<2x32xf32, #tpu.memory_space<vmem>>, vector<2x32xf32>
      %c0_176 = arith.constant 0 : index
      %c0_177 = arith.constant 0 : index
      %340 = vector.load %arg17[%c0_176, %c0_177] : memref<2x32xf32, #tpu.memory_space<vmem>>, vector<2x32xf32>
      tpu.vector_store %arg17[%c0_176, %c0_177], %339 {strides = array<i32>} : memref<2x32xf32, #tpu.memory_space<vmem>>, vector<2x32xf32>,
      %c0_178 = arith.constant 0 : index
      %c0_179 = arith.constant 0 : index
      %341 = vector.load %arg5[%c0_178, %c0_179] : memref<2x32xf32, #tpu.memory_space<vmem>>, vector<2x32xf32>
      %c0_180 = arith.constant 0 : index
      %c0_181 = arith.constant 0 : index
      %342 = vector.load %arg18[%c0_180, %c0_181] : memref<2x32xf32, #tpu.memory_space<vmem>>, vector<2x32xf32>
      tpu.vector_store %arg18[%c0_180, %c0_181], %341 {strides = array<i32>} : memref<2x32xf32, #tpu.memory_space<vmem>>, vector<2x32xf32>,
    } else {
    }
    %c0 = arith.constant 0 : index
    %c0_1 = arith.constant 0 : index
    %c0_2 = arith.constant 0 : index
    %3 = vector.load %arg2[%c0, %c0_1, %c0_2] : memref<2x16x32xf32, #tpu.memory_space<vmem>>, vector<2x16x32xf32>
    %c0_3 = arith.constant 0 : index
    %c0_4 = arith.constant 0 : index
    %c0_5 = arith.constant 0 : index
    %4 = vector.load %arg3[%c0_3, %c0_4, %c0_5] : memref<2x16x32xf32, #tpu.memory_space<vmem>>, vector<2x16x32xf32>
    %c0_6 = arith.constant 0 : index
    %c0_7 = arith.constant 0 : index
    %5 = vector.load %arg8[%c0_6, %c0_7] : memref<1x32xf32, #tpu.memory_space<vmem>>, vector<1x32xf32>
    %c0_8 = arith.constant 0 : index
    %c0_9 = arith.constant 0 : index
    %6 = vector.load %arg9[%c0_8, %c0_9] : memref<1x1xf32, #tpu.memory_space<vmem>>, vector<1x1xf32>
    %c0_10 = arith.constant 0 : index
    %c0_11 = arith.constant 0 : index
    %7 = vector.load %arg17[%c0_10, %c0_11] : memref<2x32xf32, #tpu.memory_space<vmem>>, vector<2x32xf32>
    %c0_12 = arith.constant 0 : index
    %c0_13 = arith.constant 0 : index
    %8 = vector.load %arg18[%c0_12, %c0_13] : memref<2x32xf32, #tpu.memory_space<vmem>>, vector<2x32xf32>
    %9 = arith.truncf %7 : vector<2x32xf32> to vector<2x32xbf16>
    %c0_14 = arith.constant 0 : index
    %c0_15 = arith.constant 0 : index
    %10 = vector.load %arg6[%c0_14, %c0_15] : memref<32x32xbf16, #tpu.memory_space<vmem>>, vector<32x32xbf16>
    %cst = arith.constant dense<0.000000e+00> : vector<2x32xf32>
    %11 = tpu.matmul %9, %10, %cst {dimension_numbers = #tpu.dot_dimension_numbers<[1], [0], [0], [1], [0, 0, 1, 1], [], []>} : vector<2x32xbf16>, vector<32x32xbf16>, vector<2x32xf32> -> vector<2x32xf32>
    %c0_16 = arith.constant 0 : index
    %c0_17 = arith.constant 0 : index
    %12 = vector.load %arg7[%c0_16, %c0_17] : memref<1x32xf32, #tpu.memory_space<vmem>>, vector<1x32xf32>
    %13 = vector.broadcast %12 : vector<1x32xf32> to vector<2x32xf32>
    %14 = arith.addf %11, %13 : vector<2x32xf32>
    %15 = vector.shape_cast %14 : vector<2x32xf32> to vector<2x1x32xf32>
    %16 = vector.broadcast %15 : vector<2x1x32xf32> to vector<2x16x32xf32>
    %17 = arith.addf %4, %16 : vector<2x16x32xf32>
    %18 = math.tanh %17 : vector<2x16x32xf32>
    %19 = vector.shape_cast %5 : vector<1x32xf32> to vector<1x1x32xf32>
    %20 = vector.broadcast %19 : vector<1x1x32xf32> to vector<2x16x32xf32>
    %21 = arith.mulf %18, %20 : vector<2x16x32xf32>
    %cst_18 = arith.constant dense<0.000000e+00> : vector<2x16xf32>
    %22 = vector.multi_reduction <add>, %21, %cst_18 [2] : vector<2x16x32xf32> to vector<2x16xf32>
    %23 = vector.broadcast %6 : vector<1x1xf32> to vector<2x16xf32>
    %24 = arith.addf %22, %23 : vector<2x16xf32>
    %cst_19 = arith.constant dense<0xFF800000> : vector<2xf32>
    %25 = vector.multi_reduction <maximumf>, %24, %cst_19 [1] : vector<2x16xf32> to vector<2xf32>
    %26 = vector.shape_cast %25 : vector<2xf32> to vector<2x1xf32>
    %27 = vector.broadcast %26 : vector<2x1xf32> to vector<2x16xf32>
    %28 = arith.subf %24, %27 : vector<2x16xf32>
    %29 = math.exp %28 : vector<2x16xf32>
    %cst_20 = arith.constant dense<0.000000e+00> : vector<2xf32>
    %30 = vector.multi_reduction <add>, %29, %cst_20 [1] : vector<2x16xf32> to vector<2xf32>
    %31 = vector.shape_cast %30 : vector<2xf32> to vector<2x1xf32>
    %32 = tpu.reciprocal %31 {approx = true} : vector<2x1xf32> -> vector<2x1xf32>
    %33 = vector.broadcast %32 : vector<2x1xf32> to vector<2x16xf32>
    %34 = arith.mulf %29, %33 : vector<2x16xf32>
    %35 = vector.shape_cast %34 : vector<2x16xf32> to vector<2x16x1xf32>
    %36 = vector.broadcast %35 : vector<2x16x1xf32> to vector<2x16x32xf32>
    %37 = arith.mulf %3, %36 : vector<2x16x32xf32>
    %cst_21 = arith.constant dense<0.000000e+00> : vector<2x32xf32>
    %38 = vector.multi_reduction <add>, %37, %cst_21 [1] : vector<2x16x32xf32> to vector<2x32xf32>
    %c0_22 = arith.constant 0 : index
    %c0_23 = arith.constant 0 : index
    %c0_24 = arith.constant 0 : index
    %39 = vector.load %arg1[%c0_22, %c0_23, %c0_24] : memref<4x2x32xbf16, #tpu.memory_space<vmem>>, vector<1x2x32xbf16>
    %40 = vector.shape_cast %39 : vector<1x2x32xbf16> to vector<2x32xbf16>
    %c0_25 = arith.constant 0 : index
    %c0_26 = arith.constant 0 : index
    %41 = vector.load %arg10[%c0_25, %c0_26] : memref<32x128xbf16, #tpu.memory_space<vmem>>, vector<32x128xbf16>
    %cst_27 = arith.constant dense<0.000000e+00> : vector<2x128xf32>
    %42 = tpu.matmul %40, %41, %cst_27 {dimension_numbers = #tpu.dot_dimension_numbers<[1], [0], [0], [1], [0, 0, 1, 1], [], []>} : vector<2x32xbf16>, vector<32x128xbf16>, vector<2x128xf32> -> vector<2x128xf32>
    %43 = arith.truncf %38 : vector<2x32xf32> to vector<2x32xbf16>
    %c0_28 = arith.constant 0 : index
    %c0_29 = arith.constant 0 : index
    %44 = vector.load %arg11[%c0_28, %c0_29] : memref<32x128xbf16, #tpu.memory_space<vmem>>, vector<32x128xbf16>
    %cst_30 = arith.constant dense<0.000000e+00> : vector<2x128xf32>
    %45 = tpu.matmul %43, %44, %cst_30 {dimension_numbers = #tpu.dot_dimension_numbers<[1], [0], [0], [1], [0, 0, 1, 1], [], []>} : vector<2x32xbf16>, vector<32x128xbf16>, vector<2x128xf32> -> vector<2x128xf32>
    %46 = arith.addf %42, %45 : vector<2x128xf32>
    %c0_31 = arith.constant 0 : index
    %c0_32 = arith.constant 0 : index
    %47 = vector.load %arg12[%c0_31, %c0_32] : memref<1x128xf32, #tpu.memory_space<vmem>>, vector<1x128xf32>
    %48 = vector.broadcast %47 : vector<1x128xf32> to vector<2x128xf32>
    %49 = arith.addf %46, %48 : vector<2x128xf32>
    %50 = arith.truncf %7 : vector<2x32xf32> to vector<2x32xbf16>
    %c0_33 = arith.constant 0 : index
    %c0_34 = arith.constant 0 : index
    %51 = vector.load %arg13[%c0_33, %c0_34] : memref<32x128xbf16, #tpu.memory_space<vmem>>, vector<32x128xbf16>
    %cst_35 = arith.constant dense<0.000000e+00> : vector<2x128xf32>
    %52 = tpu.matmul %50, %51, %cst_35 {dimension_numbers = #tpu.dot_dimension_numbers<[1], [0], [0], [1], [0, 0, 1, 1], [], []>} : vector<2x32xbf16>, vector<32x128xbf16>, vector<2x128xf32> -> vector<2x128xf32>
    %53 = arith.addf %49, %52 : vector<2x128xf32>
    %c0_36 = arith.constant 0 : index
    %c0_37 = arith.constant 0 : index
    %54 = vector.load %arg14[%c0_36, %c0_37] : memref<1x128xf32, #tpu.memory_space<vmem>>, vector<1x128xf32>
    %55 = vector.broadcast %54 : vector<1x128xf32> to vector<2x128xf32>
    %56 = arith.addf %53, %55 : vector<2x128xf32>
    %57 = vector.extract_strided_slice %56 {offsets = [0, 0], sizes = [2, 32], strides = [1, 1]} : vector<2x128xf32> to vector<2x32xf32>
    %58 = arith.negf %57 : vector<2x32xf32>
    %59 = math.exp %58 : vector<2x32xf32>
    %cst_38 = arith.constant 1.000000e+00 : f32
    %60 = vector.broadcast %cst_38 : f32 to vector<2x32xf32>
    %61 = arith.addf %60, %59 : vector<2x32xf32>
    %62 = arith.divf %60, %61 : vector<2x32xf32>
    %63 = vector.extract_strided_slice %56 {offsets = [0, 32], sizes = [2, 32], strides = [1, 1]} : vector<2x128xf32> to vector<2x32xf32>
    %64 = arith.negf %63 : vector<2x32xf32>
    %65 = math.exp %64 : vector<2x32xf32>
    %cst_39 = arith.constant 1.000000e+00 : f32
    %66 = vector.broadcast %cst_39 : f32 to vector<2x32xf32>
    %67 = arith.addf %66, %65 : vector<2x32xf32>
    %68 = arith.divf %66, %67 : vector<2x32xf32>
    %69 = vector.extract_strided_slice %56 {offsets = [0, 64], sizes = [2, 32], strides = [1, 1]} : vector<2x128xf32> to vector<2x32xf32>
    %70 = math.tanh %69 : vector<2x32xf32>
    %71 = vector.extract_strided_slice %56 {offsets = [0, 96], sizes = [2, 32], strides = [1, 1]} : vector<2x128xf32> to vector<2x32xf32>
    %72 = arith.negf %71 : vector<2x32xf32>
    %73 = math.exp %72 : vector<2x32xf32>
    %cst_40 = arith.constant 1.000000e+00 : f32
    %74 = vector.broadcast %cst_40 : f32 to vector<2x32xf32>
    %75 = arith.addf %74, %73 : vector<2x32xf32>
    %76 = arith.divf %74, %75 : vector<2x32xf32>
    %77 = arith.mulf %68, %8 : vector<2x32xf32>
    %78 = arith.mulf %62, %70 : vector<2x32xf32>
    %79 = arith.addf %77, %78 : vector<2x32xf32>
    %80 = math.tanh %79 : vector<2x32xf32>
    %81 = arith.mulf %76, %80 : vector<2x32xf32>
    %c0_41 = arith.constant 0 : index
    %c0_42 = arith.constant 0 : index
    %82 = vector.load %arg17[%c0_41, %c0_42] : memref<2x32xf32, #tpu.memory_space<vmem>>, vector<2x32xf32>
    tpu.vector_store %arg17[%c0_41, %c0_42], %81 {strides = array<i32>} : memref<2x32xf32, #tpu.memory_space<vmem>>, vector<2x32xf32>,
    %c0_43 = arith.constant 0 : index
    %c0_44 = arith.constant 0 : index
    %83 = vector.load %arg18[%c0_43, %c0_44] : memref<2x32xf32, #tpu.memory_space<vmem>>, vector<2x32xf32>
    tpu.vector_store %arg18[%c0_43, %c0_44], %79 {strides = array<i32>} : memref<2x32xf32, #tpu.memory_space<vmem>>, vector<2x32xf32>,
    %c0_45 = arith.constant 0 : index
    %c0_46 = arith.constant 0 : index
    %c0_47 = arith.constant 0 : index
    %84 = vector.load %arg15[%c0_45, %c0_46, %c0_47] : memref<4x2x32xf32, #tpu.memory_space<vmem>>, vector<1x2x32xf32>
    %85 = vector.shape_cast %84 : vector<1x2x32xf32> to vector<2x32xf32>
    %86 = vector.shape_cast %81 : vector<2x32xf32> to vector<1x2x32xf32>
    tpu.vector_store %arg15[%c0_45, %c0_46, %c0_47], %86 {strides = array<i32>} : memref<4x2x32xf32, #tpu.memory_space<vmem>>, vector<1x2x32xf32>,
    %c0_48 = arith.constant 0 : index
    %c0_49 = arith.constant 0 : index
    %c0_50 = arith.constant 0 : index
    %87 = vector.load %arg16[%c0_48, %c0_49, %c0_50] : memref<4x2x16xf32, #tpu.memory_space<vmem>>, vector<1x2x16xf32>
    %88 = vector.shape_cast %87 : vector<1x2x16xf32> to vector<2x16xf32>
    %89 = vector.shape_cast %34 : vector<2x16xf32> to vector<1x2x16xf32>
    tpu.vector_store %arg16[%c0_48, %c0_49, %c0_50], %89 {strides = array<i32>} : memref<4x2x16xf32, #tpu.memory_space<vmem>>, vector<1x2x16xf32>,
    %c0_51 = arith.constant 0 : index
    %c0_52 = arith.constant 0 : index
    %90 = vector.load %arg17[%c0_51, %c0_52] : memref<2x32xf32, #tpu.memory_space<vmem>>, vector<2x32xf32>
    %c0_53 = arith.constant 0 : index
    %c0_54 = arith.constant 0 : index
    %91 = vector.load %arg18[%c0_53, %c0_54] : memref<2x32xf32, #tpu.memory_space<vmem>>, vector<2x32xf32>
    %92 = arith.truncf %90 : vector<2x32xf32> to vector<2x32xbf16>
    %c0_55 = arith.constant 0 : index
    %c0_56 = arith.constant 0 : index
    %93 = vector.load %arg6[%c0_55, %c0_56] : memref<32x32xbf16, #tpu.memory_space<vmem>>, vector<32x32xbf16>
    %cst_57 = arith.constant dense<0.000000e+00> : vector<2x32xf32>
    %94 = tpu.matmul %92, %93, %cst_57 {dimension_numbers = #tpu.dot_dimension_numbers<[1], [0], [0], [1], [0, 0, 1, 1], [], []>} : vector<2x32xbf16>, vector<32x32xbf16>, vector<2x32xf32> -> vector<2x32xf32>
    %c0_58 = arith.constant 0 : index
    %c0_59 = arith.constant 0 : index
    %95 = vector.load %arg7[%c0_58, %c0_59] : memref<1x32xf32, #tpu.memory_space<vmem>>, vector<1x32xf32>
    %96 = vector.broadcast %95 : vector<1x32xf32> to vector<2x32xf32>
    %97 = arith.addf %94, %96 : vector<2x32xf32>
    %98 = vector.shape_cast %97 : vector<2x32xf32> to vector<2x1x32xf32>
    %99 = vector.broadcast %98 : vector<2x1x32xf32> to vector<2x16x32xf32>
    %100 = arith.addf %4, %99 : vector<2x16x32xf32>
    %101 = math.tanh %100 : vector<2x16x32xf32>
    %102 = vector.shape_cast %5 : vector<1x32xf32> to vector<1x1x32xf32>
    %103 = vector.broadcast %102 : vector<1x1x32xf32> to vector<2x16x32xf32>
    %104 = arith.mulf %101, %103 : vector<2x16x32xf32>
    %cst_60 = arith.constant dense<0.000000e+00> : vector<2x16xf32>
    %105 = vector.multi_reduction <add>, %104, %cst_60 [2] : vector<2x16x32xf32> to vector<2x16xf32>
    %106 = vector.broadcast %6 : vector<1x1xf32> to vector<2x16xf32>
    %107 = arith.addf %105, %106 : vector<2x16xf32>
    %cst_61 = arith.constant dense<0xFF800000> : vector<2xf32>
    %108 = vector.multi_reduction <maximumf>, %107, %cst_61 [1] : vector<2x16xf32> to vector<2xf32>
    %109 = vector.shape_cast %108 : vector<2xf32> to vector<2x1xf32>
    %110 = vector.broadcast %109 : vector<2x1xf32> to vector<2x16xf32>
    %111 = arith.subf %107, %110 : vector<2x16xf32>
    %112 = math.exp %111 : vector<2x16xf32>
    %cst_62 = arith.constant dense<0.000000e+00> : vector<2xf32>
    %113 = vector.multi_reduction <add>, %112, %cst_62 [1] : vector<2x16xf32> to vector<2xf32>
    %114 = vector.shape_cast %113 : vector<2xf32> to vector<2x1xf32>
    %115 = tpu.reciprocal %114 {approx = true} : vector<2x1xf32> -> vector<2x1xf32>
    %116 = vector.broadcast %115 : vector<2x1xf32> to vector<2x16xf32>
    %117 = arith.mulf %112, %116 : vector<2x16xf32>
    %118 = vector.shape_cast %117 : vector<2x16xf32> to vector<2x16x1xf32>
    %119 = vector.broadcast %118 : vector<2x16x1xf32> to vector<2x16x32xf32>
    %120 = arith.mulf %3, %119 : vector<2x16x32xf32>
    %cst_63 = arith.constant dense<0.000000e+00> : vector<2x32xf32>
    %121 = vector.multi_reduction <add>, %120, %cst_63 [1] : vector<2x16x32xf32> to vector<2x32xf32>
    %c1 = arith.constant 1 : index
    %c0_64 = arith.constant 0 : index
    %c0_65 = arith.constant 0 : index
    %122 = vector.load %arg1[%c1, %c0_64, %c0_65] : memref<4x2x32xbf16, #tpu.memory_space<vmem>>, vector<1x2x32xbf16>
    %123 = vector.shape_cast %122 : vector<1x2x32xbf16> to vector<2x32xbf16>
    %c0_66 = arith.constant 0 : index
    %c0_67 = arith.constant 0 : index
    %124 = vector.load %arg10[%c0_66, %c0_67] : memref<32x128xbf16, #tpu.memory_space<vmem>>, vector<32x128xbf16>
    %cst_68 = arith.constant dense<0.000000e+00> : vector<2x128xf32>
    %125 = tpu.matmul %123, %124, %cst_68 {dimension_numbers = #tpu.dot_dimension_numbers<[1], [0], [0], [1], [0, 0, 1, 1], [], []>} : vector<2x32xbf16>, vector<32x128xbf16>, vector<2x128xf32> -> vector<2x128xf32>
    %126 = arith.truncf %121 : vector<2x32xf32> to vector<2x32xbf16>
    %c0_69 = arith.constant 0 : index
    %c0_70 = arith.constant 0 : index
    %127 = vector.load %arg11[%c0_69, %c0_70] : memref<32x128xbf16, #tpu.memory_space<vmem>>, vector<32x128xbf16>
    %cst_71 = arith.constant dense<0.000000e+00> : vector<2x128xf32>
    %128 = tpu.matmul %126, %127, %cst_71 {dimension_numbers = #tpu.dot_dimension_numbers<[1], [0], [0], [1], [0, 0, 1, 1], [], []>} : vector<2x32xbf16>, vector<32x128xbf16>, vector<2x128xf32> -> vector<2x128xf32>
    %129 = arith.addf %125, %128 : vector<2x128xf32>
    %c0_72 = arith.constant 0 : index
    %c0_73 = arith.constant 0 : index
    %130 = vector.load %arg12[%c0_72, %c0_73] : memref<1x128xf32, #tpu.memory_space<vmem>>, vector<1x128xf32>
    %131 = vector.broadcast %130 : vector<1x128xf32> to vector<2x128xf32>
    %132 = arith.addf %129, %131 : vector<2x128xf32>
    %133 = arith.truncf %90 : vector<2x32xf32> to vector<2x32xbf16>
    %c0_74 = arith.constant 0 : index
    %c0_75 = arith.constant 0 : index
    %134 = vector.load %arg13[%c0_74, %c0_75] : memref<32x128xbf16, #tpu.memory_space<vmem>>, vector<32x128xbf16>
    %cst_76 = arith.constant dense<0.000000e+00> : vector<2x128xf32>
    %135 = tpu.matmul %133, %134, %cst_76 {dimension_numbers = #tpu.dot_dimension_numbers<[1], [0], [0], [1], [0, 0, 1, 1], [], []>} : vector<2x32xbf16>, vector<32x128xbf16>, vector<2x128xf32> -> vector<2x128xf32>
    %136 = arith.addf %132, %135 : vector<2x128xf32>
    %c0_77 = arith.constant 0 : index
    %c0_78 = arith.constant 0 : index
    %137 = vector.load %arg14[%c0_77, %c0_78] : memref<1x128xf32, #tpu.memory_space<vmem>>, vector<1x128xf32>
    %138 = vector.broadcast %137 : vector<1x128xf32> to vector<2x128xf32>
    %139 = arith.addf %136, %138 : vector<2x128xf32>
    %140 = vector.extract_strided_slice %139 {offsets = [0, 0], sizes = [2, 32], strides = [1, 1]} : vector<2x128xf32> to vector<2x32xf32>
    %141 = arith.negf %140 : vector<2x32xf32>
    %142 = math.exp %141 : vector<2x32xf32>
    %cst_79 = arith.constant 1.000000e+00 : f32
    %143 = vector.broadcast %cst_79 : f32 to vector<2x32xf32>
    %144 = arith.addf %143, %142 : vector<2x32xf32>
    %145 = arith.divf %143, %144 : vector<2x32xf32>
    %146 = vector.extract_strided_slice %139 {offsets = [0, 32], sizes = [2, 32], strides = [1, 1]} : vector<2x128xf32> to vector<2x32xf32>
    %147 = arith.negf %146 : vector<2x32xf32>
    %148 = math.exp %147 : vector<2x32xf32>
    %cst_80 = arith.constant 1.000000e+00 : f32
    %149 = vector.broadcast %cst_80 : f32 to vector<2x32xf32>
    %150 = arith.addf %149, %148 : vector<2x32xf32>
    %151 = arith.divf %149, %150 : vector<2x32xf32>
    %152 = vector.extract_strided_slice %139 {offsets = [0, 64], sizes = [2, 32], strides = [1, 1]} : vector<2x128xf32> to vector<2x32xf32>
    %153 = math.tanh %152 : vector<2x32xf32>
    %154 = vector.extract_strided_slice %139 {offsets = [0, 96], sizes = [2, 32], strides = [1, 1]} : vector<2x128xf32> to vector<2x32xf32>
    %155 = arith.negf %154 : vector<2x32xf32>
    %156 = math.exp %155 : vector<2x32xf32>
    %cst_81 = arith.constant 1.000000e+00 : f32
    %157 = vector.broadcast %cst_81 : f32 to vector<2x32xf32>
    %158 = arith.addf %157, %156 : vector<2x32xf32>
    %159 = arith.divf %157, %158 : vector<2x32xf32>
    %160 = arith.mulf %151, %91 : vector<2x32xf32>
    %161 = arith.mulf %145, %153 : vector<2x32xf32>
    %162 = arith.addf %160, %161 : vector<2x32xf32>
    %163 = math.tanh %162 : vector<2x32xf32>
    %164 = arith.mulf %159, %163 : vector<2x32xf32>
    %c0_82 = arith.constant 0 : index
    %c0_83 = arith.constant 0 : index
    %165 = vector.load %arg17[%c0_82, %c0_83] : memref<2x32xf32, #tpu.memory_space<vmem>>, vector<2x32xf32>
    tpu.vector_store %arg17[%c0_82, %c0_83], %164 {strides = array<i32>} : memref<2x32xf32, #tpu.memory_space<vmem>>, vector<2x32xf32>,
    %c0_84 = arith.constant 0 : index
    %c0_85 = arith.constant 0 : index
    %166 = vector.load %arg18[%c0_84, %c0_85] : memref<2x32xf32, #tpu.memory_space<vmem>>, vector<2x32xf32>
    tpu.vector_store %arg18[%c0_84, %c0_85], %162 {strides = array<i32>} : memref<2x32xf32, #tpu.memory_space<vmem>>, vector<2x32xf32>,
    %c1_86 = arith.constant 1 : index
    %c0_87 = arith.constant 0 : index
    %c0_88 = arith.constant 0 : index
    %167 = vector.load %arg15[%c1_86, %c0_87, %c0_88] : memref<4x2x32xf32, #tpu.memory_space<vmem>>, vector<1x2x32xf32>
    %168 = vector.shape_cast %167 : vector<1x2x32xf32> to vector<2x32xf32>
    %169 = vector.shape_cast %164 : vector<2x32xf32> to vector<1x2x32xf32>
    tpu.vector_store %arg15[%c1_86, %c0_87, %c0_88], %169 {strides = array<i32>} : memref<4x2x32xf32, #tpu.memory_space<vmem>>, vector<1x2x32xf32>,
    %c1_89 = arith.constant 1 : index
    %c0_90 = arith.constant 0 : index
    %c0_91 = arith.constant 0 : index
    %170 = vector.load %arg16[%c1_89, %c0_90, %c0_91] : memref<4x2x16xf32, #tpu.memory_space<vmem>>, vector<1x2x16xf32>
    %171 = vector.shape_cast %170 : vector<1x2x16xf32> to vector<2x16xf32>
    %172 = vector.shape_cast %117 : vector<2x16xf32> to vector<1x2x16xf32>
    tpu.vector_store %arg16[%c1_89, %c0_90, %c0_91], %172 {strides = array<i32>} : memref<4x2x16xf32, #tpu.memory_space<vmem>>, vector<1x2x16xf32>,
    %c0_92 = arith.constant 0 : index
    %c0_93 = arith.constant 0 : index
    %173 = vector.load %arg17[%c0_92, %c0_93] : memref<2x32xf32, #tpu.memory_space<vmem>>, vector<2x32xf32>
    %c0_94 = arith.constant 0 : index
    %c0_95 = arith.constant 0 : index
    %174 = vector.load %arg18[%c0_94, %c0_95] : memref<2x32xf32, #tpu.memory_space<vmem>>, vector<2x32xf32>
    %175 = arith.truncf %173 : vector<2x32xf32> to vector<2x32xbf16>
    %c0_96 = arith.constant 0 : index
    %c0_97 = arith.constant 0 : index
    %176 = vector.load %arg6[%c0_96, %c0_97] : memref<32x32xbf16, #tpu.memory_space<vmem>>, vector<32x32xbf16>
    %cst_98 = arith.constant dense<0.000000e+00> : vector<2x32xf32>
    %177 = tpu.matmul %175, %176, %cst_98 {dimension_numbers = #tpu.dot_dimension_numbers<[1], [0], [0], [1], [0, 0, 1, 1], [], []>} : vector<2x32xbf16>, vector<32x32xbf16>, vector<2x32xf32> -> vector<2x32xf32>
    %c0_99 = arith.constant 0 : index
    %c0_100 = arith.constant 0 : index
    %178 = vector.load %arg7[%c0_99, %c0_100] : memref<1x32xf32, #tpu.memory_space<vmem>>, vector<1x32xf32>
    %179 = vector.broadcast %178 : vector<1x32xf32> to vector<2x32xf32>
    %180 = arith.addf %177, %179 : vector<2x32xf32>
    %181 = vector.shape_cast %180 : vector<2x32xf32> to vector<2x1x32xf32>
    %182 = vector.broadcast %181 : vector<2x1x32xf32> to vector<2x16x32xf32>
    %183 = arith.addf %4, %182 : vector<2x16x32xf32>
    %184 = math.tanh %183 : vector<2x16x32xf32>
    %185 = vector.shape_cast %5 : vector<1x32xf32> to vector<1x1x32xf32>
    %186 = vector.broadcast %185 : vector<1x1x32xf32> to vector<2x16x32xf32>
    %187 = arith.mulf %184, %186 : vector<2x16x32xf32>
    %cst_101 = arith.constant dense<0.000000e+00> : vector<2x16xf32>
    %188 = vector.multi_reduction <add>, %187, %cst_101 [2] : vector<2x16x32xf32> to vector<2x16xf32>
    %189 = vector.broadcast %6 : vector<1x1xf32> to vector<2x16xf32>
    %190 = arith.addf %188, %189 : vector<2x16xf32>
    %cst_102 = arith.constant dense<0xFF800000> : vector<2xf32>
    %191 = vector.multi_reduction <maximumf>, %190, %cst_102 [1] : vector<2x16xf32> to vector<2xf32>
    %192 = vector.shape_cast %191 : vector<2xf32> to vector<2x1xf32>
    %193 = vector.broadcast %192 : vector<2x1xf32> to vector<2x16xf32>
    %194 = arith.subf %190, %193 : vector<2x16xf32>
    %195 = math.exp %194 : vector<2x16xf32>
    %cst_103 = arith.constant dense<0.000000e+00> : vector<2xf32>
    %196 = vector.multi_reduction <add>, %195, %cst_103 [1] : vector<2x16xf32> to vector<2xf32>
    %197 = vector.shape_cast %196 : vector<2xf32> to vector<2x1xf32>
    %198 = tpu.reciprocal %197 {approx = true} : vector<2x1xf32> -> vector<2x1xf32>
    %199 = vector.broadcast %198 : vector<2x1xf32> to vector<2x16xf32>
    %200 = arith.mulf %195, %199 : vector<2x16xf32>
    %201 = vector.shape_cast %200 : vector<2x16xf32> to vector<2x16x1xf32>
    %202 = vector.broadcast %201 : vector<2x16x1xf32> to vector<2x16x32xf32>
    %203 = arith.mulf %3, %202 : vector<2x16x32xf32>
    %cst_104 = arith.constant dense<0.000000e+00> : vector<2x32xf32>
    %204 = vector.multi_reduction <add>, %203, %cst_104 [1] : vector<2x16x32xf32> to vector<2x32xf32>
    %c2 = arith.constant 2 : index
    %c0_105 = arith.constant 0 : index
    %c0_106 = arith.constant 0 : index
    %205 = vector.load %arg1[%c2, %c0_105, %c0_106] : memref<4x2x32xbf16, #tpu.memory_space<vmem>>, vector<1x2x32xbf16>
    %206 = vector.shape_cast %205 : vector<1x2x32xbf16> to vector<2x32xbf16>
    %c0_107 = arith.constant 0 : index
    %c0_108 = arith.constant 0 : index
    %207 = vector.load %arg10[%c0_107, %c0_108] : memref<32x128xbf16, #tpu.memory_space<vmem>>, vector<32x128xbf16>
    %cst_109 = arith.constant dense<0.000000e+00> : vector<2x128xf32>
    %208 = tpu.matmul %206, %207, %cst_109 {dimension_numbers = #tpu.dot_dimension_numbers<[1], [0], [0], [1], [0, 0, 1, 1], [], []>} : vector<2x32xbf16>, vector<32x128xbf16>, vector<2x128xf32> -> vector<2x128xf32>
    %209 = arith.truncf %204 : vector<2x32xf32> to vector<2x32xbf16>
    %c0_110 = arith.constant 0 : index
    %c0_111 = arith.constant 0 : index
    %210 = vector.load %arg11[%c0_110, %c0_111] : memref<32x128xbf16, #tpu.memory_space<vmem>>, vector<32x128xbf16>
    %cst_112 = arith.constant dense<0.000000e+00> : vector<2x128xf32>
    %211 = tpu.matmul %209, %210, %cst_112 {dimension_numbers = #tpu.dot_dimension_numbers<[1], [0], [0], [1], [0, 0, 1, 1], [], []>} : vector<2x32xbf16>, vector<32x128xbf16>, vector<2x128xf32> -> vector<2x128xf32>
    %212 = arith.addf %208, %211 : vector<2x128xf32>
    %c0_113 = arith.constant 0 : index
    %c0_114 = arith.constant 0 : index
    %213 = vector.load %arg12[%c0_113, %c0_114] : memref<1x128xf32, #tpu.memory_space<vmem>>, vector<1x128xf32>
    %214 = vector.broadcast %213 : vector<1x128xf32> to vector<2x128xf32>
    %215 = arith.addf %212, %214 : vector<2x128xf32>
    %216 = arith.truncf %173 : vector<2x32xf32> to vector<2x32xbf16>
    %c0_115 = arith.constant 0 : index
    %c0_116 = arith.constant 0 : index
    %217 = vector.load %arg13[%c0_115, %c0_116] : memref<32x128xbf16, #tpu.memory_space<vmem>>, vector<32x128xbf16>
    %cst_117 = arith.constant dense<0.000000e+00> : vector<2x128xf32>
    %218 = tpu.matmul %216, %217, %cst_117 {dimension_numbers = #tpu.dot_dimension_numbers<[1], [0], [0], [1], [0, 0, 1, 1], [], []>} : vector<2x32xbf16>, vector<32x128xbf16>, vector<2x128xf32> -> vector<2x128xf32>
    %219 = arith.addf %215, %218 : vector<2x128xf32>
    %c0_118 = arith.constant 0 : index
    %c0_119 = arith.constant 0 : index
    %220 = vector.load %arg14[%c0_118, %c0_119] : memref<1x128xf32, #tpu.memory_space<vmem>>, vector<1x128xf32>
    %221 = vector.broadcast %220 : vector<1x128xf32> to vector<2x128xf32>
    %222 = arith.addf %219, %221 : vector<2x128xf32>
    %223 = vector.extract_strided_slice %222 {offsets = [0, 0], sizes = [2, 32], strides = [1, 1]} : vector<2x128xf32> to vector<2x32xf32>
    %224 = arith.negf %223 : vector<2x32xf32>
    %225 = math.exp %224 : vector<2x32xf32>
    %cst_120 = arith.constant 1.000000e+00 : f32
    %226 = vector.broadcast %cst_120 : f32 to vector<2x32xf32>
    %227 = arith.addf %226, %225 : vector<2x32xf32>
    %228 = arith.divf %226, %227 : vector<2x32xf32>
    %229 = vector.extract_strided_slice %222 {offsets = [0, 32], sizes = [2, 32], strides = [1, 1]} : vector<2x128xf32> to vector<2x32xf32>
    %230 = arith.negf %229 : vector<2x32xf32>
    %231 = math.exp %230 : vector<2x32xf32>
    %cst_121 = arith.constant 1.000000e+00 : f32
    %232 = vector.broadcast %cst_121 : f32 to vector<2x32xf32>
    %233 = arith.addf %232, %231 : vector<2x32xf32>
    %234 = arith.divf %232, %233 : vector<2x32xf32>
    %235 = vector.extract_strided_slice %222 {offsets = [0, 64], sizes = [2, 32], strides = [1, 1]} : vector<2x128xf32> to vector<2x32xf32>
    %236 = math.tanh %235 : vector<2x32xf32>
    %237 = vector.extract_strided_slice %222 {offsets = [0, 96], sizes = [2, 32], strides = [1, 1]} : vector<2x128xf32> to vector<2x32xf32>
    %238 = arith.negf %237 : vector<2x32xf32>
    %239 = math.exp %238 : vector<2x32xf32>
    %cst_122 = arith.constant 1.000000e+00 : f32
    %240 = vector.broadcast %cst_122 : f32 to vector<2x32xf32>
    %241 = arith.addf %240, %239 : vector<2x32xf32>
    %242 = arith.divf %240, %241 : vector<2x32xf32>
    %243 = arith.mulf %234, %174 : vector<2x32xf32>
    %244 = arith.mulf %228, %236 : vector<2x32xf32>
    %245 = arith.addf %243, %244 : vector<2x32xf32>
    %246 = math.tanh %245 : vector<2x32xf32>
    %247 = arith.mulf %242, %246 : vector<2x32xf32>
    %c0_123 = arith.constant 0 : index
    %c0_124 = arith.constant 0 : index
    %248 = vector.load %arg17[%c0_123, %c0_124] : memref<2x32xf32, #tpu.memory_space<vmem>>, vector<2x32xf32>
    tpu.vector_store %arg17[%c0_123, %c0_124], %247 {strides = array<i32>} : memref<2x32xf32, #tpu.memory_space<vmem>>, vector<2x32xf32>,
    %c0_125 = arith.constant 0 : index
    %c0_126 = arith.constant 0 : index
    %249 = vector.load %arg18[%c0_125, %c0_126] : memref<2x32xf32, #tpu.memory_space<vmem>>, vector<2x32xf32>
    tpu.vector_store %arg18[%c0_125, %c0_126], %245 {strides = array<i32>} : memref<2x32xf32, #tpu.memory_space<vmem>>, vector<2x32xf32>,
    %c2_127 = arith.constant 2 : index
    %c0_128 = arith.constant 0 : index
    %c0_129 = arith.constant 0 : index
    %250 = vector.load %arg15[%c2_127, %c0_128, %c0_129] : memref<4x2x32xf32, #tpu.memory_space<vmem>>, vector<1x2x32xf32>
    %251 = vector.shape_cast %250 : vector<1x2x32xf32> to vector<2x32xf32>
    %252 = vector.shape_cast %247 : vector<2x32xf32> to vector<1x2x32xf32>
    tpu.vector_store %arg15[%c2_127, %c0_128, %c0_129], %252 {strides = array<i32>} : memref<4x2x32xf32, #tpu.memory_space<vmem>>, vector<1x2x32xf32>,
    %c2_130 = arith.constant 2 : index
    %c0_131 = arith.constant 0 : index
    %c0_132 = arith.constant 0 : index
    %253 = vector.load %arg16[%c2_130, %c0_131, %c0_132] : memref<4x2x16xf32, #tpu.memory_space<vmem>>, vector<1x2x16xf32>
    %254 = vector.shape_cast %253 : vector<1x2x16xf32> to vector<2x16xf32>
    %255 = vector.shape_cast %200 : vector<2x16xf32> to vector<1x2x16xf32>
    tpu.vector_store %arg16[%c2_130, %c0_131, %c0_132], %255 {strides = array<i32>} : memref<4x2x16xf32, #tpu.memory_space<vmem>>, vector<1x2x16xf32>,
    %c0_133 = arith.constant 0 : index
    %c0_134 = arith.constant 0 : index
    %256 = vector.load %arg17[%c0_133, %c0_134] : memref<2x32xf32, #tpu.memory_space<vmem>>, vector<2x32xf32>
    %c0_135 = arith.constant 0 : index
    %c0_136 = arith.constant 0 : index
    %257 = vector.load %arg18[%c0_135, %c0_136] : memref<2x32xf32, #tpu.memory_space<vmem>>, vector<2x32xf32>
    %258 = arith.truncf %256 : vector<2x32xf32> to vector<2x32xbf16>
    %c0_137 = arith.constant 0 : index
    %c0_138 = arith.constant 0 : index
    %259 = vector.load %arg6[%c0_137, %c0_138] : memref<32x32xbf16, #tpu.memory_space<vmem>>, vector<32x32xbf16>
    %cst_139 = arith.constant dense<0.000000e+00> : vector<2x32xf32>
    %260 = tpu.matmul %258, %259, %cst_139 {dimension_numbers = #tpu.dot_dimension_numbers<[1], [0], [0], [1], [0, 0, 1, 1], [], []>} : vector<2x32xbf16>, vector<32x32xbf16>, vector<2x32xf32> -> vector<2x32xf32>
    %c0_140 = arith.constant 0 : index
    %c0_141 = arith.constant 0 : index
    %261 = vector.load %arg7[%c0_140, %c0_141] : memref<1x32xf32, #tpu.memory_space<vmem>>, vector<1x32xf32>
    %262 = vector.broadcast %261 : vector<1x32xf32> to vector<2x32xf32>
    %263 = arith.addf %260, %262 : vector<2x32xf32>
    %264 = vector.shape_cast %263 : vector<2x32xf32> to vector<2x1x32xf32>
    %265 = vector.broadcast %264 : vector<2x1x32xf32> to vector<2x16x32xf32>
    %266 = arith.addf %4, %265 : vector<2x16x32xf32>
    %267 = math.tanh %266 : vector<2x16x32xf32>
    %268 = vector.shape_cast %5 : vector<1x32xf32> to vector<1x1x32xf32>
    %269 = vector.broadcast %268 : vector<1x1x32xf32> to vector<2x16x32xf32>
    %270 = arith.mulf %267, %269 : vector<2x16x32xf32>
    %cst_142 = arith.constant dense<0.000000e+00> : vector<2x16xf32>
    %271 = vector.multi_reduction <add>, %270, %cst_142 [2] : vector<2x16x32xf32> to vector<2x16xf32>
    %272 = vector.broadcast %6 : vector<1x1xf32> to vector<2x16xf32>
    %273 = arith.addf %271, %272 : vector<2x16xf32>
    %cst_143 = arith.constant dense<0xFF800000> : vector<2xf32>
    %274 = vector.multi_reduction <maximumf>, %273, %cst_143 [1] : vector<2x16xf32> to vector<2xf32>
    %275 = vector.shape_cast %274 : vector<2xf32> to vector<2x1xf32>
    %276 = vector.broadcast %275 : vector<2x1xf32> to vector<2x16xf32>
    %277 = arith.subf %273, %276 : vector<2x16xf32>
    %278 = math.exp %277 : vector<2x16xf32>
    %cst_144 = arith.constant dense<0.000000e+00> : vector<2xf32>
    %279 = vector.multi_reduction <add>, %278, %cst_144 [1] : vector<2x16xf32> to vector<2xf32>
    %280 = vector.shape_cast %279 : vector<2xf32> to vector<2x1xf32>
    %281 = tpu.reciprocal %280 {approx = true} : vector<2x1xf32> -> vector<2x1xf32>
    %282 = vector.broadcast %281 : vector<2x1xf32> to vector<2x16xf32>
    %283 = arith.mulf %278, %282 : vector<2x16xf32>
    %284 = vector.shape_cast %283 : vector<2x16xf32> to vector<2x16x1xf32>
    %285 = vector.broadcast %284 : vector<2x16x1xf32> to vector<2x16x32xf32>
    %286 = arith.mulf %3, %285 : vector<2x16x32xf32>
    %cst_145 = arith.constant dense<0.000000e+00> : vector<2x32xf32>
    %287 = vector.multi_reduction <add>, %286, %cst_145 [1] : vector<2x16x32xf32> to vector<2x32xf32>
    %c3 = arith.constant 3 : index
    %c0_146 = arith.constant 0 : index
    %c0_147 = arith.constant 0 : index
    %288 = vector.load %arg1[%c3, %c0_146, %c0_147] : memref<4x2x32xbf16, #tpu.memory_space<vmem>>, vector<1x2x32xbf16>
    %289 = vector.shape_cast %288 : vector<1x2x32xbf16> to vector<2x32xbf16>
    %c0_148 = arith.constant 0 : index
    %c0_149 = arith.constant 0 : index
    %290 = vector.load %arg10[%c0_148, %c0_149] : memref<32x128xbf16, #tpu.memory_space<vmem>>, vector<32x128xbf16>
    %cst_150 = arith.constant dense<0.000000e+00> : vector<2x128xf32>
    %291 = tpu.matmul %289, %290, %cst_150 {dimension_numbers = #tpu.dot_dimension_numbers<[1], [0], [0], [1], [0, 0, 1, 1], [], []>} : vector<2x32xbf16>, vector<32x128xbf16>, vector<2x128xf32> -> vector<2x128xf32>
    %292 = arith.truncf %287 : vector<2x32xf32> to vector<2x32xbf16>
    %c0_151 = arith.constant 0 : index
    %c0_152 = arith.constant 0 : index
    %293 = vector.load %arg11[%c0_151, %c0_152] : memref<32x128xbf16, #tpu.memory_space<vmem>>, vector<32x128xbf16>
    %cst_153 = arith.constant dense<0.000000e+00> : vector<2x128xf32>
    %294 = tpu.matmul %292, %293, %cst_153 {dimension_numbers = #tpu.dot_dimension_numbers<[1], [0], [0], [1], [0, 0, 1, 1], [], []>} : vector<2x32xbf16>, vector<32x128xbf16>, vector<2x128xf32> -> vector<2x128xf32>
    %295 = arith.addf %291, %294 : vector<2x128xf32>
    %c0_154 = arith.constant 0 : index
    %c0_155 = arith.constant 0 : index
    %296 = vector.load %arg12[%c0_154, %c0_155] : memref<1x128xf32, #tpu.memory_space<vmem>>, vector<1x128xf32>
    %297 = vector.broadcast %296 : vector<1x128xf32> to vector<2x128xf32>
    %298 = arith.addf %295, %297 : vector<2x128xf32>
    %299 = arith.truncf %256 : vector<2x32xf32> to vector<2x32xbf16>
    %c0_156 = arith.constant 0 : index
    %c0_157 = arith.constant 0 : index
    %300 = vector.load %arg13[%c0_156, %c0_157] : memref<32x128xbf16, #tpu.memory_space<vmem>>, vector<32x128xbf16>
    %cst_158 = arith.constant dense<0.000000e+00> : vector<2x128xf32>
    %301 = tpu.matmul %299, %300, %cst_158 {dimension_numbers = #tpu.dot_dimension_numbers<[1], [0], [0], [1], [0, 0, 1, 1], [], []>} : vector<2x32xbf16>, vector<32x128xbf16>, vector<2x128xf32> -> vector<2x128xf32>
    %302 = arith.addf %298, %301 : vector<2x128xf32>
    %c0_159 = arith.constant 0 : index
    %c0_160 = arith.constant 0 : index
    %303 = vector.load %arg14[%c0_159, %c0_160] : memref<1x128xf32, #tpu.memory_space<vmem>>, vector<1x128xf32>
    %304 = vector.broadcast %303 : vector<1x128xf32> to vector<2x128xf32>
    %305 = arith.addf %302, %304 : vector<2x128xf32>
    %306 = vector.extract_strided_slice %305 {offsets = [0, 0], sizes = [2, 32], strides = [1, 1]} : vector<2x128xf32> to vector<2x32xf32>
    %307 = arith.negf %306 : vector<2x32xf32>
    %308 = math.exp %307 : vector<2x32xf32>
    %cst_161 = arith.constant 1.000000e+00 : f32
    %309 = vector.broadcast %cst_161 : f32 to vector<2x32xf32>
    %310 = arith.addf %309, %308 : vector<2x32xf32>
    %311 = arith.divf %309, %310 : vector<2x32xf32>
    %312 = vector.extract_strided_slice %305 {offsets = [0, 32], sizes = [2, 32], strides = [1, 1]} : vector<2x128xf32> to vector<2x32xf32>
    %313 = arith.negf %312 : vector<2x32xf32>
    %314 = math.exp %313 : vector<2x32xf32>
    %cst_162 = arith.constant 1.000000e+00 : f32
    %315 = vector.broadcast %cst_162 : f32 to vector<2x32xf32>
    %316 = arith.addf %315, %314 : vector<2x32xf32>
    %317 = arith.divf %315, %316 : vector<2x32xf32>
    %318 = vector.extract_strided_slice %305 {offsets = [0, 64], sizes = [2, 32], strides = [1, 1]} : vector<2x128xf32> to vector<2x32xf32>
    %319 = math.tanh %318 : vector<2x32xf32>
    %320 = vector.extract_strided_slice %305 {offsets = [0, 96], sizes = [2, 32], strides = [1, 1]} : vector<2x128xf32> to vector<2x32xf32>
    %321 = arith.negf %320 : vector<2x32xf32>
    %322 = math.exp %321 : vector<2x32xf32>
    %cst_163 = arith.constant 1.000000e+00 : f32
    %323 = vector.broadcast %cst_163 : f32 to vector<2x32xf32>
    %324 = arith.addf %323, %322 : vector<2x32xf32>
    %325 = arith.divf %323, %324 : vector<2x32xf32>
    %326 = arith.mulf %317, %257 : vector<2x32xf32>
    %327 = arith.mulf %311, %319 : vector<2x32xf32>
    %328 = arith.addf %326, %327 : vector<2x32xf32>
    %329 = math.tanh %328 : vector<2x32xf32>
    %330 = arith.mulf %325, %329 : vector<2x32xf32>
    %c0_164 = arith.constant 0 : index
    %c0_165 = arith.constant 0 : index
    %331 = vector.load %arg17[%c0_164, %c0_165] : memref<2x32xf32, #tpu.memory_space<vmem>>, vector<2x32xf32>
    tpu.vector_store %arg17[%c0_164, %c0_165], %330 {strides = array<i32>} : memref<2x32xf32, #tpu.memory_space<vmem>>, vector<2x32xf32>,
    %c0_166 = arith.constant 0 : index
    %c0_167 = arith.constant 0 : index
    %332 = vector.load %arg18[%c0_166, %c0_167] : memref<2x32xf32, #tpu.memory_space<vmem>>, vector<2x32xf32>
    tpu.vector_store %arg18[%c0_166, %c0_167], %328 {strides = array<i32>} : memref<2x32xf32, #tpu.memory_space<vmem>>, vector<2x32xf32>,
    %c3_168 = arith.constant 3 : index
    %c0_169 = arith.constant 0 : index
    %c0_170 = arith.constant 0 : index
    %333 = vector.load %arg15[%c3_168, %c0_169, %c0_170] : memref<4x2x32xf32, #tpu.memory_space<vmem>>, vector<1x2x32xf32>
    %334 = vector.shape_cast %333 : vector<1x2x32xf32> to vector<2x32xf32>
    %335 = vector.shape_cast %330 : vector<2x32xf32> to vector<1x2x32xf32>
    tpu.vector_store %arg15[%c3_168, %c0_169, %c0_170], %335 {strides = array<i32>} : memref<4x2x32xf32, #tpu.memory_space<vmem>>, vector<1x2x32xf32>,
    %c3_171 = arith.constant 3 : index
    %c0_172 = arith.constant 0 : index
    %c0_173 = arith.constant 0 : index
    %336 = vector.load %arg16[%c3_171, %c0_172, %c0_173] : memref<4x2x16xf32, #tpu.memory_space<vmem>>, vector<1x2x16xf32>
    %337 = vector.shape_cast %336 : vector<1x2x16xf32> to vector<2x16xf32>
    %338 = vector.shape_cast %283 : vector<2x16xf32> to vector<1x2x16xf32>
    tpu.vector_store %arg16[%c3_171, %c0_172, %c0_173], %338 {strides = array<i32>} : memref<4x2x16xf32, #tpu.memory_space<vmem>>, vector<1x2x16xf32>,
    return
  }
  func.func @transform_0(%arg0: i32) -> (i32, i32, i32) {
    %c0_i32 = arith.constant 0 : i32
    %c0_i32_0 = arith.constant 0 : i32
    %c0_i32_1 = arith.constant 0 : i32
    return %arg0, %c0_i32, %c0_i32_0 : i32, i32, i32
  }
  func.func @transform_1(%arg0: i32) -> (i32, i32, i32) {
    %c0_i32 = arith.constant 0 : i32
    %c0_i32_0 = arith.constant 0 : i32
    %c0_i32_1 = arith.constant 0 : i32
    %c0_i32_2 = arith.constant 0 : i32
    return %c0_i32, %c0_i32_0, %c0_i32_1 : i32, i32, i32
  }
  func.func @transform_2(%arg0: i32) -> (i32, i32, i32) {
    %c0_i32 = arith.constant 0 : i32
    %c0_i32_0 = arith.constant 0 : i32
    %c0_i32_1 = arith.constant 0 : i32
    %c0_i32_2 = arith.constant 0 : i32
    return %c0_i32, %c0_i32_0, %c0_i32_1 : i32, i32, i32
  }
  func.func @transform_3(%arg0: i32) -> (i32, i32) {
    %c0_i32 = arith.constant 0 : i32
    %c0_i32_0 = arith.constant 0 : i32
    %c0_i32_1 = arith.constant 0 : i32
    return %c0_i32, %c0_i32_0 : i32, i32
  }
  func.func @transform_4(%arg0: i32) -> (i32, i32) {
    %c0_i32 = arith.constant 0 : i32
    %c0_i32_0 = arith.constant 0 : i32
    %c0_i32_1 = arith.constant 0 : i32
    return %c0_i32, %c0_i32_0 : i32, i32
  }
  func.func @transform_5(%arg0: i32) -> (i32, i32) {
    %c0_i32 = arith.constant 0 : i32
    %c0_i32_0 = arith.constant 0 : i32
    %c0_i32_1 = arith.constant 0 : i32
    return %c0_i32, %c0_i32_0 : i32, i32
  }
  func.func @transform_6(%arg0: i32) -> (i32, i32) {
    %c0_i32 = arith.constant 0 : i32
    %c0_i32_0 = arith.constant 0 : i32
    %c0_i32_1 = arith.constant 0 : i32
    return %c0_i32, %c0_i32_0 : i32, i32
  }
  func.func @transform_7(%arg0: i32) -> (i32, i32) {
    %c0_i32 = arith.constant 0 : i32
    %c0_i32_0 = arith.constant 0 : i32
    %c0_i32_1 = arith.constant 0 : i32
    return %c0_i32, %c0_i32_0 : i32, i32
  }
  func.func @transform_8(%arg0: i32) -> (i32, i32) {
    %c0_i32 = arith.constant 0 : i32
    %c0_i32_0 = arith.constant 0 : i32
    %c0_i32_1 = arith.constant 0 : i32
    return %c0_i32, %c0_i32_0 : i32, i32
  }
  func.func @transform_9(%arg0: i32) -> (i32, i32) {
    %c0_i32 = arith.constant 0 : i32
    %c0_i32_0 = arith.constant 0 : i32
    %c0_i32_1 = arith.constant 0 : i32
    return %c0_i32, %c0_i32_0 : i32, i32
  }
  func.func @transform_10(%arg0: i32) -> (i32, i32) {
    %c0_i32 = arith.constant 0 : i32
    %c0_i32_0 = arith.constant 0 : i32
    %c0_i32_1 = arith.constant 0 : i32
    return %c0_i32, %c0_i32_0 : i32, i32
  }
  func.func @transform_11(%arg0: i32) -> (i32, i32) {
    %c0_i32 = arith.constant 0 : i32
    %c0_i32_0 = arith.constant 0 : i32
    %c0_i32_1 = arith.constant 0 : i32
    return %c0_i32, %c0_i32_0 : i32, i32
  }
  func.func @transform_12(%arg0: i32) -> (i32, i32) {
    %c0_i32 = arith.constant 0 : i32
    %c0_i32_0 = arith.constant 0 : i32
    %c0_i32_1 = arith.constant 0 : i32
    return %c0_i32, %c0_i32_0 : i32, i32
  }
  func.func @transform_13(%arg0: i32) -> (i32, i32) {
    %c0_i32 = arith.constant 0 : i32
    %c0_i32_0 = arith.constant 0 : i32
    %c0_i32_1 = arith.constant 0 : i32
    return %c0_i32, %c0_i32_0 : i32, i32
  }
  func.func @transform_14(%arg0: i32) -> (i32, i32, i32) {
    %c0_i32 = arith.constant 0 : i32
    %c0_i32_0 = arith.constant 0 : i32
    %c0_i32_1 = arith.constant 0 : i32
    return %arg0, %c0_i32, %c0_i32_0 : i32, i32, i32
  }
  func.func @transform_15(%arg0: i32) -> (i32, i32, i32) {
    %c0_i32 = arith.constant 0 : i32
    %c0_i32_0 = arith.constant 0 : i32
    %c0_i32_1 = arith.constant 0 : i32
    return %arg0, %c0_i32, %c0_i32_0 : i32, i32, i32
  }
}

</mosaic_0001>

<llo_original>
// kernel: encoder_decoder_forward.8
$region0: #{encoder_decoder_forward.8}
  #allocation0 [shape = 'u32[]', space=smem, size = 0x4, offset = 0x4, fixed_abs, tag = 'smem constant byte address 0x4 - core index']
  #allocation1 [shape = 'u32[144,128]{1,0:T(1,128)}', space=vmem, size = 0x12000, scoped, tag = 'internal scratch']
  %s0 = inlined_call_operand.vmem [shape: f32[2,32], index: 0, kind: input, shape index: {}]
  %s1 = inlined_call_operand.vmem [shape: bf16[32,32], index: 1, kind: input, shape index: {}]
  %s2 = inlined_call_operand.vmem [shape: f32[1,32], index: 2, kind: input, shape index: {}]
  %s3 = inlined_call_operand.vmem [shape: f32[2,32], index: 3, kind: output, shape index: {}]
  %s4 = sld [smem:[#allocation0]]
  $region22: #{encoder_decoder_forward.8} parent=0
    _
  %s6 = ssub.s32 1, %s4
  %s7 = scalar_select 0, %s6, %s4
  // Predicated region
  $region2: #{encoder_decoder_forward.8} parent=0 // pred_check
    _
  $region3: #{encoder_decoder_forward.8} parent=0 // pred_check_branch
    %9 = sbr.rel (0) target = $region5
  $region4: #{encoder_decoder_forward.8} parent=0 // pred_region
    _
  $region5: #{encoder_decoder_forward.8} parent=0 // pred_fallthru
    _
  // Predicated region
  $region6: #{encoder_decoder_forward.8} parent=0 // pred_check
    _
  $region7: #{encoder_decoder_forward.8} parent=0 // pred_check_branch
    %11 = sbr.rel (0) target = $region9
  $region8: #{encoder_decoder_forward.8} parent=0 // pred_region
    _
  $region9: #{encoder_decoder_forward.8} parent=0 // pred_fallthru
    _
  // Predicated region
  $region10: #{encoder_decoder_forward.8} parent=0 // pred_check
    _
  $region11: #{encoder_decoder_forward.8} parent=0 // pred_check_branch
    %13 = sbr.rel (0) target = $region13
  $region12: #{encoder_decoder_forward.8} parent=0 // pred_region
    _
  $region13: #{encoder_decoder_forward.8} parent=0 // pred_fallthru
    _
  %v15 = vld [vmem:[%s0] sm:$0x3]
  %v16 = vpack.c.bf16 %v15, %v15
  %v17 = vld [vmem:[%s1] sm:$0xf]
  %v18 = vld [vmem:[%s1 + $0x4] sm:$0xf]
  %v19 = vld [vmem:[%s1 + $0x8] sm:$0xf]
  %v20 = vld [vmem:[%s1 + $0xc] sm:$0xf]
  %v21 = vld [vmem:[%s2] sm:$0x1]
  %v23 = vlaneseq
  %v24 = vshrl.u32 %v23, 7
  %v25 = vsub.s32 0, %v24
  %v26 = vrot.slane %v21, %v25
  %v32 = vunpack.c.l.b16 %v17
  %v33 = vunpack.c.l.b16 %v18
  %v34 = vunpack.c.l.b16 %v19
  %v35 = vunpack.c.l.b16 %v20
  %v36 = vpack.c.b16 %v33, %v32
  %v37 = vpack.c.b16 %v35, %v34
  %vm40 = vcmask 261120
  %v42 = vsel %vm40, %v16, 0
  %44 = vmatprep.subr.bf16.mxu0 0
  %45 = vmatpush1.bf16.msra.mxu0 0
  %46 = vmatprep.subr.bf16.mxu0 0
  %47 = vmatpush1.bf16.msra.mxu0 0
  %48 = vmatprep.subr.bf16.mxu0 0
  %49 = vmatpush1.bf16.msra.mxu0 0
  %50 = vmatprep.subr.bf16.mxu0 0
  %51 = vmatpush1.bf16.msra.mxu0 0
  %52 = vmatprep.subr.bf16.mxu0 0
  %53 = vmatpush1.bf16.msra.mxu0 0
  %54 = vmatprep.subr.bf16.mxu0 0
  %55 = vmatpush1.bf16.msra.mxu0 0
  %56 = vmatprep.subr.bf16.mxu0 0
  %57 = vmatpush1.bf16.msra.mxu0 %v37
  %58 = vmatprep.subr.bf16.mxu0 0
  %59 = vmatpush1.bf16.msra.mxu0 %v36
  %60 = vmatprep.subr.bf16.mxu0 0
  %61 = vmatpush2.bf16.msra.mxu0 0
  %62 = vmatprep.subr.bf16.mxu0 0
  %63 = vmatpush2.bf16.msra.mxu0 0
  %64 = vmatprep.subr.bf16.mxu0 0
  %65 = vmatpush2.bf16.msra.mxu0 0
  %66 = vmatprep.subr.bf16.mxu0 0
  %67 = vmatpush2.bf16.msra.mxu0 0
  %68 = vmatprep.subr.bf16.mxu0 0
  %69 = vmatpush2.bf16.msra.mxu0 0
  %70 = vmatprep.subr.bf16.mxu0 0
  %71 = vmatpush2.bf16.msra.mxu0 0
  %72 = vmatprep.subr.bf16.mxu0 0
  %73 = vmatpush2.bf16.msra.mxu0 0
  %74 = vmatprep.subr.bf16.mxu0 0
  %75 = vmatpush2.bf16.msra.mxu0 0
  %76 = vmatprep.mubr.bf16.mxu0 0
  %77 = vmatmul.mubr.bf16.gmra.mxu0 %v42
  %v78 = vpop.f32.mrf.mxu0
  %v79 = vadd.f32 %v26, %v78
  %v80 = vpop.f32.mrf.mxu0
  %v81 = vpop.f32.mrf.mxu0
  %v82 = vpop.f32.mrf.mxu0
  %83 = vdwg.mxu0
  %vm84 = vcmask 254976
  %85 = vst.msk [vmem:[%s3] sm:$0x3] %vm84, %v79
  // Predicated region
  $region14: #{encoder_decoder_forward.8} parent=0 // pred_check
    _
  $region15: #{encoder_decoder_forward.8} parent=0 // pred_check_branch
    %87 = sbr.rel (0) target = $region17
  $region16: #{encoder_decoder_forward.8} parent=0 // pred_region
    _
  $region17: #{encoder_decoder_forward.8} parent=0 // pred_fallthru
    _
  // Predicated region
  $region18: #{encoder_decoder_forward.8} parent=0 // pred_check
    _
  $region19: #{encoder_decoder_forward.8} parent=0 // pred_check_branch
    %89 = sbr.rel (0) target = $region21
  $region20: #{encoder_decoder_forward.8} parent=0 // pred_region
    _
  $region21: #{encoder_decoder_forward.8} parent=0 // pred_fallthru
    _

// kernel: encoder_decoder_forward.6
$region0: #{encoder_decoder_forward.6}
  #allocation0 [shape = 'u32[]', space=smem, size = 0x4, offset = 0x4, fixed_abs, tag = 'smem constant byte address 0x4 - core index']
  #allocation1 [shape = 'u32[144,128]{1,0:T(1,128)}', space=vmem, size = 0x12000, scoped, tag = 'internal scratch']
  %s0 = inlined_call_operand.vmem [shape: f32[32,48], index: 0, kind: input, shape index: {}]
  %s1 = inlined_call_operand.vmem [shape: bf16[48,32], index: 1, kind: input, shape index: {}]
  %s2 = inlined_call_operand.vmem [shape: f32[1,32], index: 2, kind: input, shape index: {}]
  %s3 = inlined_call_operand.vmem [shape: f32[32,32], index: 3, kind: output, shape index: {}]
  %s4 = sld [smem:[#allocation0]]
  $region22: #{encoder_decoder_forward.6} parent=0
    _
  %s6 = ssub.s32 1, %s4
  %s7 = scalar_select 0, %s6, %s4
  // Predicated region
  $region2: #{encoder_decoder_forward.6} parent=0 // pred_check
    _
  $region3: #{encoder_decoder_forward.6} parent=0 // pred_check_branch
    %9 = sbr.rel (0) target = $region5
  $region4: #{encoder_decoder_forward.6} parent=0 // pred_region
    _
  $region5: #{encoder_decoder_forward.6} parent=0 // pred_fallthru
    _
  // Predicated region
  $region6: #{encoder_decoder_forward.6} parent=0 // pred_check
    _
  $region7: #{encoder_decoder_forward.6} parent=0 // pred_check_branch
    %11 = sbr.rel (0) target = $region9
  $region8: #{encoder_decoder_forward.6} parent=0 // pred_region
    _
  $region9: #{encoder_decoder_forward.6} parent=0 // pred_fallthru
    _
  // Predicated region
  $region10: #{encoder_decoder_forward.6} parent=0 // pred_check
    _
  $region11: #{encoder_decoder_forward.6} parent=0 // pred_check_branch
    %13 = sbr.rel (0) target = $region13
  $region12: #{encoder_decoder_forward.6} parent=0 // pred_region
    _
  $region13: #{encoder_decoder_forward.6} parent=0 // pred_fallthru
    _
  %v15 = vld [vmem:[%s0] sm:$0xff]
  %v16 = vld [vmem:[%s0 + $0x8] sm:$0xff]
  %v17 = vld [vmem:[%s0 + $0x10] sm:$0xff]
  %v18 = vld [vmem:[%s0 + $0x18] sm:$0xff]
  %v19 = vpack.c.bf16 %v16, %v15
  %v20 = vpack.c.bf16 %v18, %v17
  %v21 = vld [vmem:[%s1] sm:$0xf]
  %v22 = vld [vmem:[%s1 + $0x4] sm:$0xf]
  %v23 = vld [vmem:[%s1 + $0x8] sm:$0xf]
  %v24 = vld [vmem:[%s1 + $0xc] sm:$0xf]
  %v25 = vld [vmem:[%s1 + $0x10] sm:$0xf]
  %v26 = vld [vmem:[%s1 + $0x14] sm:$0xf]
  %v27 = vld [vmem:[%s2] sm:$0x1]
  %v29 = vlaneseq
  %v30 = vshrl.u32 %v29, 7
  %v31 = vsub.s32 0, %v30
  %v32 = vrot.slane %v27, %v31
  %v40 = vunpack.c.l.b16 %v21
  %v41 = vunpack.c.l.b16 %v22
  %v42 = vunpack.c.l.b16 %v23
  %v43 = vunpack.c.l.b16 %v24
  %v44 = vunpack.c.l.b16 %v25
  %v45 = vunpack.c.l.b16 %v26
  %v46 = vpack.c.b16 %v41, %v40
  %v47 = vpack.c.b16 %v43, %v42
  %v48 = vpack.c.b16 %v45, %v44
  %vm52 = vcmask 392192
  %v54 = vsel %vm52, %v19, 0
  %v57 = vsel %vm52, %v20, 0
  %59 = vmatprep.subr.bf16.mxu0 0
  %60 = vmatpush1.bf16.msra.mxu0 0
  %61 = vmatprep.subr.bf16.mxu0 0
  %62 = vmatpush1.bf16.msra.mxu0 0
  %63 = vmatprep.subr.bf16.mxu0 0
  %64 = vmatpush1.bf16.msra.mxu0 0
  %65 = vmatprep.subr.bf16.mxu0 0
  %66 = vmatpush1.bf16.msra.mxu0 0
  %67 = vmatprep.subr.bf16.mxu0 0
  %68 = vmatpush1.bf16.msra.mxu0 0
  %69 = vmatprep.subr.bf16.mxu0 0
  %70 = vmatpush1.bf16.msra.mxu0 %v48
  %71 = vmatprep.subr.bf16.mxu0 0
  %72 = vmatpush1.bf16.msra.mxu0 %v47
  %73 = vmatprep.subr.bf16.mxu0 0
  %74 = vmatpush1.bf16.msra.mxu0 %v46
  %75 = vmatprep.subr.bf16.mxu0 0
  %76 = vmatpush2.bf16.msra.mxu0 0
  %77 = vmatprep.subr.bf16.mxu0 0
  %78 = vmatpush2.bf16.msra.mxu0 0
  %79 = vmatprep.subr.bf16.mxu0 0
  %80 = vmatpush2.bf16.msra.mxu0 0
  %81 = vmatprep.subr.bf16.mxu0 0
  %82 = vmatpush2.bf16.msra.mxu0 0
  %83 = vmatprep.subr.bf16.mxu0 0
  %84 = vmatpush2.bf16.msra.mxu0 0
  %85 = vmatprep.subr.bf16.mxu0 0
  %86 = vmatpush2.bf16.msra.mxu0 0
  %87 = vmatprep.subr.bf16.mxu0 0
  %88 = vmatpush2.bf16.msra.mxu0 0
  %89 = vmatprep.subr.bf16.mxu0 0
  %90 = vmatpush2.bf16.msra.mxu0 0
  %91 = vmatprep.mubr.bf16.mxu0 0
  %92 = vmatmul.mubr.bf16.gmra.mxu0 %v54
  %v93 = vpop.f32.mrf.mxu0
  %v94 = vadd.f32 %v32, %v93
  %v95 = vpop.f32.mrf.mxu0
  %v96 = vpop.f32.mrf.mxu0
  %v97 = vadd.f32 %v32, %v96
  %v98 = vpop.f32.mrf.mxu0
  %99 = vmatprep.mubr.bf16.mxu0 0
  %100 = vmatmul.mubr.bf16.gmra.mxu0 %v57
  %v101 = vpop.f32.mrf.mxu0
  %v102 = vadd.f32 %v32, %v101
  %v103 = vpop.f32.mrf.mxu0
  %v104 = vpop.f32.mrf.mxu0
  %v105 = vadd.f32 %v32, %v104
  %v106 = vpop.f32.mrf.mxu0
  %107 = vdwg.mxu0
  %vm108 = vcmask 261120
  %109 = vst.msk [vmem:[%s3] sm:$0xff] %vm108, %v94
  %110 = vst.msk [vmem:[%s3 + $0x8] sm:$0xff] %vm108, %v97
  %111 = vst.msk [vmem:[%s3 + $0x10] sm:$0xff] %vm108, %v102
  %112 = vst.msk [vmem:[%s3 + $0x18] sm:$0xff] %vm108, %v105
  // Predicated region
  $region14: #{encoder_decoder_forward.6} parent=0 // pred_check
    _
  $region15: #{encoder_decoder_forward.6} parent=0 // pred_check_branch
    %114 = sbr.rel (0) target = $region17
  $region16: #{encoder_decoder_forward.6} parent=0 // pred_region
    _
  $region17: #{encoder_decoder_forward.6} parent=0 // pred_fallthru
    _
  // Predicated region
  $region18: #{encoder_decoder_forward.6} parent=0 // pred_check
    _
  $region19: #{encoder_decoder_forward.6} parent=0 // pred_check_branch
    %116 = sbr.rel (0) target = $region21
  $region20: #{encoder_decoder_forward.6} parent=0 // pred_region
    _
  $region21: #{encoder_decoder_forward.6} parent=0 // pred_fallthru
    _

// kernel: encoder_decoder_forward.7
$region0: #{encoder_decoder_forward.7}
  #allocation0 [shape = 'u32[]', space=smem, size = 0x4, offset = 0x4, fixed_abs, tag = 'smem constant byte address 0x4 - core index']
  #allocation1 [shape = 'u32[144,128]{1,0:T(1,128)}', space=vmem, size = 0x12000, scoped, tag = 'internal scratch']
  %s0 = inlined_call_operand.vmem [shape: f32[32,32], index: 0, kind: input, shape index: {}]
  %s1 = inlined_call_operand.vmem [shape: bf16[32,32], index: 1, kind: input, shape index: {}]
  %s2 = inlined_call_operand.vmem [shape: f32[1,32], index: 2, kind: input, shape index: {}]
  %s3 = inlined_call_operand.vmem [shape: f32[32,32], index: 3, kind: output, shape index: {}]
  %s4 = sld [smem:[#allocation0]]
  $region22: #{encoder_decoder_forward.7} parent=0
    _
  %s6 = ssub.s32 1, %s4
  %s7 = scalar_select 0, %s6, %s4
  // Predicated region
  $region2: #{encoder_decoder_forward.7} parent=0 // pred_check
    _
  $region3: #{encoder_decoder_forward.7} parent=0 // pred_check_branch
    %9 = sbr.rel (0) target = $region5
  $region4: #{encoder_decoder_forward.7} parent=0 // pred_region
    _
  $region5: #{encoder_decoder_forward.7} parent=0 // pred_fallthru
    _
  // Predicated region
  $region6: #{encoder_decoder_forward.7} parent=0 // pred_check
    _
  $region7: #{encoder_decoder_forward.7} parent=0 // pred_check_branch
    %11 = sbr.rel (0) target = $region9
  $region8: #{encoder_decoder_forward.7} parent=0 // pred_region
    _
  $region9: #{encoder_decoder_forward.7} parent=0 // pred_fallthru
    _
  // Predicated region
  $region10: #{encoder_decoder_forward.7} parent=0 // pred_check
    _
  $region11: #{encoder_decoder_forward.7} parent=0 // pred_check_branch
    %13 = sbr.rel (0) target = $region13
  $region12: #{encoder_decoder_forward.7} parent=0 // pred_region
    _
  $region13: #{encoder_decoder_forward.7} parent=0 // pred_fallthru
    _
  %v15 = vld [vmem:[%s0] sm:$0xff]
  %v16 = vld [vmem:[%s0 + $0x8] sm:$0xff]
  %v17 = vld [vmem:[%s0 + $0x10] sm:$0xff]
  %v18 = vld [vmem:[%s0 + $0x18] sm:$0xff]
  %v19 = vpack.c.bf16 %v16, %v15
  %v20 = vpack.c.bf16 %v18, %v17
  %v21 = vld [vmem:[%s1] sm:$0xf]
  %v22 = vld [vmem:[%s1 + $0x4] sm:$0xf]
  %v23 = vld [vmem:[%s1 + $0x8] sm:$0xf]
  %v24 = vld [vmem:[%s1 + $0xc] sm:$0xf]
  %v25 = vld [vmem:[%s2] sm:$0x1]
  %v27 = vlaneseq
  %v28 = vshrl.u32 %v27, 7
  %v29 = vsub.s32 0, %v28
  %v30 = vrot.slane %v25, %v29
  %v36 = vunpack.c.l.b16 %v21
  %v37 = vunpack.c.l.b16 %v22
  %v38 = vunpack.c.l.b16 %v23
  %v39 = vunpack.c.l.b16 %v24
  %v40 = vpack.c.b16 %v37, %v36
  %v41 = vpack.c.b16 %v39, %v38
  %vm44 = vcmask 261120
  %v46 = vsel %vm44, %v19, 0
  %v49 = vsel %vm44, %v20, 0
  %51 = vmatprep.subr.bf16.mxu0 0
  %52 = vmatpush1.bf16.msra.mxu0 0
  %53 = vmatprep.subr.bf16.mxu0 0
  %54 = vmatpush1.bf16.msra.mxu0 0
  %55 = vmatprep.subr.bf16.mxu0 0
  %56 = vmatpush1.bf16.msra.mxu0 0
  %57 = vmatprep.subr.bf16.mxu0 0
  %58 = vmatpush1.bf16.msra.mxu0 0
  %59 = vmatprep.subr.bf16.mxu0 0
  %60 = vmatpush1.bf16.msra.mxu0 0
  %61 = vmatprep.subr.bf16.mxu0 0
  %62 = vmatpush1.bf16.msra.mxu0 0
  %63 = vmatprep.subr.bf16.mxu0 0
  %64 = vmatpush1.bf16.msra.mxu0 %v41
  %65 = vmatprep.subr.bf16.mxu0 0
  %66 = vmatpush1.bf16.msra.mxu0 %v40
  %67 = vmatprep.subr.bf16.mxu0 0
  %68 = vmatpush2.bf16.msra.mxu0 0
  %69 = vmatprep.subr.bf16.mxu0 0
  %70 = vmatpush2.bf16.msra.mxu0 0
  %71 = vmatprep.subr.bf16.mxu0 0
  %72 = vmatpush2.bf16.msra.mxu0 0
  %73 = vmatprep.subr.bf16.mxu0 0
  %74 = vmatpush2.bf16.msra.mxu0 0
  %75 = vmatprep.subr.bf16.mxu0 0
  %76 = vmatpush2.bf16.msra.mxu0 0
  %77 = vmatprep.subr.bf16.mxu0 0
  %78 = vmatpush2.bf16.msra.mxu0 0
  %79 = vmatprep.subr.bf16.mxu0 0
  %80 = vmatpush2.bf16.msra.mxu0 0
  %81 = vmatprep.subr.bf16.mxu0 0
  %82 = vmatpush2.bf16.msra.mxu0 0
  %83 = vmatprep.mubr.bf16.mxu0 0
  %84 = vmatmul.mubr.bf16.gmra.mxu0 %v46
  %v85 = vpop.f32.mrf.mxu0
  %v86 = vadd.f32 %v30, %v85
  %v87 = vpop.f32.mrf.mxu0
  %v88 = vpop.f32.mrf.mxu0
  %v89 = vadd.f32 %v30, %v88
  %v90 = vpop.f32.mrf.mxu0
  %91 = vmatprep.mubr.bf16.mxu0 0
  %92 = vmatmul.mubr.bf16.gmra.mxu0 %v49
  %v93 = vpop.f32.mrf.mxu0
  %v94 = vadd.f32 %v30, %v93
  %v95 = vpop.f32.mrf.mxu0
  %v96 = vpop.f32.mrf.mxu0
  %v97 = vadd.f32 %v30, %v96
  %v98 = vpop.f32.mrf.mxu0
  %99 = vdwg.mxu0
  %100 = vst.msk [vmem:[%s3] sm:$0xff] %vm44, %v86
  %101 = vst.msk [vmem:[%s3 + $0x8] sm:$0xff] %vm44, %v89
  %102 = vst.msk [vmem:[%s3 + $0x10] sm:$0xff] %vm44, %v94
  %103 = vst.msk [vmem:[%s3 + $0x18] sm:$0xff] %vm44, %v97
  // Predicated region
  $region14: #{encoder_decoder_forward.7} parent=0 // pred_check
    _
  $region15: #{encoder_decoder_forward.7} parent=0 // pred_check_branch
    %105 = sbr.rel (0) target = $region17
  $region16: #{encoder_decoder_forward.7} parent=0 // pred_region
    _
  $region17: #{encoder_decoder_forward.7} parent=0 // pred_fallthru
    _
  // Predicated region
  $region18: #{encoder_decoder_forward.7} parent=0 // pred_check
    _
  $region19: #{encoder_decoder_forward.7} parent=0 // pred_check_branch
    %107 = sbr.rel (0) target = $region21
  $region20: #{encoder_decoder_forward.7} parent=0 // pred_region
    _
  $region21: #{encoder_decoder_forward.7} parent=0 // pred_fallthru
    _

// kernel: encoder_decoder_forward.11
$region0: #{encoder_decoder_forward.11}
  #allocation0 [shape = 'u32[]', space=smem, size = 0x4, offset = 0x4, fixed_abs, tag = 'smem constant byte address 0x4 - core index']
  #allocation1 [shape = 'u32[144,128]{1,0:T(1,128)}', space=vmem, size = 0x12000, scoped, tag = 'internal scratch']
  %s0 = inlined_call_operand.vmem [shape: f32[16,32], index: 0, kind: input, shape index: {}]
  %s1 = inlined_call_operand.vmem [shape: bf16[32,64], index: 1, kind: input, shape index: {}]
  %s2 = inlined_call_operand.vmem [shape: f32[1,64], index: 2, kind: input, shape index: {}]
  %s3 = inlined_call_operand.vmem [shape: f32[16,64], index: 3, kind: output, shape index: {}]
  %s4 = sld [smem:[#allocation0]]
  $region22: #{encoder_decoder_forward.11} parent=0
    _
  %s6 = ssub.s32 1, %s4
  %s7 = scalar_select 0, %s6, %s4
  // Predicated region
  $region2: #{encoder_decoder_forward.11} parent=0 // pred_check
    _
  $region3: #{encoder_decoder_forward.11} parent=0 // pred_check_branch
    %9 = sbr.rel (0) target = $region5
  $region4: #{encoder_decoder_forward.11} parent=0 // pred_region
    _
  $region5: #{encoder_decoder_forward.11} parent=0 // pred_fallthru
    _
  // Predicated region
  $region6: #{encoder_decoder_forward.11} parent=0 // pred_check
    _
  $region7: #{encoder_decoder_forward.11} parent=0 // pred_check_branch
    %11 = sbr.rel (0) target = $region9
  $region8: #{encoder_decoder_forward.11} parent=0 // pred_region
    _
  $region9: #{encoder_decoder_forward.11} parent=0 // pred_fallthru
    _
  // Predicated region
  $region10: #{encoder_decoder_forward.11} parent=0 // pred_check
    _
  $region11: #{encoder_decoder_forward.11} parent=0 // pred_check_branch
    %13 = sbr.rel (0) target = $region13
  $region12: #{encoder_decoder_forward.11} parent=0 // pred_region
    _
  $region13: #{encoder_decoder_forward.11} parent=0 // pred_fallthru
    _
  %v15 = vld [vmem:[%s0] sm:$0xff]
  %v16 = vld [vmem:[%s0 + $0x8] sm:$0xff]
  %v17 = vpack.c.bf16 %v16, %v15
  %v18 = vld [vmem:[%s1] sm:$0xf]
  %v19 = vld [vmem:[%s1 + $0x4] sm:$0xf]
  %v20 = vld [vmem:[%s1 + $0x8] sm:$0xf]
  %v21 = vld [vmem:[%s1 + $0xc] sm:$0xf]
  %v22 = vld [vmem:[%s2] sm:$0x1]
  %v24 = vlaneseq
  %v25 = vshrl.u32 %v24, 7
  %v26 = vsub.s32 0, %v25
  %v27 = vrot.slane %v22, %v26
  %v33 = vunpack.c.l.b16 %v18
  %v34 = vunpack.c.l.b16 %v19
  %v35 = vunpack.c.l.b16 %v20
  %v36 = vunpack.c.l.b16 %v21
  %v37 = vpack.c.b16 %v34, %v33
  %v38 = vpack.c.b16 %v36, %v35
  %vm41 = vcmask 261120
  %v43 = vsel %vm41, %v17, 0
  %45 = vmatprep.subr.bf16.mxu0 0
  %46 = vmatpush1.bf16.msra.mxu0 0
  %47 = vmatprep.subr.bf16.mxu0 0
  %48 = vmatpush1.bf16.msra.mxu0 0
  %49 = vmatprep.subr.bf16.mxu0 0
  %50 = vmatpush1.bf16.msra.mxu0 0
  %51 = vmatprep.subr.bf16.mxu0 0
  %52 = vmatpush1.bf16.msra.mxu0 0
  %53 = vmatprep.subr.bf16.mxu0 0
  %54 = vmatpush1.bf16.msra.mxu0 0
  %55 = vmatprep.subr.bf16.mxu0 0
  %56 = vmatpush1.bf16.msra.mxu0 0
  %57 = vmatprep.subr.bf16.mxu0 0
  %58 = vmatpush1.bf16.msra.mxu0 %v38
  %59 = vmatprep.subr.bf16.mxu0 0
  %60 = vmatpush1.bf16.msra.mxu0 %v37
  %61 = vmatprep.subr.bf16.mxu0 0
  %62 = vmatpush2.bf16.msra.mxu0 0
  %63 = vmatprep.subr.bf16.mxu0 0
  %64 = vmatpush2.bf16.msra.mxu0 0
  %65 = vmatprep.subr.bf16.mxu0 0
  %66 = vmatpush2.bf16.msra.mxu0 0
  %67 = vmatprep.subr.bf16.mxu0 0
  %68 = vmatpush2.bf16.msra.mxu0 0
  %69 = vmatprep.subr.bf16.mxu0 0
  %70 = vmatpush2.bf16.msra.mxu0 0
  %71 = vmatprep.subr.bf16.mxu0 0
  %72 = vmatpush2.bf16.msra.mxu0 0
  %73 = vmatprep.subr.bf16.mxu0 0
  %74 = vmatpush2.bf16.msra.mxu0 0
  %75 = vmatprep.subr.bf16.mxu0 0
  %76 = vmatpush2.bf16.msra.mxu0 0
  %77 = vmatprep.mubr.bf16.mxu0 0
  %78 = vmatmul.mubr.bf16.gmra.mxu0 %v43
  %v79 = vpop.f32.mrf.mxu0
  %v80 = vadd.f32 %v27, %v79
  %v81 = vpop.f32.mrf.mxu0
  %v82 = vpop.f32.mrf.mxu0
  %v83 = vadd.f32 %v27, %v82
  %v84 = vpop.f32.mrf.mxu0
  %85 = vdwg.mxu0
  %vm86 = vcmask 523264
  %87 = vst.msk [vmem:[%s3] sm:$0xff] %vm86, %v80
  %88 = vst.msk [vmem:[%s3 + $0x8] sm:$0xff] %vm86, %v83
  // Predicated region
  $region14: #{encoder_decoder_forward.11} parent=0 // pred_check
    _
  $region15: #{encoder_decoder_forward.11} parent=0 // pred_check_branch
    %90 = sbr.rel (0) target = $region17
  $region16: #{encoder_decoder_forward.11} parent=0 // pred_region
    _
  $region17: #{encoder_decoder_forward.11} parent=0 // pred_fallthru
    _
  // Predicated region
  $region18: #{encoder_decoder_forward.11} parent=0 // pred_check
    _
  $region19: #{encoder_decoder_forward.11} parent=0 // pred_check_branch
    %92 = sbr.rel (0) target = $region21
  $region20: #{encoder_decoder_forward.11} parent=0 // pred_region
    _
  $region21: #{encoder_decoder_forward.11} parent=0 // pred_fallthru
    _

// kernel: encoder_decoder_forward.10
$region0: #{encoder_decoder_forward.10}
  #allocation0 [shape = 'u32[]', space=smem, size = 0x4, offset = 0x4, fixed_abs, tag = 'smem constant byte address 0x4 - core index']
  #allocation1 [shape = 'u32[144,128]{1,0:T(1,128)}', space=vmem, size = 0x12000, scoped, tag = 'internal scratch']
  #allocation2 [shape = 'f32[2,32]{1,0:T(2,128)}', space=vmem, size = 0x400, scoped, tag = 'scratch operand']
  #allocation3 [shape = 'f32[2,32]{1,0:T(2,128)}', space=vmem, size = 0x400, scoped, tag = 'scratch operand']
  #allocation4 [shape = 'f32[1,1]{1,0:T(1,128)S(1)}', space=vmem, size = 0x200, scoped, tag = 'scoped memory for encoder_decoder_forward.10']
  %s0 = inlined_call_operand.vmem [shape: bf16[8,2,32], index: 0, kind: input, shape index: {}]
  %s1 = inlined_call_operand.vmem [shape: f32[2,16,32], index: 1, kind: input, shape index: {}]
  %s2 = inlined_call_operand.vmem [shape: f32[2,16,32], index: 2, kind: input, shape index: {}]
  %s3 = inlined_call_operand.vmem [shape: f32[2,32], index: 3, kind: input, shape index: {}]
  %s4 = inlined_call_operand.vmem [shape: f32[2,32], index: 4, kind: input, shape index: {}]
  %s5 = inlined_call_operand.vmem [shape: bf16[32,32], index: 5, kind: input, shape index: {}]
  %s6 = inlined_call_operand.vmem [shape: f32[1,32], index: 6, kind: input, shape index: {}]
  %s7 = inlined_call_operand.vmem [shape: f32[1,32], index: 7, kind: input, shape index: {}]
  %s8 = inlined_call_operand.<no memory space> [shape: f32[1,1], index: 8, kind: input, shape index: {}]
  %s9 = inlined_call_operand.vmem [shape: bf16[32,128], index: 9, kind: input, shape index: {}]
  %s10 = inlined_call_operand.vmem [shape: bf16[32,128], index: 10, kind: input, shape index: {}]
  %s11 = inlined_call_operand.vmem [shape: f32[1,128], index: 11, kind: input, shape index: {}]
  %s12 = inlined_call_operand.vmem [shape: bf16[32,128], index: 12, kind: input, shape index: {}]
  %s13 = inlined_call_operand.vmem [shape: f32[1,128], index: 13, kind: input, shape index: {}]
  %s14 = inlined_call_operand.vmem [shape: f32[8,2,32], index: 14, kind: output, shape index: {0}]
  %s15 = inlined_call_operand.vmem [shape: f32[8,2,16], index: 15, kind: output, shape index: {1}]
  %16 = xla_tuple %s14, %s15
  %s17 = sld [smem:[#allocation0]]
  $region101: #{encoder_decoder_forward.10} parent=0
    _
  %s19 = ssub.s32 1, %s17
  %s20 = scalar_select 0, %s19, %s17
  %v21 = vstv %s8
  %22 = vst [vmem:[#allocation4] sm:$0x1] %v21
  loop: start=0, step=1, limit=4
  $region2: #{encoder_decoder_forward.10} parent=0 // loop_pre_header
    _
  $region3: #{encoder_decoder_forward.10} parent=0 // loop_header
    %s24 = sphi 0, %s28
    %p25 = scmp.ge.s32.totalorder %s24, 4
    %s34 = sphi 0, %s36
    %s37 = sphi 0, %s34
    %s38 = sphi 0, %s37
    %s54 = sphi 0, %s38
    %s58 = sphi 0, %s58
    %s60 = sphi 0, %s58
    %s61 = sphi 0, %s60
    %s75 = sphi 0, %s61
    %s79 = sphi 0, %s79
    %s81 = sphi 0, %s79
    %s82 = sphi 0, %s81
    %s96 = sphi 0, %s82
    %s100 = sphi 0, %s100
    %s102 = sphi 0, %s100
    %s103 = sphi 0, %s102
    %s117 = sphi 0, %s103
    %s121 = sphi 0, %s121
    %s123 = sphi 0, %s121
    %s124 = sphi 0, %s123
    %s138 = sphi 0, %s124
    %s142 = sphi 0, %s142
    %s144 = sphi 0, %s142
    %s145 = sphi 0, %s144
    %s159 = sphi 0, %s145
    %s163 = sphi 0, %s163
    %s165 = sphi 0, %s163
    %s166 = sphi 0, %s165
    %s180 = sphi 0, %s166
    %s184 = sphi 0, %s184
    %s186 = sphi 0, %s184
    %s187 = sphi 0, %s186
    %s201 = sphi 0, %s187
    %s205 = sphi 0, %s205
    %s207 = sphi 0, %s205
    %s208 = sphi 0, %s207
    %s222 = sphi 0, %s208
    %s226 = sphi 0, %s226
    %s228 = sphi 0, %s226
    %s229 = sphi 0, %s228
    %s243 = sphi 0, %s229
    %s247 = sphi 0, %s247
    %s249 = sphi 0, %s247
    %s250 = sphi 0, %s249
    %s264 = sphi 0, %s250
    %s268 = sphi 0, %s268
    %s270 = sphi 0, %s268
    %s271 = sphi 0, %s270
    %s285 = sphi 0, %s271
    %s289 = sphi 0, %s289
    %s291 = sphi 0, %s289
    %s292 = sphi 0, %s291
    %s306 = sphi 0, %s292
    %s310 = sphi 0, %s310
    %s312 = sphi 0, %s310
    %s313 = sphi 0, %s312
    %s327 = sphi 0, %s313
    %s333 = sphi 0, %s335
    %s336 = sphi 0, %s333
    %s337 = sphi 0, %s336
    %s353 = sphi 0, %s337
    %s359 = sphi 0, %s361
    %s362 = sphi 0, %s359
    %s363 = sphi 0, %s362
    %s379 = sphi 0, %s363
  $region4: #{encoder_decoder_forward.10} parent=0 // loop_header_branch
    %27 = sbr.rel (%p25) target = $region8
  $region5: #{encoder_decoder_forward.10} parent=0 // loop_body
    %s29 = ssub.s32 %s24, 1
    %s30 = ssub.s32 %s24, 2
    %s31 = sadd.s32 %s24, 1
    %s32 = ssub.s32 %s24, %s31
    %p33 = scmp.eq.s32.totalorder %s32, 0
    %s35 = sadd.s32 %s34, 1
    %s36 = scalar_select %p33, %s34, %s35
    %p39 = pneg %p33
    %p40 = scmp.eq.s32.totalorder %s24, 1
    %p41 = por %p39, %p40
    %p42 = scmp.ne.s32.totalorder %s34, %s37
    %p43 = scmp.eq.s32.totalorder %s24, 0
    %p44 = por %p42, %p43
    %p45 = scmp.ne.s32.totalorder %s34, %s37
    %p46 = scmp.eq.s32.totalorder %s29, 1
    %p47 = por %p45, %p46
    %p48 = scmp.ne.s32.totalorder %s37, %s38
    %p49 = scmp.eq.s32.totalorder %s29, 0
    %p50 = por %p48, %p49
    %p51 = scmp.ne.s32.totalorder %s37, %s38
    %p52 = scmp.eq.s32.totalorder %s30, 1
    %p53 = por %p51, %p52
    %p55 = scmp.ne.s32.totalorder %s38, %s54
    %p56 = scmp.eq.s32.totalorder %s30, 0
    %p57 = por %p55, %p56
    %s59 = sadd.s32 %s58, 1
    %p62 = scmp.eq.s32.totalorder %s24, 1
    %p63 = scmp.ne.s32.totalorder %s58, %s60
    %p64 = scmp.eq.s32.totalorder %s24, 0
    %p65 = por %p63, %p64
    %p66 = scmp.ne.s32.totalorder %s58, %s60
    %p67 = scmp.eq.s32.totalorder %s29, 1
    %p68 = por %p66, %p67
    %p69 = scmp.ne.s32.totalorder %s60, %s61
    %p70 = scmp.eq.s32.totalorder %s29, 0
    %p71 = por %p69, %p70
    %p72 = scmp.ne.s32.totalorder %s60, %s61
    %p73 = scmp.eq.s32.totalorder %s30, 1
    %p74 = por %p72, %p73
    %p76 = scmp.ne.s32.totalorder %s61, %s75
    %p77 = scmp.eq.s32.totalorder %s30, 0
    %p78 = por %p76, %p77
    %s80 = sadd.s32 %s79, 1
    %p83 = scmp.eq.s32.totalorder %s24, 1
    %p84 = scmp.ne.s32.totalorder %s79, %s81
    %p85 = scmp.eq.s32.totalorder %s24, 0
    %p86 = por %p84, %p85
    %p87 = scmp.ne.s32.totalorder %s79, %s81
    %p88 = scmp.eq.s32.totalorder %s29, 1
    %p89 = por %p87, %p88
    %p90 = scmp.ne.s32.totalorder %s81, %s82
    %p91 = scmp.eq.s32.totalorder %s29, 0
    %p92 = por %p90, %p91
    %p93 = scmp.ne.s32.totalorder %s81, %s82
    %p94 = scmp.eq.s32.totalorder %s30, 1
    %p95 = por %p93, %p94
    %p97 = scmp.ne.s32.totalorder %s82, %s96
    %p98 = scmp.eq.s32.totalorder %s30, 0
    %p99 = por %p97, %p98
    %s101 = sadd.s32 %s100, 1
    %p104 = scmp.eq.s32.totalorder %s24, 1
    %p105 = scmp.ne.s32.totalorder %s100, %s102
    %p106 = scmp.eq.s32.totalorder %s24, 0
    %p107 = por %p105, %p106
    %p108 = scmp.ne.s32.totalorder %s100, %s102
    %p109 = scmp.eq.s32.totalorder %s29, 1
    %p110 = por %p108, %p109
    %p111 = scmp.ne.s32.totalorder %s102, %s103
    %p112 = scmp.eq.s32.totalorder %s29, 0
    %p113 = por %p111, %p112
    %p114 = scmp.ne.s32.totalorder %s102, %s103
    %p115 = scmp.eq.s32.totalorder %s30, 1
    %p116 = por %p114, %p115
    %p118 = scmp.ne.s32.totalorder %s103, %s117
    %p119 = scmp.eq.s32.totalorder %s30, 0
    %p120 = por %p118, %p119
    %s122 = sadd.s32 %s121, 1
    %p125 = scmp.eq.s32.totalorder %s24, 1
    %p126 = scmp.ne.s32.totalorder %s121, %s123
    %p127 = scmp.eq.s32.totalorder %s24, 0
    %p128 = por %p126, %p127
    %p129 = scmp.ne.s32.totalorder %s121, %s123
    %p130 = scmp.eq.s32.totalorder %s29, 1
    %p131 = por %p129, %p130
    %p132 = scmp.ne.s32.totalorder %s123, %s124
    %p133 = scmp.eq.s32.totalorder %s29, 0
    %p134 = por %p132, %p133
    %p135 = scmp.ne.s32.totalorder %s123, %s124
    %p136 = scmp.eq.s32.totalorder %s30, 1
    %p137 = por %p135, %p136
    %p139 = scmp.ne.s32.totalorder %s124, %s138
    %p140 = scmp.eq.s32.totalorder %s30, 0
    %p141 = por %p139, %p140
    %s143 = sadd.s32 %s142, 1
    %p146 = scmp.eq.s32.totalorder %s24, 1
    %p147 = scmp.ne.s32.totalorder %s142, %s144
    %p148 = scmp.eq.s32.totalorder %s24, 0
    %p149 = por %p147, %p148
    %p150 = scmp.ne.s32.totalorder %s142, %s144
    %p151 = scmp.eq.s32.totalorder %s29, 1
    %p152 = por %p150, %p151
    %p153 = scmp.ne.s32.totalorder %s144, %s145
    %p154 = scmp.eq.s32.totalorder %s29, 0
    %p155 = por %p153, %p154
    %p156 = scmp.ne.s32.totalorder %s144, %s145
    %p157 = scmp.eq.s32.totalorder %s30, 1
    %p158 = por %p156, %p157
    %p160 = scmp.ne.s32.totalorder %s145, %s159
    %p161 = scmp.eq.s32.totalorder %s30, 0
    %p162 = por %p160, %p161
    %s164 = sadd.s32 %s163, 1
    %p167 = scmp.eq.s32.totalorder %s24, 1
    %p168 = scmp.ne.s32.totalorder %s163, %s165
    %p169 = scmp.eq.s32.totalorder %s24, 0
    %p170 = por %p168, %p169
    %p171 = scmp.ne.s32.totalorder %s163, %s165
    %p172 = scmp.eq.s32.totalorder %s29, 1
    %p173 = por %p171, %p172
    %p174 = scmp.ne.s32.totalorder %s165, %s166
    %p175 = scmp.eq.s32.totalorder %s29, 0
    %p176 = por %p174, %p175
    %p177 = scmp.ne.s32.totalorder %s165, %s166
    %p178 = scmp.eq.s32.totalorder %s30, 1
    %p179 = por %p177, %p178
    %p181 = scmp.ne.s32.totalorder %s166, %s180
    %p182 = scmp.eq.s32.totalorder %s30, 0
    %p183 = por %p181, %p182
    %s185 = sadd.s32 %s184, 1
    %p188 = scmp.eq.s32.totalorder %s24, 1
    %p189 = scmp.ne.s32.totalorder %s184, %s186
    %p190 = scmp.eq.s32.totalorder %s24, 0
    %p191 = por %p189, %p190
    %p192 = scmp.ne.s32.totalorder %s184, %s186
    %p193 = scmp.eq.s32.totalorder %s29, 1
    %p194 = por %p192, %p193
    %p195 = scmp.ne.s32.totalorder %s186, %s187
    %p196 = scmp.eq.s32.totalorder %s29, 0
    %p197 = por %p195, %p196
    %p198 = scmp.ne.s32.totalorder %s186, %s187
    %p199 = scmp.eq.s32.totalorder %s30, 1
    %p200 = por %p198, %p199
    %p202 = scmp.ne.s32.totalorder %s187, %s201
    %p203 = scmp.eq.s32.totalorder %s30, 0
    %p204 = por %p202, %p203
    %s206 = sadd.s32 %s205, 1
    %p209 = scmp.eq.s32.totalorder %s24, 1
    %p210 = scmp.ne.s32.totalorder %s205, %s207
    %p211 = scmp.eq.s32.totalorder %s24, 0
    %p212 = por %p210, %p211
    %p213 = scmp.ne.s32.totalorder %s205, %s207
    %p214 = scmp.eq.s32.totalorder %s29, 1
    %p215 = por %p213, %p214
    %p216 = scmp.ne.s32.totalorder %s207, %s208
    %p217 = scmp.eq.s32.totalorder %s29, 0
    %p218 = por %p216, %p217
    %p219 = scmp.ne.s32.totalorder %s207, %s208
    %p220 = scmp.eq.s32.totalorder %s30, 1
    %p221 = por %p219, %p220
    %p223 = scmp.ne.s32.totalorder %s208, %s222
    %p224 = scmp.eq.s32.totalorder %s30, 0
    %p225 = por %p223, %p224
    %s227 = sadd.s32 %s226, 1
    %p230 = scmp.eq.s32.totalorder %s24, 1
    %p231 = scmp.ne.s32.totalorder %s226, %s228
    %p232 = scmp.eq.s32.totalorder %s24, 0
    %p233 = por %p231, %p232
    %p234 = scmp.ne.s32.totalorder %s226, %s228
    %p235 = scmp.eq.s32.totalorder %s29, 1
    %p236 = por %p234, %p235
    %p237 = scmp.ne.s32.totalorder %s228, %s229
    %p238 = scmp.eq.s32.totalorder %s29, 0
    %p239 = por %p237, %p238
    %p240 = scmp.ne.s32.totalorder %s228, %s229
    %p241 = scmp.eq.s32.totalorder %s30, 1
    %p242 = por %p240, %p241
    %p244 = scmp.ne.s32.totalorder %s229, %s243
    %p245 = scmp.eq.s32.totalorder %s30, 0
    %p246 = por %p244, %p245
    %s248 = sadd.s32 %s247, 1
    %p251 = scmp.eq.s32.totalorder %s24, 1
    %p252 = scmp.ne.s32.totalorder %s247, %s249
    %p253 = scmp.eq.s32.totalorder %s24, 0
    %p254 = por %p252, %p253
    %p255 = scmp.ne.s32.totalorder %s247, %s249
    %p256 = scmp.eq.s32.totalorder %s29, 1
    %p257 = por %p255, %p256
    %p258 = scmp.ne.s32.totalorder %s249, %s250
    %p259 = scmp.eq.s32.totalorder %s29, 0
    %p260 = por %p258, %p259
    %p261 = scmp.ne.s32.totalorder %s249, %s250
    %p262 = scmp.eq.s32.totalorder %s30, 1
    %p263 = por %p261, %p262
    %p265 = scmp.ne.s32.totalorder %s250, %s264
    %p266 = scmp.eq.s32.totalorder %s30, 0
    %p267 = por %p265, %p266
    %s269 = sadd.s32 %s268, 1
    %p272 = scmp.eq.s32.totalorder %s24, 1
    %p273 = scmp.ne.s32.totalorder %s268, %s270
    %p274 = scmp.eq.s32.totalorder %s24, 0
    %p275 = por %p273, %p274
    %p276 = scmp.ne.s32.totalorder %s268, %s270
    %p277 = scmp.eq.s32.totalorder %s29, 1
    %p278 = por %p276, %p277
    %p279 = scmp.ne.s32.totalorder %s270, %s271
    %p280 = scmp.eq.s32.totalorder %s29, 0
    %p281 = por %p279, %p280
    %p282 = scmp.ne.s32.totalorder %s270, %s271
    %p283 = scmp.eq.s32.totalorder %s30, 1
    %p284 = por %p282, %p283
    %p286 = scmp.ne.s32.totalorder %s271, %s285
    %p287 = scmp.eq.s32.totalorder %s30, 0
    %p288 = por %p286, %p287
    %s290 = sadd.s32 %s289, 1
    %p293 = scmp.eq.s32.totalorder %s24, 1
    %p294 = scmp.ne.s32.totalorder %s289, %s291
    %p295 = scmp.eq.s32.totalorder %s24, 0
    %p296 = por %p294, %p295
    %p297 = scmp.ne.s32.totalorder %s289, %s291
    %p298 = scmp.eq.s32.totalorder %s29, 1
    %p299 = por %p297, %p298
    %p300 = scmp.ne.s32.totalorder %s291, %s292
    %p301 = scmp.eq.s32.totalorder %s29, 0
    %p302 = por %p300, %p301
    %p303 = scmp.ne.s32.totalorder %s291, %s292
    %p304 = scmp.eq.s32.totalorder %s30, 1
    %p305 = por %p303, %p304
    %p307 = scmp.ne.s32.totalorder %s292, %s306
    %p308 = scmp.eq.s32.totalorder %s30, 0
    %p309 = por %p307, %p308
    %s311 = sadd.s32 %s310, 1
    %p314 = scmp.eq.s32.totalorder %s24, 1
    %p315 = scmp.ne.s32.totalorder %s310, %s312
    %p316 = scmp.eq.s32.totalorder %s24, 0
    %p317 = por %p315, %p316
    %p318 = scmp.ne.s32.totalorder %s310, %s312
    %p319 = scmp.eq.s32.totalorder %s29, 1
    %p320 = por %p318, %p319
    %p321 = scmp.ne.s32.totalorder %s312, %s313
    %p322 = scmp.eq.s32.totalorder %s29, 0
    %p323 = por %p321, %p322
    %p324 = scmp.ne.s32.totalorder %s312, %s313
    %p325 = scmp.eq.s32.totalorder %s30, 1
    %p326 = por %p324, %p325
    %p328 = scmp.ne.s32.totalorder %s313, %s327
    %p329 = scmp.eq.s32.totalorder %s30, 0
    %p330 = por %p328, %p329
    %s331 = ssub.s32 %s24, %s31
    %p332 = scmp.eq.s32.totalorder %s331, 0
    %s334 = sadd.s32 %s333, 1
    %s335 = scalar_select %p332, %s333, %s334
    %p338 = pneg %p332
    %p339 = scmp.eq.s32.totalorder %s24, 1
    %p340 = por %p338, %p339
    %p341 = scmp.ne.s32.totalorder %s333, %s336
    %p342 = scmp.eq.s32.totalorder %s24, 0
    %p343 = por %p341, %p342
    %p344 = scmp.ne.s32.totalorder %s333, %s336
    %p345 = scmp.eq.s32.totalorder %s29, 1
    %p346 = por %p344, %p345
    %p347 = scmp.ne.s32.totalorder %s336, %s337
    %p348 = scmp.eq.s32.totalorder %s29, 0
    %p349 = por %p347, %p348
    %p350 = scmp.ne.s32.totalorder %s336, %s337
    %p351 = scmp.eq.s32.totalorder %s30, 1
    %p352 = por %p350, %p351
    %p354 = scmp.ne.s32.totalorder %s337, %s353
    %p355 = scmp.eq.s32.totalorder %s30, 0
    %p356 = por %p354, %p355
    %s357 = ssub.s32 %s24, %s31
    %p358 = scmp.eq.s32.totalorder %s357, 0
    %s360 = sadd.s32 %s359, 1
    %s361 = scalar_select %p358, %s359, %s360
    %p364 = pneg %p358
    %p365 = scmp.eq.s32.totalorder %s24, 1
    %p366 = por %p364, %p365
    %p367 = scmp.ne.s32.totalorder %s359, %s362
    %p368 = scmp.eq.s32.totalorder %s24, 0
    %p369 = por %p367, %p368
    %p370 = scmp.ne.s32.totalorder %s359, %s362
    %p371 = scmp.eq.s32.totalorder %s29, 1
    %p372 = por %p370, %p371
    %p373 = scmp.ne.s32.totalorder %s362, %s363
    %p374 = scmp.eq.s32.totalorder %s29, 0
    %p375 = por %p373, %p374
    %p376 = scmp.ne.s32.totalorder %s362, %s363
    %p377 = scmp.eq.s32.totalorder %s30, 1
    %p378 = por %p376, %p377
    %p380 = scmp.ne.s32.totalorder %s363, %s379
    %p381 = scmp.eq.s32.totalorder %s30, 0
    %p382 = por %p380, %p381
    %p383 = scmp.le.s32.totalorder 1, %s24
    %p384 = scmp.lt.s32.totalorder %s24, 3
    %p385 = pnand %p383, %p384
    %p386 = pneg %p385
    // Predicated region
    $region9: #{encoder_decoder_forward.10} parent=5 // pred_check
      _
    $region10: #{encoder_decoder_forward.10} parent=5 // pred_check_branch
      %388 = sbr.rel (%p385) target = $region12
    $region11: #{encoder_decoder_forward.10} parent=5 // pred_region
      %s389 = ssub.s32 %s24, 1
      // Predicated region
      $region13: #{encoder_decoder_forward.10} parent=11 // pred_check
        %p390 = pneg %p71
      $region14: #{encoder_decoder_forward.10} parent=11 // pred_check_branch
        %392 = sbr.rel (%p390) target = $region16
      $region15: #{encoder_decoder_forward.10} parent=11 // pred_region
        _
      $region16: #{encoder_decoder_forward.10} parent=11 // pred_fallthru
        _
      // Predicated region
      $region17: #{encoder_decoder_forward.10} parent=11 // pred_check
        %p393 = pneg %p92
      $region18: #{encoder_decoder_forward.10} parent=11 // pred_check_branch
        %395 = sbr.rel (%p393) target = $region20
      $region19: #{encoder_decoder_forward.10} parent=11 // pred_region
        _
      $region20: #{encoder_decoder_forward.10} parent=11 // pred_fallthru
        _
      // Predicated region
      $region21: #{encoder_decoder_forward.10} parent=11 // pred_check
        %p396 = pneg %p113
      $region22: #{encoder_decoder_forward.10} parent=11 // pred_check_branch
        %398 = sbr.rel (%p396) target = $region24
      $region23: #{encoder_decoder_forward.10} parent=11 // pred_region
        _
      $region24: #{encoder_decoder_forward.10} parent=11 // pred_fallthru
        _
      // Predicated region
      $region25: #{encoder_decoder_forward.10} parent=11 // pred_check
        %p399 = pneg %p134
      $region26: #{encoder_decoder_forward.10} parent=11 // pred_check_branch
        %401 = sbr.rel (%p399) target = $region28
      $region27: #{encoder_decoder_forward.10} parent=11 // pred_region
        _
      $region28: #{encoder_decoder_forward.10} parent=11 // pred_fallthru
        _
      // Predicated region
      $region29: #{encoder_decoder_forward.10} parent=11 // pred_check
        %p402 = pneg %p155
      $region30: #{encoder_decoder_forward.10} parent=11 // pred_check_branch
        %404 = sbr.rel (%p402) target = $region32
      $region31: #{encoder_decoder_forward.10} parent=11 // pred_region
        _
      $region32: #{encoder_decoder_forward.10} parent=11 // pred_fallthru
        _
      // Predicated region
      $region33: #{encoder_decoder_forward.10} parent=11 // pred_check
        %p405 = pneg %p176
      $region34: #{encoder_decoder_forward.10} parent=11 // pred_check_branch
        %407 = sbr.rel (%p405) target = $region36
      $region35: #{encoder_decoder_forward.10} parent=11 // pred_region
        _
      $region36: #{encoder_decoder_forward.10} parent=11 // pred_fallthru
        _
      // Predicated region
      $region37: #{encoder_decoder_forward.10} parent=11 // pred_check
        %p408 = pneg %p197
      $region38: #{encoder_decoder_forward.10} parent=11 // pred_check_branch
        %410 = sbr.rel (%p408) target = $region40
      $region39: #{encoder_decoder_forward.10} parent=11 // pred_region
        _
      $region40: #{encoder_decoder_forward.10} parent=11 // pred_fallthru
        _
      // Predicated region
      $region41: #{encoder_decoder_forward.10} parent=11 // pred_check
        %p411 = pneg %p218
      $region42: #{encoder_decoder_forward.10} parent=11 // pred_check_branch
        %413 = sbr.rel (%p411) target = $region44
      $region43: #{encoder_decoder_forward.10} parent=11 // pred_region
        _
      $region44: #{encoder_decoder_forward.10} parent=11 // pred_fallthru
        _
      // Predicated region
      $region45: #{encoder_decoder_forward.10} parent=11 // pred_check
        %p414 = pneg %p239
      $region46: #{encoder_decoder_forward.10} parent=11 // pred_check_branch
        %416 = sbr.rel (%p414) target = $region48
      $region47: #{encoder_decoder_forward.10} parent=11 // pred_region
        _
      $region48: #{encoder_decoder_forward.10} parent=11 // pred_fallthru
        _
      // Predicated region
      $region49: #{encoder_decoder_forward.10} parent=11 // pred_check
        %p417 = pneg %p260
      $region50: #{encoder_decoder_forward.10} parent=11 // pred_check_branch
        %419 = sbr.rel (%p417) target = $region52
      $region51: #{encoder_decoder_forward.10} parent=11 // pred_region
        _
      $region52: #{encoder_decoder_forward.10} parent=11 // pred_fallthru
        _
      // Predicated region
      $region53: #{encoder_decoder_forward.10} parent=11 // pred_check
        %p420 = pneg %p281
      $region54: #{encoder_decoder_forward.10} parent=11 // pred_check_branch
        %422 = sbr.rel (%p420) target = $region56
      $region55: #{encoder_decoder_forward.10} parent=11 // pred_region
        _
      $region56: #{encoder_decoder_forward.10} parent=11 // pred_fallthru
        _
      // Predicated region
      $region57: #{encoder_decoder_forward.10} parent=11 // pred_check
        %p423 = pneg %p302
      $region58: #{encoder_decoder_forward.10} parent=11 // pred_check_branch
        %425 = sbr.rel (%p423) target = $region60
      $region59: #{encoder_decoder_forward.10} parent=11 // pred_region
        _
      $region60: #{encoder_decoder_forward.10} parent=11 // pred_fallthru
        _
      // Predicated region
      $region61: #{encoder_decoder_forward.10} parent=11 // pred_check
        %p426 = pneg %p323
      $region62: #{encoder_decoder_forward.10} parent=11 // pred_check_branch
        %428 = sbr.rel (%p426) target = $region64
      $region63: #{encoder_decoder_forward.10} parent=11 // pred_region
        _
      $region64: #{encoder_decoder_forward.10} parent=11 // pred_fallthru
        _
    $region12: #{encoder_decoder_forward.10} parent=5 // pred_fallthru
      _
    %p429 = scmp.lt.s32.totalorder %s24, 2
    // Predicated region
    $region65: #{encoder_decoder_forward.10} parent=5 // pred_check
      %p430 = pneg %p429
    $region66: #{encoder_decoder_forward.10} parent=5 // pred_check_branch
      %432 = sbr.rel (%p430) target = $region68
    $region67: #{encoder_decoder_forward.10} parent=5 // pred_region
      // Predicated region
      $region69: #{encoder_decoder_forward.10} parent=67 // pred_check
        %p433 = pneg %p44
      $region70: #{encoder_decoder_forward.10} parent=67 // pred_check_branch
        %435 = sbr.rel (%p433) target = $region72
      $region71: #{encoder_decoder_forward.10} parent=67 // pred_region
        %s436 = smul.u32 4, %s24
        %p437 = scmp.lt.s32.totalorder %s436, 7
        %s438 = scalar_select %p437, %s436, 7
        %s439 = scalar_lea.vmem %s0, %s438
        %s440 = smul.u32 4, %s24
      $region72: #{encoder_decoder_forward.10} parent=67 // pred_fallthru
        _
    $region68: #{encoder_decoder_forward.10} parent=5 // pred_fallthru
      _
    %p441 = scmp.le.s32.totalorder 1, %s24
    %p442 = scmp.lt.s32.totalorder %s24, 3
    %p443 = pnand %p441, %p442
    %p444 = pneg %p443
    // Predicated region
    $region73: #{encoder_decoder_forward.10} parent=5 // pred_check
      _
    $region74: #{encoder_decoder_forward.10} parent=5 // pred_check_branch
      %446 = sbr.rel (%p443) target = $region76
    $region75: #{encoder_decoder_forward.10} parent=5 // pred_region
      %s447 = ssub.s32 %s24, 1
      %s448 = smul.u32 4, %s29
      %p449 = scmp.lt.s32.totalorder %s448, 7
      %s450 = scalar_select %p449, %s448, 7
      %s451 = scalar_lea.vmem %s0, %s450
      %p452 = pneg %p50
      %p453 = pneg %p47
      %p454 = pneg %p71
      %p455 = pneg %p68
      %p456 = pneg %p92
      %p457 = pneg %p89
      %p458 = pneg %p113
      %p459 = pneg %p110
      %p460 = pneg %p134
      %p461 = pneg %p131
      %p462 = pneg %p155
      %p463 = pneg %p152
      %p464 = pneg %p176
      %p465 = pneg %p173
      %p466 = pneg %p197
      %p467 = pneg %p194
      %p468 = pneg %p218
      %p469 = pneg %p215
      %p470 = pneg %p239
      %p471 = pneg %p236
      %p472 = pneg %p260
      %p473 = pneg %p257
      %p474 = pneg %p281
      %p475 = pneg %p278
      %p476 = pneg %p302
      %p477 = pneg %p299
      %p478 = pneg %p323
      %p479 = pneg %p320
      %p480 = pneg %p349
      %p481 = pneg %p346
      %s482 = smul.u32 4, %s29
      %p483 = scmp.lt.s32.totalorder %s482, 7
      %s484 = scalar_select %p483, %s482, 7
      %s485 = smul.addr %s484, 2
      %s486 = scalar_lea.vmem %s14, %s485
      %p487 = pneg %p375
      %p488 = pneg %p372
      %s489 = smul.u32 4, %s29
      %p490 = scmp.lt.s32.totalorder %s489, 7
      %s491 = scalar_select %p490, %s489, 7
      %s492 = smul.addr %s491, 2
      %s493 = scalar_lea.vmem %s15, %s492
      %s494 = smul.u32 4, %s29
      %p495 = scmp.lt.s32.totalorder %s494, 7
      %s496 = scalar_select %p495, %s494, 7
      %s497 = scalar_lea.vmem %s0, %s496
      %s498 = smul.u32 4, %s29
      %s499 = smul.u32 4, %s29
      %p500 = scmp.lt.s32.totalorder %s499, 7
      %s501 = scalar_select %p500, %s499, 7
      %s502 = smul.addr %s501, 2
      %s503 = scalar_lea.vmem %s14, %s502
      %s504 = smul.u32 4, %s29
      %s505 = smul.u32 4, %s29
      %p506 = scmp.lt.s32.totalorder %s505, 7
      %s507 = scalar_select %p506, %s505, 7
      %s508 = smul.addr %s507, 2
      %s509 = scalar_lea.vmem %s15, %s508
      %s510 = smul.u32 4, %s29
      %p512 = scmp.eq.s32.totalorder %s29, 0
      // Predicated region
      $region77: #{encoder_decoder_forward.10} parent=75 // pred_check
        %p513 = pneg %p512
      $region78: #{encoder_decoder_forward.10} parent=75 // pred_check_branch
        %515 = sbr.rel (%p513) target = $region80
      $region79: #{encoder_decoder_forward.10} parent=75 // pred_region
        %v516 = vld [vmem:[%s3] sm:$0x3]
        %vm517 = vcmask 254976
        %518 = vst.msk [vmem:[#allocation2] sm:$0x3] %vm517, %v516
        %v519 = vld [vmem:[%s4] sm:$0x3]
        %520 = vst.msk [vmem:[#allocation3] sm:$0x3] %vm517, %v519
      $region80: #{encoder_decoder_forward.10} parent=75 // pred_fallthru
        _
      %v521 = vld [vmem:[%s1] sm:$0xff]
      %v522 = vld [vmem:[%s1 + $0x8] sm:$0xff]
      %v523 = vld [vmem:[%s1 + $0x10] sm:$0xff]
      %v524 = vld [vmem:[%s1 + $0x18] sm:$0xff]
      %v525 = vld [vmem:[%s2] sm:$0xff]
      %v526 = vld [vmem:[%s2 + $0x8] sm:$0xff]
      %v527 = vld [vmem:[%s2 + $0x10] sm:$0xff]
      %v528 = vld [vmem:[%s2 + $0x18] sm:$0xff]
      %v529 = vld [vmem:[%s7] sm:$0x1]
      %v530 = vld [vmem:[#allocation4] sm:$0x1]
      %v531 = vld [vmem:[#allocation2] sm:$0x3]
      %v532 = vld [vmem:[#allocation3] sm:$0x3]
      %v533 = vpack.c.bf16 %v531, %v531
      %v534 = vld [vmem:[%s5] sm:$0xf]
      %v535 = vld [vmem:[%s5 + $0x4] sm:$0xf]
      %v536 = vld [vmem:[%s5 + $0x8] sm:$0xf]
      %v537 = vld [vmem:[%s5 + $0xc] sm:$0xf]
      %v538 = vld [vmem:[%s6] sm:$0x1]
      %v540 = vlaneseq
      %v541 = vshrl.u32 %v540, 7
      %v542 = vsub.s32 0, %v541
      %v543 = vrot.slane %v538, %v542
      %v549 = vunpack.c.l.b16 %v534
      %v550 = vunpack.c.l.b16 %v535
      %v551 = vunpack.c.l.b16 %v536
      %v552 = vunpack.c.l.b16 %v537
      %v553 = vpack.c.b16 %v550, %v549
      %v554 = vpack.c.b16 %v552, %v551
      %vm557 = vcmask 261120
      %v559 = vsel %vm557, %v533, 0
      %561 = vmatprep.subr.bf16.mxu0 0
      %562 = vmatpush1.bf16.msra.mxu0 0
      %563 = vmatprep.subr.bf16.mxu0 0
      %564 = vmatpush1.bf16.msra.mxu0 0
      %565 = vmatprep.subr.bf16.mxu0 0
      %566 = vmatpush1.bf16.msra.mxu0 0
      %567 = vmatprep.subr.bf16.mxu0 0
      %568 = vmatpush1.bf16.msra.mxu0 0
      %569 = vmatprep.subr.bf16.mxu0 0
      %570 = vmatpush1.bf16.msra.mxu0 0
      %571 = vmatprep.subr.bf16.mxu0 0
      %572 = vmatpush1.bf16.msra.mxu0 0
      %573 = vmatprep.subr.bf16.mxu0 0
      %574 = vmatpush1.bf16.msra.mxu0 %v554
      %575 = vmatprep.subr.bf16.mxu0 0
      %576 = vmatpush1.bf16.msra.mxu0 %v553
      %577 = vmatprep.subr.bf16.mxu0 0
      %578 = vmatpush2.bf16.msra.mxu0 0
      %579 = vmatprep.subr.bf16.mxu0 0
      %580 = vmatpush2.bf16.msra.mxu0 0
      %581 = vmatprep.subr.bf16.mxu0 0
      %582 = vmatpush2.bf16.msra.mxu0 0
      %583 = vmatprep.subr.bf16.mxu0 0
      %584 = vmatpush2.bf16.msra.mxu0 0
      %585 = vmatprep.subr.bf16.mxu0 0
      %586 = vmatpush2.bf16.msra.mxu0 0
      %587 = vmatprep.subr.bf16.mxu0 0
      %588 = vmatpush2.bf16.msra.mxu0 0
      %589 = vmatprep.subr.bf16.mxu0 0
      %590 = vmatpush2.bf16.msra.mxu0 0
      %591 = vmatprep.subr.bf16.mxu0 0
      %592 = vmatpush2.bf16.msra.mxu0 0
      %593 = vmatprep.mubr.bf16.mxu0 0
      %594 = vmatmul.mubr.bf16.gmra.mxu0 %v559
      %v595 = vpop.f32.mrf.mxu0
      %v596 = vadd.f32 %v543, %v595
      %v597 = vpop.f32.mrf.mxu0
      %v598 = vpop.f32.mrf.mxu0
      %v599 = vpop.f32.mrf.mxu0
      %600 = vdwg.mxu0
      %v603 = vunpack.c.l.s4 1966171168
      %v604 = vunpack.c.0.s8 %v603
      %v605 = vlaneseq
      %v606 = vshrl.u32 %v605, 7
      %v607 = vsub.s32 %v604, %v606
      %v608 = vrot.slane %v596, %v607
      %v609 = vcombine.high %v608, %v608
      %v611 = vunpack.c.l.s4 1966171168
      %v612 = vunpack.c.0.s8 %v611
      %v613 = vlaneseq
      %v614 = vshrl.u32 %v613, 7
      %v615 = vsub.s32 %v612, %v614
      %v616 = vrot.slane %v608, %v615
      %v618 = vunpack.c.l.s4 1966171168
      %v619 = vunpack.c.0.s8 %v618
      %v620 = vlaneseq
      %v621 = vshrl.u32 %v620, 7
      %v622 = vsub.s32 %v619, %v621
      %v623 = vrot.slane %v609, %v622
      %v624 = vlaneseq
      %v625 = vshrl.u32 %v624, 7
      %v626 = vsub.s32 0, %v625
      %v627 = vrot.slane %v616, %v626
      %v628 = vlaneseq
      %v629 = vshrl.u32 %v628, 7
      %v630 = vsub.s32 0, %v629
      %v631 = vrot.slane %v623, %v630
      %v634 = vadd.f32 %v525, %v627
      %v635 = vadd.f32 %v526, %v627
      %v636 = vadd.f32 %v527, %v631
      %v637 = vadd.f32 %v528, %v631
      %v638 = vtanh.pop %v634
      %v639 = vtanh.pop %v635
      %v640 = vtanh.pop %v636
      %v641 = vtanh.pop %v637
      %v643 = vlaneseq
      %v644 = vshrl.u32 %v643, 7
      %v645 = vsub.s32 0, %v644
      %v646 = vrot.slane %v529, %v645
      %v648 = vmul.f32 %v638, %v646
      %v649 = vmul.f32 %v639, %v646
      %v650 = vmul.f32 %v640, %v646
      %v651 = vmul.f32 %v641, %v646
      %v652 = vsel %vm557, %v648, 0.0
      %653 = vadd.xlane.f32.xlu0 %v652
      %v654 = vpop.xlane.xlu0 %653
      %v655 = vsel %vm557, %v649, 0.0
      %656 = vadd.xlane.f32.xlu0 %v655
      %v657 = vpop.xlane.xlu0 %656
      %v658 = vsel %vm557, %v650, 0.0
      %659 = vadd.xlane.f32.xlu0 %v658
      %v660 = vpop.xlane.xlu0 %659
      %v661 = vsel %vm557, %v651, 0.0
      %662 = vadd.xlane.f32.xlu0 %v661
      %v663 = vpop.xlane.xlu0 %662
      %v665 = vlaneseq
      %v666 = vshrl.u32 %v665, 7
      %v667 = vsub.s32 0, %v666
      %v668 = vrot.slane %v530, %v667
      %669 = vset.pattern.permute.xlu0 0
      %670 = vperm.xlu0 %669, %v668
      %v671 = vpop.permute.xlu0 %670
      %v673 = vadd.f32 %v654, %v671
      %v674 = vadd.f32 %v657, %v671
      %v675 = vadd.f32 %v660, %v671
      %v676 = vadd.f32 %v663, %v671
      %v681 = vlaneseq
      %v682 = vand.u32 %v681, 127
      %v683 = vlaneseq
      %v684 = vshrl.u32 %v683, 7
      %v685 = vsub.s32 %v682, %v684
      %v686 = vrot.slane %v673, %v685
      %v687 = vadd.s32 %v682, 4294967288
      %v688 = vlaneseq
      %v689 = vshrl.u32 %v688, 7
      %v690 = vsub.s32 %v687, %v689
      %v691 = vrot.slane %v674, %v690
      %vm692 = vcmask 130112
      %v693 = vsel %vm692, %v691, %v686
      %v694 = vlaneseq
      %v695 = vshrl.u32 %v694, 7
      %v696 = vsub.s32 %v682, %v695
      %v697 = vrot.slane %v675, %v696
      %v698 = vlaneseq
      %v699 = vshrl.u32 %v698, 7
      %v700 = vsub.s32 %v687, %v699
      %v701 = vrot.slane %v676, %v700
      %v702 = vsel %vm692, %v701, %v697
      %vm703 = vcmask 1041409
      %v704 = vsel %vm703, %v702, %v693
      %vm706 = vcmask 123904
      %v707 = vsel %vm706, %v704, -inf
      %708 = vmax.xlane.f32.xlu0 %v707
      %v709 = vpop.xlane.xlu0 %708
      %v711 = vlaneseq
      %v712 = vshrl.u32 %v711, 7
      %v713 = vsub.s32 0, %v712
      %v714 = vrot.slane %v709, %v713
      %v715 = vlaneseq
      %v716 = vshrl.u32 %v715, 7
      %v717 = vsub.s32 1, %v716
      %v718 = vrot.slane %v709, %v717
      %v721 = vsub.f32 %v673, %v714
      %v722 = vsub.f32 %v674, %v714
      %v723 = vsub.f32 %v675, %v718
      %v724 = vsub.f32 %v676, %v718
      %v725 = vmul.f32 %v721, 1.442695
      %v726 = vpow.pop %v725
      %v727 = vmul.f32 %v722, 1.442695
      %v728 = vpow.pop %v727
      %v729 = vmul.f32 %v723, 1.442695
      %v730 = vpow.pop %v729
      %v731 = vmul.f32 %v724, 1.442695
      %v732 = vpow.pop %v731
      %737 = vset.pattern.permute.xlu0 0
      %738 = vperm.xlu0 %737, %v726
      %v739 = vpop.permute.xlu0 %738
      %740 = vset.pattern.permute.xlu0 0
      %741 = vperm.xlu0 %740, %v728
      %v742 = vpop.permute.xlu0 %741
      %743 = vset.pattern.permute.xlu0 0
      %744 = vperm.xlu0 %743, %v730
      %v745 = vpop.permute.xlu0 %744
      %746 = vset.pattern.permute.xlu0 0
      %747 = vperm.xlu0 %746, %v732
      %v748 = vpop.permute.xlu0 %747
      %v749 = vlaneseq
      %v750 = vshrl.u32 %v749, 7
      %v751 = vsub.s32 %v682, %v750
      %v752 = vrot.slane %v739, %v751
      %v753 = vlaneseq
      %v754 = vshrl.u32 %v753, 7
      %v755 = vsub.s32 %v687, %v754
      %v756 = vrot.slane %v742, %v755
      %v757 = vsel %vm692, %v756, %v752
      %v758 = vlaneseq
      %v759 = vshrl.u32 %v758, 7
      %v760 = vsub.s32 %v682, %v759
      %v761 = vrot.slane %v745, %v760
      %v762 = vlaneseq
      %v763 = vshrl.u32 %v762, 7
      %v764 = vsub.s32 %v687, %v763
      %v765 = vrot.slane %v748, %v764
      %v766 = vsel %vm692, %v765, %v761
      %v767 = vsel %vm703, %v766, %v757
      %v769 = vsel %vm706, %v767, 0.0
      %770 = vadd.xlane.f32.xlu0 %v769
      %v771 = vpop.xlane.xlu0 %770
      %v772 = vrcp.pop %v771
      %v774 = vlaneseq
      %v775 = vshrl.u32 %v774, 7
      %v776 = vsub.s32 0, %v775
      %v777 = vrot.slane %v772, %v776
      %v778 = vlaneseq
      %v779 = vshrl.u32 %v778, 7
      %v780 = vsub.s32 1, %v779
      %v781 = vrot.slane %v772, %v780
      %v784 = vmul.f32 %v726, %v777
      %v785 = vmul.f32 %v728, %v777
      %v786 = vmul.f32 %v730, %v781
      %v787 = vmul.f32 %v732, %v781
      %789 = vset.pattern.permute.xlu0 0
      %790 = vperm.xlu0 %789, %v784
      %v791 = vpop.permute.xlu0 %790
      %794 = vset.pattern.permute.xlu0 0
      %795 = vperm.xlu0 %794, %v785
      %v796 = vpop.permute.xlu0 %795
      %799 = vset.pattern.permute.xlu0 0
      %800 = vperm.xlu0 %799, %v786
      %v801 = vpop.permute.xlu0 %800
      %804 = vset.pattern.permute.xlu0 0
      %805 = vperm.xlu0 %804, %v787
      %v806 = vpop.permute.xlu0 %805
      %v808 = vmul.f32 %v521, %v791
      %v809 = vmul.f32 %v522, %v796
      %v810 = vmul.f32 %v523, %v801
      %v811 = vmul.f32 %v524, %v806
      %v812 = vsel %vm557, %v808, 0.0
      %v813 = vsel %vm557, %v809, 0.0
      %v814 = vadd.f32 %v812, %v813
      %v815 = vrot.slane %v814, 4
      %v816 = vadd.f32 %v814, %v815
      %v817 = vrot.slane %v816, 2
      %v818 = vadd.f32 %v816, %v817
      %v819 = vrot.slane %v818, 1
      %v820 = vadd.f32 %v818, %v819
      %v821 = vsel %vm557, %v810, 0.0
      %v822 = vsel %vm557, %v811, 0.0
      %v823 = vadd.f32 %v821, %v822
      %v824 = vrot.slane %v823, 4
      %v825 = vadd.f32 %v823, %v824
      %v826 = vrot.slane %v825, 2
      %v827 = vadd.f32 %v825, %v826
      %v828 = vrot.slane %v827, 1
      %v829 = vadd.f32 %v827, %v828
      %v830 = vld [vmem:[%s497] sm:$0x1]
      %v831 = vld [vmem:[%s9] sm:$0xf]
      %v832 = vld [vmem:[%s9 + $0x4] sm:$0xf]
      %v833 = vld [vmem:[%s9 + $0x8] sm:$0xf]
      %v834 = vld [vmem:[%s9 + $0xc] sm:$0xf]
      %v835 = vpack.c.bf16 %v820, %v820
      %v836 = vpack.c.bf16 %v829, %v829
      %v837 = vld [vmem:[%s10] sm:$0xf]
      %v838 = vld [vmem:[%s10 + $0x4] sm:$0xf]
      %v839 = vld [vmem:[%s10 + $0x8] sm:$0xf]
      %v840 = vld [vmem:[%s10 + $0xc] sm:$0xf]
      %v843 = vunpack.c.l.b16 %v835
      %v844 = vunpack.c.l.b16 %v836
      %v845 = vsel %vm703, %v844, %v843
      %v846 = vpack.c.b16 %v845, %v845
      %v851 = vunpack.c.l.b16 %v837
      %v852 = vunpack.c.l.b16 %v838
      %v853 = vunpack.c.l.b16 %v839
      %v854 = vunpack.c.l.b16 %v840
      %v855 = vpack.c.b16 %v852, %v851
      %v856 = vpack.c.b16 %v854, %v853
      %v860 = vsel %vm557, %v846, 0
      %862 = vmatprep.subr.bf16.mxu0 0
      %863 = vmatpush1.bf16.msra.mxu0 0
      %864 = vmatprep.subr.bf16.mxu0 0
      %865 = vmatpush1.bf16.msra.mxu0 0
      %866 = vmatprep.subr.bf16.mxu0 0
      %867 = vmatpush1.bf16.msra.mxu0 0
      %868 = vmatprep.subr.bf16.mxu0 0
      %869 = vmatpush1.bf16.msra.mxu0 0
      %870 = vmatprep.subr.bf16.mxu0 0
      %871 = vmatpush1.bf16.msra.mxu0 0
      %872 = vmatprep.subr.bf16.mxu0 0
      %873 = vmatpush1.bf16.msra.mxu0 0
      %874 = vmatprep.subr.bf16.mxu0 0
      %875 = vmatpush1.bf16.msra.mxu0 %v856
      %876 = vmatprep.subr.bf16.mxu0 0
      %877 = vmatpush1.bf16.msra.mxu0 %v855
      %878 = vmatprep.subr.bf16.mxu0 0
      %879 = vmatpush2.bf16.msra.mxu0 0
      %880 = vmatprep.subr.bf16.mxu0 0
      %881 = vmatpush2.bf16.msra.mxu0 0
      %882 = vmatprep.subr.bf16.mxu0 0
      %883 = vmatpush2.bf16.msra.mxu0 0
      %884 = vmatprep.subr.bf16.mxu0 0
      %885 = vmatpush2.bf16.msra.mxu0 0
      %886 = vmatprep.subr.bf16.mxu0 0
      %887 = vmatpush2.bf16.msra.mxu0 0
      %888 = vmatprep.subr.bf16.mxu0 0
      %889 = vmatpush2.bf16.msra.mxu0 0
      %890 = vmatprep.subr.bf16.mxu0 0
      %891 = vmatpush2.bf16.msra.mxu0 0
      %892 = vmatprep.subr.bf16.mxu0 0
      %893 = vmatpush2.bf16.msra.mxu0 0
      %894 = vmatprep.mubr.bf16.mxu0 0
      %895 = vmatmul.mubr.bf16.gmra.mxu0 %v860
      %v896 = vpop.f32.mrf.mxu0
      %v897 = vadd.f32 0.0, %v896
      %v898 = vpop.f32.mrf.mxu0
      %v899 = vpop.f32.mrf.mxu0
      %v900 = vpop.f32.mrf.mxu0
      %901 = vdwg.mxu0
      %v906 = vunpack.c.l.b16 %v831
      %v907 = vunpack.c.l.b16 %v832
      %v908 = vunpack.c.l.b16 %v833
      %v909 = vunpack.c.l.b16 %v834
      %v910 = vpack.c.b16 %v907, %v906
      %v911 = vpack.c.b16 %v909, %v908
      %v915 = vsel %vm557, %v830, 0
      %917 = vmatprep.subr.bf16.mxu0 0
      %918 = vmatpush1.bf16.msra.mxu0 0
      %919 = vmatprep.subr.bf16.mxu0 0
      %920 = vmatpush1.bf16.msra.mxu0 0
      %921 = vmatprep.subr.bf16.mxu0 0
      %922 = vmatpush1.bf16.msra.mxu0 0
      %923 = vmatprep.subr.bf16.mxu0 0
      %924 = vmatpush1.bf16.msra.mxu0 0
      %925 = vmatprep.subr.bf16.mxu0 0
      %926 = vmatpush1.bf16.msra.mxu0 0
      %927 = vmatprep.subr.bf16.mxu0 0
      %928 = vmatpush1.bf16.msra.mxu0 0
      %929 = vmatprep.subr.bf16.mxu0 0
      %930 = vmatpush1.bf16.msra.mxu0 %v911
      %931 = vmatprep.subr.bf16.mxu0 0
      %932 = vmatpush1.bf16.msra.mxu0 %v910
      %933 = vmatprep.subr.bf16.mxu0 0
      %934 = vmatpush2.bf16.msra.mxu0 0
      %935 = vmatprep.subr.bf16.mxu0 0
      %936 = vmatpush2.bf16.msra.mxu0 0
      %937 = vmatprep.subr.bf16.mxu0 0
      %938 = vmatpush2.bf16.msra.mxu0 0
      %939 = vmatprep.subr.bf16.mxu0 0
      %940 = vmatpush2.bf16.msra.mxu0 0
      %941 = vmatprep.subr.bf16.mxu0 0
      %942 = vmatpush2.bf16.msra.mxu0 0
      %943 = vmatprep.subr.bf16.mxu0 0
      %944 = vmatpush2.bf16.msra.mxu0 0
      %945 = vmatprep.subr.bf16.mxu0 0
      %946 = vmatpush2.bf16.msra.mxu0 0
      %947 = vmatprep.subr.bf16.mxu0 0
      %948 = vmatpush2.bf16.msra.mxu0 0
      %949 = vmatprep.mubr.bf16.mxu0 0
      %950 = vmatmul.mubr.bf16.gmra.mxu0 %v915
      %v951 = vpop.f32.mrf.mxu0
      %v952 = vadd.f32 %v897, %v951
      %v953 = vpop.f32.mrf.mxu0
      %v954 = vpop.f32.mrf.mxu0
      %v955 = vpop.f32.mrf.mxu0
      %956 = vdwg.mxu0
      %v957 = vld [vmem:[%s11] sm:$0x1]
      %v959 = vlaneseq
      %v960 = vshrl.u32 %v959, 7
      %v961 = vsub.s32 0, %v960
      %v962 = vrot.slane %v957, %v961
      %v964 = vadd.f32 %v952, %v962
      %v965 = vld [vmem:[%s12] sm:$0xf]
      %v966 = vld [vmem:[%s12 + $0x4] sm:$0xf]
      %v967 = vld [vmem:[%s12 + $0x8] sm:$0xf]
      %v968 = vld [vmem:[%s12 + $0xc] sm:$0xf]
      %v973 = vunpack.c.l.b16 %v965
      %v974 = vunpack.c.l.b16 %v966
      %v975 = vunpack.c.l.b16 %v967
      %v976 = vunpack.c.l.b16 %v968
      %v977 = vpack.c.b16 %v974, %v973
      %v978 = vpack.c.b16 %v976, %v975
      %981 = vmatprep.subr.bf16.mxu0 0
      %982 = vmatpush1.bf16.msra.mxu0 0
      %983 = vmatprep.subr.bf16.mxu0 0
      %984 = vmatpush1.bf16.msra.mxu0 0
      %985 = vmatprep.subr.bf16.mxu0 0
      %986 = vmatpush1.bf16.msra.mxu0 0
      %987 = vmatprep.subr.bf16.mxu0 0
      %988 = vmatpush1.bf16.msra.mxu0 0
      %989 = vmatprep.subr.bf16.mxu0 0
      %990 = vmatpush1.bf16.msra.mxu0 0
      %991 = vmatprep.subr.bf16.mxu0 0
      %992 = vmatpush1.bf16.msra.mxu0 0
      %993 = vmatprep.subr.bf16.mxu0 0
      %994 = vmatpush1.bf16.msra.mxu0 %v978
      %995 = vmatprep.subr.bf16.mxu0 0
      %996 = vmatpush1.bf16.msra.mxu0 %v977
      %997 = vmatprep.subr.bf16.mxu0 0
      %998 = vmatpush2.bf16.msra.mxu0 0
      %999 = vmatprep.subr.bf16.mxu0 0
      %1000 = vmatpush2.bf16.msra.mxu0 0
      %1001 = vmatprep.subr.bf16.mxu0 0
      %1002 = vmatpush2.bf16.msra.mxu0 0
      %1003 = vmatprep.subr.bf16.mxu0 0
      %1004 = vmatpush2.bf16.msra.mxu0 0
      %1005 = vmatprep.subr.bf16.mxu0 0
      %1006 = vmatpush2.bf16.msra.mxu0 0
      %1007 = vmatprep.subr.bf16.mxu0 0
      %1008 = vmatpush2.bf16.msra.mxu0 0
      %1009 = vmatprep.subr.bf16.mxu0 0
      %1010 = vmatpush2.bf16.msra.mxu0 0
      %1011 = vmatprep.subr.bf16.mxu0 0
      %1012 = vmatpush2.bf16.msra.mxu0 0
      %1013 = vmatprep.mubr.bf16.mxu0 0
      %1014 = vmatmul.mubr.bf16.gmra.mxu0 %v559
      %v1015 = vpop.f32.mrf.mxu0
      %v1016 = vadd.f32 0.0, %v1015
      %v1017 = vpop.f32.mrf.mxu0
      %v1018 = vpop.f32.mrf.mxu0
      %v1019 = vpop.f32.mrf.mxu0
      %1020 = vdwg.mxu0
      %v1021 = vadd.f32 %v964, %v1016
      %v1022 = vld [vmem:[%s13] sm:$0x1]
      %v1024 = vlaneseq
      %v1025 = vshrl.u32 %v1024, 7
      %v1026 = vsub.s32 0, %v1025
      %v1027 = vrot.slane %v1022, %v1026
      %v1029 = vadd.f32 %v1021, %v1027
      %v1030 = vxor.u32 %v1029, 2147483648
      %v1031 = vmul.f32 %v1030, 1.442695
      %v1032 = vpow.pop %v1031
      %v1033 = vadd.f32 %v1032, 1.0
      %v1034 = vrcp.pop %v1033
      %v1035 = vmul.f32 1.0, %v1034
      %v1036 = vtanh.pop %v1029
      %1038 = vrot.lane.b32.xlu0 %v532, 32
      %v1039 = vpop.permute.xlu0 %1038
      %v1041 = vmul.f32 %v1035, %v1039
      %1043 = vrot.lane.b32.xlu0 %v1036, 64
      %v1044 = vpop.permute.xlu0 %1043
      %v1046 = vmul.f32 %v1035, %v1044
      %1048 = vrot.lane.b32.xlu0 %v1046, 32
      %v1049 = vpop.permute.xlu0 %1048
      %v1051 = vadd.f32 %v1041, %v1049
      %v1052 = vtanh.pop %v1051
      %1054 = vrot.lane.b32.xlu0 %v1052, 64
      %v1055 = vpop.permute.xlu0 %1054
      %v1057 = vmul.f32 %v1035, %v1055
      %1059 = vrot.lane.b32.xlu0 %v1057, 32
      %v1060 = vpop.permute.xlu0 %1059
      %vm1062 = vcmask 254976
      %1063 = vst.msk [vmem:[#allocation2] sm:$0x3] %vm1062, %v1060
      %1065 = vrot.lane.b32.xlu0 %v1051, 96
      %v1066 = vpop.permute.xlu0 %1065
      %1068 = vst.msk [vmem:[#allocation3] sm:$0x3] %vm1062, %v1066
      %1069 = vst.msk [vmem:[%s503] sm:$0x3] %vm1062, %v1060
      %v1070 = vlaneseq
      %v1071 = vshrl.u32 %v1070, 7
      %v1072 = vsub.s32 %v682, %v1071
      %v1073 = vrot.slane %v791, %v1072
      %v1074 = vlaneseq
      %v1075 = vshrl.u32 %v1074, 7
      %v1076 = vsub.s32 %v687, %v1075
      %v1077 = vrot.slane %v796, %v1076
      %v1078 = vsel %vm692, %v1077, %v1073
      %v1079 = vlaneseq
      %v1080 = vshrl.u32 %v1079, 7
      %v1081 = vsub.s32 %v682, %v1080
      %v1082 = vrot.slane %v801, %v1081
      %v1083 = vlaneseq
      %v1084 = vshrl.u32 %v1083, 7
      %v1085 = vsub.s32 %v687, %v1084
      %v1086 = vrot.slane %v806, %v1085
      %v1087 = vsel %vm692, %v1086, %v1082
      %v1088 = vsel %vm703, %v1087, %v1078
      %1090 = vst.msk [vmem:[%s509] sm:$0x3] %vm706, %v1088
      %v1091 = vld [vmem:[#allocation2] sm:$0x3]
      %v1092 = vld [vmem:[#allocation3] sm:$0x3]
      %v1093 = vpack.c.bf16 %v1091, %v1091
      %v1094 = vld [vmem:[%s5] sm:$0xf]
      %v1095 = vld [vmem:[%s5 + $0x4] sm:$0xf]
      %v1096 = vld [vmem:[%s5 + $0x8] sm:$0xf]
      %v1097 = vld [vmem:[%s5 + $0xc] sm:$0xf]
      %v1098 = vld [vmem:[%s6] sm:$0x1]
      %v1100 = vlaneseq
      %v1101 = vshrl.u32 %v1100, 7
      %v1102 = vsub.s32 0, %v1101
      %v1103 = vrot.slane %v1098, %v1102
      %v1109 = vunpack.c.l.b16 %v1094
      %v1110 = vunpack.c.l.b16 %v1095
      %v1111 = vunpack.c.l.b16 %v1096
      %v1112 = vunpack.c.l.b16 %v1097
      %v1113 = vpack.c.b16 %v1110, %v1109
      %v1114 = vpack.c.b16 %v1112, %v1111
      %v1118 = vsel %vm557, %v1093, 0
      %1120 = vmatprep.subr.bf16.mxu0 0
      %1121 = vmatpush1.bf16.msra.mxu0 0
      %1122 = vmatprep.subr.bf16.mxu0 0
      %1123 = vmatpush1.bf16.msra.mxu0 0
      %1124 = vmatprep.subr.bf16.mxu0 0
      %1125 = vmatpush1.bf16.msra.mxu0 0
      %1126 = vmatprep.subr.bf16.mxu0 0
      %1127 = vmatpush1.bf16.msra.mxu0 0
      %1128 = vmatprep.subr.bf16.mxu0 0
      %1129 = vmatpush1.bf16.msra.mxu0 0
      %1130 = vmatprep.subr.bf16.mxu0 0
      %1131 = vmatpush1.bf16.msra.mxu0 0
      %1132 = vmatprep.subr.bf16.mxu0 0
      %1133 = vmatpush1.bf16.msra.mxu0 %v1114
      %1134 = vmatprep.subr.bf16.mxu0 0
      %1135 = vmatpush1.bf16.msra.mxu0 %v1113
      %1136 = vmatprep.subr.bf16.mxu0 0
      %1137 = vmatpush2.bf16.msra.mxu0 0
      %1138 = vmatprep.subr.bf16.mxu0 0
      %1139 = vmatpush2.bf16.msra.mxu0 0
      %1140 = vmatprep.subr.bf16.mxu0 0
      %1141 = vmatpush2.bf16.msra.mxu0 0
      %1142 = vmatprep.subr.bf16.mxu0 0
      %1143 = vmatpush2.bf16.msra.mxu0 0
      %1144 = vmatprep.subr.bf16.mxu0 0
      %1145 = vmatpush2.bf16.msra.mxu0 0
      %1146 = vmatprep.subr.bf16.mxu0 0
      %1147 = vmatpush2.bf16.msra.mxu0 0
      %1148 = vmatprep.subr.bf16.mxu0 0
      %1149 = vmatpush2.bf16.msra.mxu0 0
      %1150 = vmatprep.subr.bf16.mxu0 0
      %1151 = vmatpush2.bf16.msra.mxu0 0
      %1152 = vmatprep.mubr.bf16.mxu0 0
      %1153 = vmatmul.mubr.bf16.gmra.mxu0 %v1118
      %v1154 = vpop.f32.mrf.mxu0
      %v1155 = vadd.f32 %v1103, %v1154
      %v1156 = vpop.f32.mrf.mxu0
      %v1157 = vpop.f32.mrf.mxu0
      %v1158 = vpop.f32.mrf.mxu0
      %1159 = vdwg.mxu0
      %v1162 = vunpack.c.l.s4 1966171168
      %v1163 = vunpack.c.0.s8 %v1162
      %v1164 = vlaneseq
      %v1165 = vshrl.u32 %v1164, 7
      %v1166 = vsub.s32 %v1163, %v1165
      %v1167 = vrot.slane %v1155, %v1166
      %v1168 = vcombine.high %v1167, %v1167
      %v1170 = vunpack.c.l.s4 1966171168
      %v1171 = vunpack.c.0.s8 %v1170
      %v1172 = vlaneseq
      %v1173 = vshrl.u32 %v1172, 7
      %v1174 = vsub.s32 %v1171, %v1173
      %v1175 = vrot.slane %v1167, %v1174
      %v1177 = vunpack.c.l.s4 1966171168
      %v1178 = vunpack.c.0.s8 %v1177
      %v1179 = vlaneseq
      %v1180 = vshrl.u32 %v1179, 7
      %v1181 = vsub.s32 %v1178, %v1180
      %v1182 = vrot.slane %v1168, %v1181
      %v1183 = vlaneseq
      %v1184 = vshrl.u32 %v1183, 7
      %v1185 = vsub.s32 0, %v1184
      %v1186 = vrot.slane %v1175, %v1185
      %v1187 = vlaneseq
      %v1188 = vshrl.u32 %v1187, 7
      %v1189 = vsub.s32 0, %v1188
      %v1190 = vrot.slane %v1182, %v1189
      %v1193 = vadd.f32 %v525, %v1186
      %v1194 = vadd.f32 %v526, %v1186
      %v1195 = vadd.f32 %v527, %v1190
      %v1196 = vadd.f32 %v528, %v1190
      %v1197 = vtanh.pop %v1193
      %v1198 = vtanh.pop %v1194
      %v1199 = vtanh.pop %v1195
      %v1200 = vtanh.pop %v1196
      %v1201 = vmul.f32 %v1197, %v646
      %v1202 = vmul.f32 %v1198, %v646
      %v1203 = vmul.f32 %v1199, %v646
      %v1204 = vmul.f32 %v1200, %v646
      %v1205 = vsel %vm557, %v1201, 0.0
      %1206 = vadd.xlane.f32.xlu0 %v1205
      %v1207 = vpop.xlane.xlu0 %1206
      %v1208 = vsel %vm557, %v1202, 0.0
      %1209 = vadd.xlane.f32.xlu0 %v1208
      %v1210 = vpop.xlane.xlu0 %1209
      %v1211 = vsel %vm557, %v1203, 0.0
      %1212 = vadd.xlane.f32.xlu0 %v1211
      %v1213 = vpop.xlane.xlu0 %1212
      %v1214 = vsel %vm557, %v1204, 0.0
      %1215 = vadd.xlane.f32.xlu0 %v1214
      %v1216 = vpop.xlane.xlu0 %1215
      %v1217 = vadd.f32 %v1207, %v671
      %v1218 = vadd.f32 %v1210, %v671
      %v1219 = vadd.f32 %v1213, %v671
      %v1220 = vadd.f32 %v1216, %v671
      %v1225 = vlaneseq
      %v1226 = vshrl.u32 %v1225, 7
      %v1227 = vsub.s32 %v682, %v1226
      %v1228 = vrot.slane %v1217, %v1227
      %v1229 = vlaneseq
      %v1230 = vshrl.u32 %v1229, 7
      %v1231 = vsub.s32 %v687, %v1230
      %v1232 = vrot.slane %v1218, %v1231
      %v1233 = vsel %vm692, %v1232, %v1228
      %v1234 = vlaneseq
      %v1235 = vshrl.u32 %v1234, 7
      %v1236 = vsub.s32 %v682, %v1235
      %v1237 = vrot.slane %v1219, %v1236
      %v1238 = vlaneseq
      %v1239 = vshrl.u32 %v1238, 7
      %v1240 = vsub.s32 %v687, %v1239
      %v1241 = vrot.slane %v1220, %v1240
      %v1242 = vsel %vm692, %v1241, %v1237
      %v1243 = vsel %vm703, %v1242, %v1233
      %v1245 = vsel %vm706, %v1243, -inf
      %1246 = vmax.xlane.f32.xlu0 %v1245
      %v1247 = vpop.xlane.xlu0 %1246
      %v1249 = vlaneseq
      %v1250 = vshrl.u32 %v1249, 7
      %v1251 = vsub.s32 0, %v1250
      %v1252 = vrot.slane %v1247, %v1251
      %v1253 = vlaneseq
      %v1254 = vshrl.u32 %v1253, 7
      %v1255 = vsub.s32 1, %v1254
      %v1256 = vrot.slane %v1247, %v1255
      %v1259 = vsub.f32 %v1217, %v1252
      %v1260 = vsub.f32 %v1218, %v1252
      %v1261 = vsub.f32 %v1219, %v1256
      %v1262 = vsub.f32 %v1220, %v1256
      %v1263 = vmul.f32 %v1259, 1.442695
      %v1264 = vpow.pop %v1263
      %v1265 = vmul.f32 %v1260, 1.442695
      %v1266 = vpow.pop %v1265
      %v1267 = vmul.f32 %v1261, 1.442695
      %v1268 = vpow.pop %v1267
      %v1269 = vmul.f32 %v1262, 1.442695
      %v1270 = vpow.pop %v1269
      %1275 = vset.pattern.permute.xlu0 0
      %1276 = vperm.xlu0 %1275, %v1264
      %v1277 = vpop.permute.xlu0 %1276
      %1278 = vset.pattern.permute.xlu0 0
      %1279 = vperm.xlu0 %1278, %v1266
      %v1280 = vpop.permute.xlu0 %1279
      %1281 = vset.pattern.permute.xlu0 0
      %1282 = vperm.xlu0 %1281, %v1268
      %v1283 = vpop.permute.xlu0 %1282
      %1284 = vset.pattern.permute.xlu0 0
      %1285 = vperm.xlu0 %1284, %v1270
      %v1286 = vpop.permute.xlu0 %1285
      %v1287 = vlaneseq
      %v1288 = vshrl.u32 %v1287, 7
      %v1289 = vsub.s32 %v682, %v1288
      %v1290 = vrot.slane %v1277, %v1289
      %v1291 = vlaneseq
      %v1292 = vshrl.u32 %v1291, 7
      %v1293 = vsub.s32 %v687, %v1292
      %v1294 = vrot.slane %v1280, %v1293
      %v1295 = vsel %vm692, %v1294, %v1290
      %v1296 = vlaneseq
      %v1297 = vshrl.u32 %v1296, 7
      %v1298 = vsub.s32 %v682, %v1297
      %v1299 = vrot.slane %v1283, %v1298
      %v1300 = vlaneseq
      %v1301 = vshrl.u32 %v1300, 7
      %v1302 = vsub.s32 %v687, %v1301
      %v1303 = vrot.slane %v1286, %v1302
      %v1304 = vsel %vm692, %v1303, %v1299
      %v1305 = vsel %vm703, %v1304, %v1295
      %v1307 = vsel %vm706, %v1305, 0.0
      %1308 = vadd.xlane.f32.xlu0 %v1307
      %v1309 = vpop.xlane.xlu0 %1308
      %v1310 = vrcp.pop %v1309
      %v1312 = vlaneseq
      %v1313 = vshrl.u32 %v1312, 7
      %v1314 = vsub.s32 0, %v1313
      %v1315 = vrot.slane %v1310, %v1314
      %v1316 = vlaneseq
      %v1317 = vshrl.u32 %v1316, 7
      %v1318 = vsub.s32 1, %v1317
      %v1319 = vrot.slane %v1310, %v1318
      %v1322 = vmul.f32 %v1264, %v1315
      %v1323 = vmul.f32 %v1266, %v1315
      %v1324 = vmul.f32 %v1268, %v1319
      %v1325 = vmul.f32 %v1270, %v1319
      %1327 = vset.pattern.permute.xlu0 0
      %1328 = vperm.xlu0 %1327, %v1322
      %v1329 = vpop.permute.xlu0 %1328
      %1332 = vset.pattern.permute.xlu0 0
      %1333 = vperm.xlu0 %1332, %v1323
      %v1334 = vpop.permute.xlu0 %1333
      %1337 = vset.pattern.permute.xlu0 0
      %1338 = vperm.xlu0 %1337, %v1324
      %v1339 = vpop.permute.xlu0 %1338
      %1342 = vset.pattern.permute.xlu0 0
      %1343 = vperm.xlu0 %1342, %v1325
      %v1344 = vpop.permute.xlu0 %1343
      %v1346 = vmul.f32 %v521, %v1329
      %v1347 = vmul.f32 %v522, %v1334
      %v1348 = vmul.f32 %v523, %v1339
      %v1349 = vmul.f32 %v524, %v1344
      %v1350 = vsel %vm557, %v1346, 0.0
      %v1351 = vsel %vm557, %v1347, 0.0
      %v1352 = vadd.f32 %v1350, %v1351
      %v1353 = vrot.slane %v1352, 4
      %v1354 = vadd.f32 %v1352, %v1353
      %v1355 = vrot.slane %v1354, 2
      %v1356 = vadd.f32 %v1354, %v1355
      %v1357 = vrot.slane %v1356, 1
      %v1358 = vadd.f32 %v1356, %v1357
      %v1359 = vsel %vm557, %v1348, 0.0
      %v1360 = vsel %vm557, %v1349, 0.0
      %v1361 = vadd.f32 %v1359, %v1360
      %v1362 = vrot.slane %v1361, 4
      %v1363 = vadd.f32 %v1361, %v1362
      %v1364 = vrot.slane %v1363, 2
      %v1365 = vadd.f32 %v1363, %v1364
      %v1366 = vrot.slane %v1365, 1
      %v1367 = vadd.f32 %v1365, %v1366
      %s1368 = scalar_lea.vmem %s497, 1
      %v1369 = vld [vmem:[%s1368] sm:$0x1]
      %v1370 = vld [vmem:[%s9] sm:$0xf]
      %v1371 = vld [vmem:[%s9 + $0x4] sm:$0xf]
      %v1372 = vld [vmem:[%s9 + $0x8] sm:$0xf]
      %v1373 = vld [vmem:[%s9 + $0xc] sm:$0xf]
      %v1374 = vpack.c.bf16 %v1358, %v1358
      %v1375 = vpack.c.bf16 %v1367, %v1367
      %v1376 = vld [vmem:[%s10] sm:$0xf]
      %v1377 = vld [vmem:[%s10 + $0x4] sm:$0xf]
      %v1378 = vld [vmem:[%s10 + $0x8] sm:$0xf]
      %v1379 = vld [vmem:[%s10 + $0xc] sm:$0xf]
      %v1382 = vunpack.c.l.b16 %v1374
      %v1383 = vunpack.c.l.b16 %v1375
      %v1384 = vsel %vm703, %v1383, %v1382
      %v1385 = vpack.c.b16 %v1384, %v1384
      %v1390 = vunpack.c.l.b16 %v1376
      %v1391 = vunpack.c.l.b16 %v1377
      %v1392 = vunpack.c.l.b16 %v1378
      %v1393 = vunpack.c.l.b16 %v1379
      %v1394 = vpack.c.b16 %v1391, %v1390
      %v1395 = vpack.c.b16 %v1393, %v1392
      %v1399 = vsel %vm557, %v1385, 0
      %1401 = vmatprep.subr.bf16.mxu0 0
      %1402 = vmatpush1.bf16.msra.mxu0 0
      %1403 = vmatprep.subr.bf16.mxu0 0
      %1404 = vmatpush1.bf16.msra.mxu0 0
      %1405 = vmatprep.subr.bf16.mxu0 0
      %1406 = vmatpush1.bf16.msra.mxu0 0
      %1407 = vmatprep.subr.bf16.mxu0 0
      %1408 = vmatpush1.bf16.msra.mxu0 0
      %1409 = vmatprep.subr.bf16.mxu0 0
      %1410 = vmatpush1.bf16.msra.mxu0 0
      %1411 = vmatprep.subr.bf16.mxu0 0
      %1412 = vmatpush1.bf16.msra.mxu0 0
      %1413 = vmatprep.subr.bf16.mxu0 0
      %1414 = vmatpush1.bf16.msra.mxu0 %v1395
      %1415 = vmatprep.subr.bf16.mxu0 0
      %1416 = vmatpush1.bf16.msra.mxu0 %v1394
      %1417 = vmatprep.subr.bf16.mxu0 0
      %1418 = vmatpush2.bf16.msra.mxu0 0
      %1419 = vmatprep.subr.bf16.mxu0 0
      %1420 = vmatpush2.bf16.msra.mxu0 0
      %1421 = vmatprep.subr.bf16.mxu0 0
      %1422 = vmatpush2.bf16.msra.mxu0 0
      %1423 = vmatprep.subr.bf16.mxu0 0
      %1424 = vmatpush2.bf16.msra.mxu0 0
      %1425 = vmatprep.subr.bf16.mxu0 0
      %1426 = vmatpush2.bf16.msra.mxu0 0
      %1427 = vmatprep.subr.bf16.mxu0 0
      %1428 = vmatpush2.bf16.msra.mxu0 0
      %1429 = vmatprep.subr.bf16.mxu0 0
      %1430 = vmatpush2.bf16.msra.mxu0 0
      %1431 = vmatprep.subr.bf16.mxu0 0
      %1432 = vmatpush2.bf16.msra.mxu0 0
      %1433 = vmatprep.mubr.bf16.mxu0 0
      %1434 = vmatmul.mubr.bf16.gmra.mxu0 %v1399
      %v1435 = vpop.f32.mrf.mxu0
      %v1436 = vadd.f32 0.0, %v1435
      %v1437 = vpop.f32.mrf.mxu0
      %v1438 = vpop.f32.mrf.mxu0
      %v1439 = vpop.f32.mrf.mxu0
      %1440 = vdwg.mxu0
      %v1445 = vunpack.c.l.b16 %v1370
      %v1446 = vunpack.c.l.b16 %v1371
      %v1447 = vunpack.c.l.b16 %v1372
      %v1448 = vunpack.c.l.b16 %v1373
      %v1449 = vpack.c.b16 %v1446, %v1445
      %v1450 = vpack.c.b16 %v1448, %v1447
      %v1454 = vsel %vm557, %v1369, 0
      %1456 = vmatprep.subr.bf16.mxu0 0
      %1457 = vmatpush1.bf16.msra.mxu0 0
      %1458 = vmatprep.subr.bf16.mxu0 0
      %1459 = vmatpush1.bf16.msra.mxu0 0
      %1460 = vmatprep.subr.bf16.mxu0 0
      %1461 = vmatpush1.bf16.msra.mxu0 0
      %1462 = vmatprep.subr.bf16.mxu0 0
      %1463 = vmatpush1.bf16.msra.mxu0 0
      %1464 = vmatprep.subr.bf16.mxu0 0
      %1465 = vmatpush1.bf16.msra.mxu0 0
      %1466 = vmatprep.subr.bf16.mxu0 0
      %1467 = vmatpush1.bf16.msra.mxu0 0
      %1468 = vmatprep.subr.bf16.mxu0 0
      %1469 = vmatpush1.bf16.msra.mxu0 %v1450
      %1470 = vmatprep.subr.bf16.mxu0 0
      %1471 = vmatpush1.bf16.msra.mxu0 %v1449
      %1472 = vmatprep.subr.bf16.mxu0 0
      %1473 = vmatpush2.bf16.msra.mxu0 0
      %1474 = vmatprep.subr.bf16.mxu0 0
      %1475 = vmatpush2.bf16.msra.mxu0 0
      %1476 = vmatprep.subr.bf16.mxu0 0
      %1477 = vmatpush2.bf16.msra.mxu0 0
      %1478 = vmatprep.subr.bf16.mxu0 0
      %1479 = vmatpush2.bf16.msra.mxu0 0
      %1480 = vmatprep.subr.bf16.mxu0 0
      %1481 = vmatpush2.bf16.msra.mxu0 0
      %1482 = vmatprep.subr.bf16.mxu0 0
      %1483 = vmatpush2.bf16.msra.mxu0 0
      %1484 = vmatprep.subr.bf16.mxu0 0
      %1485 = vmatpush2.bf16.msra.mxu0 0
      %1486 = vmatprep.subr.bf16.mxu0 0
      %1487 = vmatpush2.bf16.msra.mxu0 0
      %1488 = vmatprep.mubr.bf16.mxu0 0
      %1489 = vmatmul.mubr.bf16.gmra.mxu0 %v1454
      %v1490 = vpop.f32.mrf.mxu0
      %v1491 = vadd.f32 %v1436, %v1490
      %v1492 = vpop.f32.mrf.mxu0
      %v1493 = vpop.f32.mrf.mxu0
      %v1494 = vpop.f32.mrf.mxu0
      %1495 = vdwg.mxu0
      %v1496 = vld [vmem:[%s11] sm:$0x1]
      %v1498 = vlaneseq
      %v1499 = vshrl.u32 %v1498, 7
      %v1500 = vsub.s32 0, %v1499
      %v1501 = vrot.slane %v1496, %v1500
      %v1503 = vadd.f32 %v1491, %v1501
      %v1504 = vld [vmem:[%s12] sm:$0xf]
      %v1505 = vld [vmem:[%s12 + $0x4] sm:$0xf]
      %v1506 = vld [vmem:[%s12 + $0x8] sm:$0xf]
      %v1507 = vld [vmem:[%s12 + $0xc] sm:$0xf]
      %v1512 = vunpack.c.l.b16 %v1504
      %v1513 = vunpack.c.l.b16 %v1505
      %v1514 = vunpack.c.l.b16 %v1506
      %v1515 = vunpack.c.l.b16 %v1507
      %v1516 = vpack.c.b16 %v1513, %v1512
      %v1517 = vpack.c.b16 %v1515, %v1514
      %1520 = vmatprep.subr.bf16.mxu0 0
      %1521 = vmatpush1.bf16.msra.mxu0 0
      %1522 = vmatprep.subr.bf16.mxu0 0
      %1523 = vmatpush1.bf16.msra.mxu0 0
      %1524 = vmatprep.subr.bf16.mxu0 0
      %1525 = vmatpush1.bf16.msra.mxu0 0
      %1526 = vmatprep.subr.bf16.mxu0 0
      %1527 = vmatpush1.bf16.msra.mxu0 0
      %1528 = vmatprep.subr.bf16.mxu0 0
      %1529 = vmatpush1.bf16.msra.mxu0 0
      %1530 = vmatprep.subr.bf16.mxu0 0
      %1531 = vmatpush1.bf16.msra.mxu0 0
      %1532 = vmatprep.subr.bf16.mxu0 0
      %1533 = vmatpush1.bf16.msra.mxu0 %v1517
      %1534 = vmatprep.subr.bf16.mxu0 0
      %1535 = vmatpush1.bf16.msra.mxu0 %v1516
      %1536 = vmatprep.subr.bf16.mxu0 0
      %1537 = vmatpush2.bf16.msra.mxu0 0
      %1538 = vmatprep.subr.bf16.mxu0 0
      %1539 = vmatpush2.bf16.msra.mxu0 0
      %1540 = vmatprep.subr.bf16.mxu0 0
      %1541 = vmatpush2.bf16.msra.mxu0 0
      %1542 = vmatprep.subr.bf16.mxu0 0
      %1543 = vmatpush2.bf16.msra.mxu0 0
      %1544 = vmatprep.subr.bf16.mxu0 0
      %1545 = vmatpush2.bf16.msra.mxu0 0
      %1546 = vmatprep.subr.bf16.mxu0 0
      %1547 = vmatpush2.bf16.msra.mxu0 0
      %1548 = vmatprep.subr.bf16.mxu0 0
      %1549 = vmatpush2.bf16.msra.mxu0 0
      %1550 = vmatprep.subr.bf16.mxu0 0
      %1551 = vmatpush2.bf16.msra.mxu0 0
      %1552 = vmatprep.mubr.bf16.mxu0 0
      %1553 = vmatmul.mubr.bf16.gmra.mxu0 %v1118
      %v1554 = vpop.f32.mrf.mxu0
      %v1555 = vadd.f32 0.0, %v1554
      %v1556 = vpop.f32.mrf.mxu0
      %v1557 = vpop.f32.mrf.mxu0
      %v1558 = vpop.f32.mrf.mxu0
      %1559 = vdwg.mxu0
      %v1560 = vadd.f32 %v1503, %v1555
      %v1561 = vld [vmem:[%s13] sm:$0x1]
      %v1563 = vlaneseq
      %v1564 = vshrl.u32 %v1563, 7
      %v1565 = vsub.s32 0, %v1564
      %v1566 = vrot.slane %v1561, %v1565
      %v1568 = vadd.f32 %v1560, %v1566
      %v1569 = vxor.u32 %v1568, 2147483648
      %v1570 = vmul.f32 %v1569, 1.442695
      %v1571 = vpow.pop %v1570
      %v1572 = vadd.f32 %v1571, 1.0
      %v1573 = vrcp.pop %v1572
      %v1574 = vmul.f32 1.0, %v1573
      %v1575 = vtanh.pop %v1568
      %1577 = vrot.lane.b32.xlu0 %v1092, 32
      %v1578 = vpop.permute.xlu0 %1577
      %v1580 = vmul.f32 %v1574, %v1578
      %1582 = vrot.lane.b32.xlu0 %v1575, 64
      %v1583 = vpop.permute.xlu0 %1582
      %v1585 = vmul.f32 %v1574, %v1583
      %1587 = vrot.lane.b32.xlu0 %v1585, 32
      %v1588 = vpop.permute.xlu0 %1587
      %v1590 = vadd.f32 %v1580, %v1588
      %v1591 = vtanh.pop %v1590
      %1593 = vrot.lane.b32.xlu0 %v1591, 64
      %v1594 = vpop.permute.xlu0 %1593
      %v1596 = vmul.f32 %v1574, %v1594
      %1598 = vrot.lane.b32.xlu0 %v1596, 32
      %v1599 = vpop.permute.xlu0 %1598
      %1601 = vst.msk [vmem:[#allocation2] sm:$0x3] %vm1062, %v1599
      %1603 = vrot.lane.b32.xlu0 %v1590, 96
      %v1604 = vpop.permute.xlu0 %1603
      %1606 = vst.msk [vmem:[#allocation3] sm:$0x3] %vm1062, %v1604
      %s1607 = scalar_lea.vmem %s503, 2
      %1608 = vst.msk [vmem:[%s1607] sm:$0x3] %vm1062, %v1599
      %v1609 = vlaneseq
      %v1610 = vshrl.u32 %v1609, 7
      %v1611 = vsub.s32 %v682, %v1610
      %v1612 = vrot.slane %v1329, %v1611
      %v1613 = vlaneseq
      %v1614 = vshrl.u32 %v1613, 7
      %v1615 = vsub.s32 %v687, %v1614
      %v1616 = vrot.slane %v1334, %v1615
      %v1617 = vsel %vm692, %v1616, %v1612
      %v1618 = vlaneseq
      %v1619 = vshrl.u32 %v1618, 7
      %v1620 = vsub.s32 %v682, %v1619
      %v1621 = vrot.slane %v1339, %v1620
      %v1622 = vlaneseq
      %v1623 = vshrl.u32 %v1622, 7
      %v1624 = vsub.s32 %v687, %v1623
      %v1625 = vrot.slane %v1344, %v1624
      %v1626 = vsel %vm692, %v1625, %v1621
      %v1627 = vsel %vm703, %v1626, %v1617
      %s1629 = scalar_lea.vmem %s509, 2
      %1630 = vst.msk [vmem:[%s1629] sm:$0x3] %vm706, %v1627
      %v1631 = vld [vmem:[#allocation2] sm:$0x3]
      %v1632 = vld [vmem:[#allocation3] sm:$0x3]
      %v1633 = vpack.c.bf16 %v1631, %v1631
      %v1634 = vld [vmem:[%s5] sm:$0xf]
      %v1635 = vld [vmem:[%s5 + $0x4] sm:$0xf]
      %v1636 = vld [vmem:[%s5 + $0x8] sm:$0xf]
      %v1637 = vld [vmem:[%s5 + $0xc] sm:$0xf]
      %v1638 = vld [vmem:[%s6] sm:$0x1]
      %v1640 = vlaneseq
      %v1641 = vshrl.u32 %v1640, 7
      %v1642 = vsub.s32 0, %v1641
      %v1643 = vrot.slane %v1638, %v1642
      %v1649 = vunpack.c.l.b16 %v1634
      %v1650 = vunpack.c.l.b16 %v1635
      %v1651 = vunpack.c.l.b16 %v1636
      %v1652 = vunpack.c.l.b16 %v1637
      %v1653 = vpack.c.b16 %v1650, %v1649
      %v1654 = vpack.c.b16 %v1652, %v1651
      %v1658 = vsel %vm557, %v1633, 0
      %1660 = vmatprep.subr.bf16.mxu0 0
      %1661 = vmatpush1.bf16.msra.mxu0 0
      %1662 = vmatprep.subr.bf16.mxu0 0
      %1663 = vmatpush1.bf16.msra.mxu0 0
      %1664 = vmatprep.subr.bf16.mxu0 0
      %1665 = vmatpush1.bf16.msra.mxu0 0
      %1666 = vmatprep.subr.bf16.mxu0 0
      %1667 = vmatpush1.bf16.msra.mxu0 0
      %1668 = vmatprep.subr.bf16.mxu0 0
      %1669 = vmatpush1.bf16.msra.mxu0 0
      %1670 = vmatprep.subr.bf16.mxu0 0
      %1671 = vmatpush1.bf16.msra.mxu0 0
      %1672 = vmatprep.subr.bf16.mxu0 0
      %1673 = vmatpush1.bf16.msra.mxu0 %v1654
      %1674 = vmatprep.subr.bf16.mxu0 0
      %1675 = vmatpush1.bf16.msra.mxu0 %v1653
      %1676 = vmatprep.subr.bf16.mxu0 0
      %1677 = vmatpush2.bf16.msra.mxu0 0
      %1678 = vmatprep.subr.bf16.mxu0 0
      %1679 = vmatpush2.bf16.msra.mxu0 0
      %1680 = vmatprep.subr.bf16.mxu0 0
      %1681 = vmatpush2.bf16.msra.mxu0 0
      %1682 = vmatprep.subr.bf16.mxu0 0
      %1683 = vmatpush2.bf16.msra.mxu0 0
      %1684 = vmatprep.subr.bf16.mxu0 0
      %1685 = vmatpush2.bf16.msra.mxu0 0
      %1686 = vmatprep.subr.bf16.mxu0 0
      %1687 = vmatpush2.bf16.msra.mxu0 0
      %1688 = vmatprep.subr.bf16.mxu0 0
      %1689 = vmatpush2.bf16.msra.mxu0 0
      %1690 = vmatprep.subr.bf16.mxu0 0
      %1691 = vmatpush2.bf16.msra.mxu0 0
      %1692 = vmatprep.mubr.bf16.mxu0 0
      %1693 = vmatmul.mubr.bf16.gmra.mxu0 %v1658
      %v1694 = vpop.f32.mrf.mxu0
      %v1695 = vadd.f32 %v1643, %v1694
      %v1696 = vpop.f32.mrf.mxu0
      %v1697 = vpop.f32.mrf.mxu0
      %v1698 = vpop.f32.mrf.mxu0
      %1699 = vdwg.mxu0
      %v1702 = vunpack.c.l.s4 1966171168
      %v1703 = vunpack.c.0.s8 %v1702
      %v1704 = vlaneseq
      %v1705 = vshrl.u32 %v1704, 7
      %v1706 = vsub.s32 %v1703, %v1705
      %v1707 = vrot.slane %v1695, %v1706
      %v1708 = vcombine.high %v1707, %v1707
      %v1710 = vunpack.c.l.s4 1966171168
      %v1711 = vunpack.c.0.s8 %v1710
      %v1712 = vlaneseq
      %v1713 = vshrl.u32 %v1712, 7
      %v1714 = vsub.s32 %v1711, %v1713
      %v1715 = vrot.slane %v1707, %v1714
      %v1717 = vunpack.c.l.s4 1966171168
      %v1718 = vunpack.c.0.s8 %v1717
      %v1719 = vlaneseq
      %v1720 = vshrl.u32 %v1719, 7
      %v1721 = vsub.s32 %v1718, %v1720
      %v1722 = vrot.slane %v1708, %v1721
      %v1723 = vlaneseq
      %v1724 = vshrl.u32 %v1723, 7
      %v1725 = vsub.s32 0, %v1724
      %v1726 = vrot.slane %v1715, %v1725
      %v1727 = vlaneseq
      %v1728 = vshrl.u32 %v1727, 7
      %v1729 = vsub.s32 0, %v1728
      %v1730 = vrot.slane %v1722, %v1729
      %v1733 = vadd.f32 %v525, %v1726
      %v1734 = vadd.f32 %v526, %v1726
      %v1735 = vadd.f32 %v527, %v1730
      %v1736 = vadd.f32 %v528, %v1730
      %v1737 = vtanh.pop %v1733
      %v1738 = vtanh.pop %v1734
      %v1739 = vtanh.pop %v1735
      %v1740 = vtanh.pop %v1736
      %v1741 = vmul.f32 %v1737, %v646
      %v1742 = vmul.f32 %v1738, %v646
      %v1743 = vmul.f32 %v1739, %v646
      %v1744 = vmul.f32 %v1740, %v646
      %v1745 = vsel %vm557, %v1741, 0.0
      %1746 = vadd.xlane.f32.xlu0 %v1745
      %v1747 = vpop.xlane.xlu0 %1746
      %v1748 = vsel %vm557, %v1742, 0.0
      %1749 = vadd.xlane.f32.xlu0 %v1748
      %v1750 = vpop.xlane.xlu0 %1749
      %v1751 = vsel %vm557, %v1743, 0.0
      %1752 = vadd.xlane.f32.xlu0 %v1751
      %v1753 = vpop.xlane.xlu0 %1752
      %v1754 = vsel %vm557, %v1744, 0.0
      %1755 = vadd.xlane.f32.xlu0 %v1754
      %v1756 = vpop.xlane.xlu0 %1755
      %v1757 = vadd.f32 %v1747, %v671
      %v1758 = vadd.f32 %v1750, %v671
      %v1759 = vadd.f32 %v1753, %v671
      %v1760 = vadd.f32 %v1756, %v671
      %v1765 = vlaneseq
      %v1766 = vshrl.u32 %v1765, 7
      %v1767 = vsub.s32 %v682, %v1766
      %v1768 = vrot.slane %v1757, %v1767
      %v1769 = vlaneseq
      %v1770 = vshrl.u32 %v1769, 7
      %v1771 = vsub.s32 %v687, %v1770
      %v1772 = vrot.slane %v1758, %v1771
      %v1773 = vsel %vm692, %v1772, %v1768
      %v1774 = vlaneseq
      %v1775 = vshrl.u32 %v1774, 7
      %v1776 = vsub.s32 %v682, %v1775
      %v1777 = vrot.slane %v1759, %v1776
      %v1778 = vlaneseq
      %v1779 = vshrl.u32 %v1778, 7
      %v1780 = vsub.s32 %v687, %v1779
      %v1781 = vrot.slane %v1760, %v1780
      %v1782 = vsel %vm692, %v1781, %v1777
      %v1783 = vsel %vm703, %v1782, %v1773
      %v1785 = vsel %vm706, %v1783, -inf
      %1786 = vmax.xlane.f32.xlu0 %v1785
      %v1787 = vpop.xlane.xlu0 %1786
      %v1789 = vlaneseq
      %v1790 = vshrl.u32 %v1789, 7
      %v1791 = vsub.s32 0, %v1790
      %v1792 = vrot.slane %v1787, %v1791
      %v1793 = vlaneseq
      %v1794 = vshrl.u32 %v1793, 7
      %v1795 = vsub.s32 1, %v1794
      %v1796 = vrot.slane %v1787, %v1795
      %v1799 = vsub.f32 %v1757, %v1792
      %v1800 = vsub.f32 %v1758, %v1792
      %v1801 = vsub.f32 %v1759, %v1796
      %v1802 = vsub.f32 %v1760, %v1796
      %v1803 = vmul.f32 %v1799, 1.442695
      %v1804 = vpow.pop %v1803
      %v1805 = vmul.f32 %v1800, 1.442695
      %v1806 = vpow.pop %v1805
      %v1807 = vmul.f32 %v1801, 1.442695
      %v1808 = vpow.pop %v1807
      %v1809 = vmul.f32 %v1802, 1.442695
      %v1810 = vpow.pop %v1809
      %1815 = vset.pattern.permute.xlu0 0
      %1816 = vperm.xlu0 %1815, %v1804
      %v1817 = vpop.permute.xlu0 %1816
      %1818 = vset.pattern.permute.xlu0 0
      %1819 = vperm.xlu0 %1818, %v1806
      %v1820 = vpop.permute.xlu0 %1819
      %1821 = vset.pattern.permute.xlu0 0
      %1822 = vperm.xlu0 %1821, %v1808
      %v1823 = vpop.permute.xlu0 %1822
      %1824 = vset.pattern.permute.xlu0 0
      %1825 = vperm.xlu0 %1824, %v1810
      %v1826 = vpop.permute.xlu0 %1825
      %v1827 = vlaneseq
      %v1828 = vshrl.u32 %v1827, 7
      %v1829 = vsub.s32 %v682, %v1828
      %v1830 = vrot.slane %v1817, %v1829
      %v1831 = vlaneseq
      %v1832 = vshrl.u32 %v1831, 7
      %v1833 = vsub.s32 %v687, %v1832
      %v1834 = vrot.slane %v1820, %v1833
      %v1835 = vsel %vm692, %v1834, %v1830
      %v1836 = vlaneseq
      %v1837 = vshrl.u32 %v1836, 7
      %v1838 = vsub.s32 %v682, %v1837
      %v1839 = vrot.slane %v1823, %v1838
      %v1840 = vlaneseq
      %v1841 = vshrl.u32 %v1840, 7
      %v1842 = vsub.s32 %v687, %v1841
      %v1843 = vrot.slane %v1826, %v1842
      %v1844 = vsel %vm692, %v1843, %v1839
      %v1845 = vsel %vm703, %v1844, %v1835
      %v1847 = vsel %vm706, %v1845, 0.0
      %1848 = vadd.xlane.f32.xlu0 %v1847
      %v1849 = vpop.xlane.xlu0 %1848
      %v1850 = vrcp.pop %v1849
      %v1852 = vlaneseq
      %v1853 = vshrl.u32 %v1852, 7
      %v1854 = vsub.s32 0, %v1853
      %v1855 = vrot.slane %v1850, %v1854
      %v1856 = vlaneseq
      %v1857 = vshrl.u32 %v1856, 7
      %v1858 = vsub.s32 1, %v1857
      %v1859 = vrot.slane %v1850, %v1858
      %v1862 = vmul.f32 %v1804, %v1855
      %v1863 = vmul.f32 %v1806, %v1855
      %v1864 = vmul.f32 %v1808, %v1859
      %v1865 = vmul.f32 %v1810, %v1859
      %1867 = vset.pattern.permute.xlu0 0
      %1868 = vperm.xlu0 %1867, %v1862
      %v1869 = vpop.permute.xlu0 %1868
      %1872 = vset.pattern.permute.xlu0 0
      %1873 = vperm.xlu0 %1872, %v1863
      %v1874 = vpop.permute.xlu0 %1873
      %1877 = vset.pattern.permute.xlu0 0
      %1878 = vperm.xlu0 %1877, %v1864
      %v1879 = vpop.permute.xlu0 %1878
      %1882 = vset.pattern.permute.xlu0 0
      %1883 = vperm.xlu0 %1882, %v1865
      %v1884 = vpop.permute.xlu0 %1883
      %v1886 = vmul.f32 %v521, %v1869
      %v1887 = vmul.f32 %v522, %v1874
      %v1888 = vmul.f32 %v523, %v1879
      %v1889 = vmul.f32 %v524, %v1884
      %v1890 = vsel %vm557, %v1886, 0.0
      %v1891 = vsel %vm557, %v1887, 0.0
      %v1892 = vadd.f32 %v1890, %v1891
      %v1893 = vrot.slane %v1892, 4
      %v1894 = vadd.f32 %v1892, %v1893
      %v1895 = vrot.slane %v1894, 2
      %v1896 = vadd.f32 %v1894, %v1895
      %v1897 = vrot.slane %v1896, 1
      %v1898 = vadd.f32 %v1896, %v1897
      %v1899 = vsel %vm557, %v1888, 0.0
      %v1900 = vsel %vm557, %v1889, 0.0
      %v1901 = vadd.f32 %v1899, %v1900
      %v1902 = vrot.slane %v1901, 4
      %v1903 = vadd.f32 %v1901, %v1902
      %v1904 = vrot.slane %v1903, 2
      %v1905 = vadd.f32 %v1903, %v1904
      %v1906 = vrot.slane %v1905, 1
      %v1907 = vadd.f32 %v1905, %v1906
      %s1908 = scalar_lea.vmem %s497, 2
      %v1909 = vld [vmem:[%s1908] sm:$0x1]
      %v1910 = vld [vmem:[%s9] sm:$0xf]
      %v1911 = vld [vmem:[%s9 + $0x4] sm:$0xf]
      %v1912 = vld [vmem:[%s9 + $0x8] sm:$0xf]
      %v1913 = vld [vmem:[%s9 + $0xc] sm:$0xf]
      %v1914 = vpack.c.bf16 %v1898, %v1898
      %v1915 = vpack.c.bf16 %v1907, %v1907
      %v1916 = vld [vmem:[%s10] sm:$0xf]
      %v1917 = vld [vmem:[%s10 + $0x4] sm:$0xf]
      %v1918 = vld [vmem:[%s10 + $0x8] sm:$0xf]
      %v1919 = vld [vmem:[%s10 + $0xc] sm:$0xf]
      %v1922 = vunpack.c.l.b16 %v1914
      %v1923 = vunpack.c.l.b16 %v1915
      %v1924 = vsel %vm703, %v1923, %v1922
      %v1925 = vpack.c.b16 %v1924, %v1924
      %v1930 = vunpack.c.l.b16 %v1916
      %v1931 = vunpack.c.l.b16 %v1917
      %v1932 = vunpack.c.l.b16 %v1918
      %v1933 = vunpack.c.l.b16 %v1919
      %v1934 = vpack.c.b16 %v1931, %v1930
      %v1935 = vpack.c.b16 %v1933, %v1932
      %v1939 = vsel %vm557, %v1925, 0
      %1941 = vmatprep.subr.bf16.mxu0 0
      %1942 = vmatpush1.bf16.msra.mxu0 0
      %1943 = vmatprep.subr.bf16.mxu0 0
      %1944 = vmatpush1.bf16.msra.mxu0 0
      %1945 = vmatprep.subr.bf16.mxu0 0
      %1946 = vmatpush1.bf16.msra.mxu0 0
      %1947 = vmatprep.subr.bf16.mxu0 0
      %1948 = vmatpush1.bf16.msra.mxu0 0
      %1949 = vmatprep.subr.bf16.mxu0 0
      %1950 = vmatpush1.bf16.msra.mxu0 0
      %1951 = vmatprep.subr.bf16.mxu0 0
      %1952 = vmatpush1.bf16.msra.mxu0 0
      %1953 = vmatprep.subr.bf16.mxu0 0
      %1954 = vmatpush1.bf16.msra.mxu0 %v1935
      %1955 = vmatprep.subr.bf16.mxu0 0
      %1956 = vmatpush1.bf16.msra.mxu0 %v1934
      %1957 = vmatprep.subr.bf16.mxu0 0
      %1958 = vmatpush2.bf16.msra.mxu0 0
      %1959 = vmatprep.subr.bf16.mxu0 0
      %1960 = vmatpush2.bf16.msra.mxu0 0
      %1961 = vmatprep.subr.bf16.mxu0 0
      %1962 = vmatpush2.bf16.msra.mxu0 0
      %1963 = vmatprep.subr.bf16.mxu0 0
      %1964 = vmatpush2.bf16.msra.mxu0 0
      %1965 = vmatprep.subr.bf16.mxu0 0
      %1966 = vmatpush2.bf16.msra.mxu0 0
      %1967 = vmatprep.subr.bf16.mxu0 0
      %1968 = vmatpush2.bf16.msra.mxu0 0
      %1969 = vmatprep.subr.bf16.mxu0 0
      %1970 = vmatpush2.bf16.msra.mxu0 0
      %1971 = vmatprep.subr.bf16.mxu0 0
      %1972 = vmatpush2.bf16.msra.mxu0 0
      %1973 = vmatprep.mubr.bf16.mxu0 0
      %1974 = vmatmul.mubr.bf16.gmra.mxu0 %v1939
      %v1975 = vpop.f32.mrf.mxu0
      %v1976 = vadd.f32 0.0, %v1975
      %v1977 = vpop.f32.mrf.mxu0
      %v1978 = vpop.f32.mrf.mxu0
      %v1979 = vpop.f32.mrf.mxu0
      %1980 = vdwg.mxu0
      %v1985 = vunpack.c.l.b16 %v1910
      %v1986 = vunpack.c.l.b16 %v1911
      %v1987 = vunpack.c.l.b16 %v1912
      %v1988 = vunpack.c.l.b16 %v1913
      %v1989 = vpack.c.b16 %v1986, %v1985
      %v1990 = vpack.c.b16 %v1988, %v1987
      %v1994 = vsel %vm557, %v1909, 0
      %1996 = vmatprep.subr.bf16.mxu0 0
      %1997 = vmatpush1.bf16.msra.mxu0 0
      %1998 = vmatprep.subr.bf16.mxu0 0
      %1999 = vmatpush1.bf16.msra.mxu0 0
      %2000 = vmatprep.subr.bf16.mxu0 0
      %2001 = vmatpush1.bf16.msra.mxu0 0
      %2002 = vmatprep.subr.bf16.mxu0 0
      %2003 = vmatpush1.bf16.msra.mxu0 0
      %2004 = vmatprep.subr.bf16.mxu0 0
      %2005 = vmatpush1.bf16.msra.mxu0 0
      %2006 = vmatprep.subr.bf16.mxu0 0
      %2007 = vmatpush1.bf16.msra.mxu0 0
      %2008 = vmatprep.subr.bf16.mxu0 0
      %2009 = vmatpush1.bf16.msra.mxu0 %v1990
      %2010 = vmatprep.subr.bf16.mxu0 0
      %2011 = vmatpush1.bf16.msra.mxu0 %v1989
      %2012 = vmatprep.subr.bf16.mxu0 0
      %2013 = vmatpush2.bf16.msra.mxu0 0
      %2014 = vmatprep.subr.bf16.mxu0 0
      %2015 = vmatpush2.bf16.msra.mxu0 0
      %2016 = vmatprep.subr.bf16.mxu0 0
      %2017 = vmatpush2.bf16.msra.mxu0 0
      %2018 = vmatprep.subr.bf16.mxu0 0
      %2019 = vmatpush2.bf16.msra.mxu0 0
      %2020 = vmatprep.subr.bf16.mxu0 0
      %2021 = vmatpush2.bf16.msra.mxu0 0
      %2022 = vmatprep.subr.bf16.mxu0 0
      %2023 = vmatpush2.bf16.msra.mxu0 0
      %2024 = vmatprep.subr.bf16.mxu0 0
      %2025 = vmatpush2.bf16.msra.mxu0 0
      %2026 = vmatprep.subr.bf16.mxu0 0
      %2027 = vmatpush2.bf16.msra.mxu0 0
      %2028 = vmatprep.mubr.bf16.mxu0 0
      %2029 = vmatmul.mubr.bf16.gmra.mxu0 %v1994
      %v2030 = vpop.f32.mrf.mxu0
      %v2031 = vadd.f32 %v1976, %v2030
      %v2032 = vpop.f32.mrf.mxu0
      %v2033 = vpop.f32.mrf.mxu0
      %v2034 = vpop.f32.mrf.mxu0
      %2035 = vdwg.mxu0
      %v2036 = vld [vmem:[%s11] sm:$0x1]
      %v2038 = vlaneseq
      %v2039 = vshrl.u32 %v2038, 7
      %v2040 = vsub.s32 0, %v2039
      %v2041 = vrot.slane %v2036, %v2040
      %v2043 = vadd.f32 %v2031, %v2041
      %v2044 = vld [vmem:[%s12] sm:$0xf]
      %v2045 = vld [vmem:[%s12 + $0x4] sm:$0xf]
      %v2046 = vld [vmem:[%s12 + $0x8] sm:$0xf]
      %v2047 = vld [vmem:[%s12 + $0xc] sm:$0xf]
      %v2052 = vunpack.c.l.b16 %v2044
      %v2053 = vunpack.c.l.b16 %v2045
      %v2054 = vunpack.c.l.b16 %v2046
      %v2055 = vunpack.c.l.b16 %v2047
      %v2056 = vpack.c.b16 %v2053, %v2052
      %v2057 = vpack.c.b16 %v2055, %v2054
      %2060 = vmatprep.subr.bf16.mxu0 0
      %2061 = vmatpush1.bf16.msra.mxu0 0
      %2062 = vmatprep.subr.bf16.mxu0 0
      %2063 = vmatpush1.bf16.msra.mxu0 0
      %2064 = vmatprep.subr.bf16.mxu0 0
      %2065 = vmatpush1.bf16.msra.mxu0 0
      %2066 = vmatprep.subr.bf16.mxu0 0
      %2067 = vmatpush1.bf16.msra.mxu0 0
      %2068 = vmatprep.subr.bf16.mxu0 0
      %2069 = vmatpush1.bf16.msra.mxu0 0
      %2070 = vmatprep.subr.bf16.mxu0 0
      %2071 = vmatpush1.bf16.msra.mxu0 0
      %2072 = vmatprep.subr.bf16.mxu0 0
      %2073 = vmatpush1.bf16.msra.mxu0 %v2057
      %2074 = vmatprep.subr.bf16.mxu0 0
      %2075 = vmatpush1.bf16.msra.mxu0 %v2056
      %2076 = vmatprep.subr.bf16.mxu0 0
      %2077 = vmatpush2.bf16.msra.mxu0 0
      %2078 = vmatprep.subr.bf16.mxu0 0
      %2079 = vmatpush2.bf16.msra.mxu0 0
      %2080 = vmatprep.subr.bf16.mxu0 0
      %2081 = vmatpush2.bf16.msra.mxu0 0
      %2082 = vmatprep.subr.bf16.mxu0 0
      %2083 = vmatpush2.bf16.msra.mxu0 0
      %2084 = vmatprep.subr.bf16.mxu0 0
      %2085 = vmatpush2.bf16.msra.mxu0 0
      %2086 = vmatprep.subr.bf16.mxu0 0
      %2087 = vmatpush2.bf16.msra.mxu0 0
      %2088 = vmatprep.subr.bf16.mxu0 0
      %2089 = vmatpush2.bf16.msra.mxu0 0
      %2090 = vmatprep.subr.bf16.mxu0 0
      %2091 = vmatpush2.bf16.msra.mxu0 0
      %2092 = vmatprep.mubr.bf16.mxu0 0
      %2093 = vmatmul.mubr.bf16.gmra.mxu0 %v1658
      %v2094 = vpop.f32.mrf.mxu0
      %v2095 = vadd.f32 0.0, %v2094
      %v2096 = vpop.f32.mrf.mxu0
      %v2097 = vpop.f32.mrf.mxu0
      %v2098 = vpop.f32.mrf.mxu0
      %2099 = vdwg.mxu0
      %v2100 = vadd.f32 %v2043, %v2095
      %v2101 = vld [vmem:[%s13] sm:$0x1]
      %v2103 = vlaneseq
      %v2104 = vshrl.u32 %v2103, 7
      %v2105 = vsub.s32 0, %v2104
      %v2106 = vrot.slane %v2101, %v2105
      %v2108 = vadd.f32 %v2100, %v2106
      %v2109 = vxor.u32 %v2108, 2147483648
      %v2110 = vmul.f32 %v2109, 1.442695
      %v2111 = vpow.pop %v2110
      %v2112 = vadd.f32 %v2111, 1.0
      %v2113 = vrcp.pop %v2112
      %v2114 = vmul.f32 1.0, %v2113
      %v2115 = vtanh.pop %v2108
      %2117 = vrot.lane.b32.xlu0 %v1632, 32
      %v2118 = vpop.permute.xlu0 %2117
      %v2120 = vmul.f32 %v2114, %v2118
      %2122 = vrot.lane.b32.xlu0 %v2115, 64
      %v2123 = vpop.permute.xlu0 %2122
      %v2125 = vmul.f32 %v2114, %v2123
      %2127 = vrot.lane.b32.xlu0 %v2125, 32
      %v2128 = vpop.permute.xlu0 %2127
      %v2130 = vadd.f32 %v2120, %v2128
      %v2131 = vtanh.pop %v2130
      %2133 = vrot.lane.b32.xlu0 %v2131, 64
      %v2134 = vpop.permute.xlu0 %2133
      %v2136 = vmul.f32 %v2114, %v2134
      %2138 = vrot.lane.b32.xlu0 %v2136, 32
      %v2139 = vpop.permute.xlu0 %2138
      %2141 = vst.msk [vmem:[#allocation2] sm:$0x3] %vm1062, %v2139
      %2143 = vrot.lane.b32.xlu0 %v2130, 96
      %v2144 = vpop.permute.xlu0 %2143
      %2146 = vst.msk [vmem:[#allocation3] sm:$0x3] %vm1062, %v2144
      %s2147 = scalar_lea.vmem %s503, 4
      %2148 = vst.msk [vmem:[%s2147] sm:$0x3] %vm1062, %v2139
      %v2149 = vlaneseq
      %v2150 = vshrl.u32 %v2149, 7
      %v2151 = vsub.s32 %v682, %v2150
      %v2152 = vrot.slane %v1869, %v2151
      %v2153 = vlaneseq
      %v2154 = vshrl.u32 %v2153, 7
      %v2155 = vsub.s32 %v687, %v2154
      %v2156 = vrot.slane %v1874, %v2155
      %v2157 = vsel %vm692, %v2156, %v2152
      %v2158 = vlaneseq
      %v2159 = vshrl.u32 %v2158, 7
      %v2160 = vsub.s32 %v682, %v2159
      %v2161 = vrot.slane %v1879, %v2160
      %v2162 = vlaneseq
      %v2163 = vshrl.u32 %v2162, 7
      %v2164 = vsub.s32 %v687, %v2163
      %v2165 = vrot.slane %v1884, %v2164
      %v2166 = vsel %vm692, %v2165, %v2161
      %v2167 = vsel %vm703, %v2166, %v2157
      %s2169 = scalar_lea.vmem %s509, 4
      %2170 = vst.msk [vmem:[%s2169] sm:$0x3] %vm706, %v2167
      %v2171 = vld [vmem:[#allocation2] sm:$0x3]
      %v2172 = vld [vmem:[#allocation3] sm:$0x3]
      %v2173 = vpack.c.bf16 %v2171, %v2171
      %v2174 = vld [vmem:[%s5] sm:$0xf]
      %v2175 = vld [vmem:[%s5 + $0x4] sm:$0xf]
      %v2176 = vld [vmem:[%s5 + $0x8] sm:$0xf]
      %v2177 = vld [vmem:[%s5 + $0xc] sm:$0xf]
      %v2178 = vld [vmem:[%s6] sm:$0x1]
      %v2180 = vlaneseq
      %v2181 = vshrl.u32 %v2180, 7
      %v2182 = vsub.s32 0, %v2181
      %v2183 = vrot.slane %v2178, %v2182
      %v2189 = vunpack.c.l.b16 %v2174
      %v2190 = vunpack.c.l.b16 %v2175
      %v2191 = vunpack.c.l.b16 %v2176
      %v2192 = vunpack.c.l.b16 %v2177
      %v2193 = vpack.c.b16 %v2190, %v2189
      %v2194 = vpack.c.b16 %v2192, %v2191
      %v2198 = vsel %vm557, %v2173, 0
      %2200 = vmatprep.subr.bf16.mxu0 0
      %2201 = vmatpush1.bf16.msra.mxu0 0
      %2202 = vmatprep.subr.bf16.mxu0 0
      %2203 = vmatpush1.bf16.msra.mxu0 0
      %2204 = vmatprep.subr.bf16.mxu0 0
      %2205 = vmatpush1.bf16.msra.mxu0 0
      %2206 = vmatprep.subr.bf16.mxu0 0
      %2207 = vmatpush1.bf16.msra.mxu0 0
      %2208 = vmatprep.subr.bf16.mxu0 0
      %2209 = vmatpush1.bf16.msra.mxu0 0
      %2210 = vmatprep.subr.bf16.mxu0 0
      %2211 = vmatpush1.bf16.msra.mxu0 0
      %2212 = vmatprep.subr.bf16.mxu0 0
      %2213 = vmatpush1.bf16.msra.mxu0 %v2194
      %2214 = vmatprep.subr.bf16.mxu0 0
      %2215 = vmatpush1.bf16.msra.mxu0 %v2193
      %2216 = vmatprep.subr.bf16.mxu0 0
      %2217 = vmatpush2.bf16.msra.mxu0 0
      %2218 = vmatprep.subr.bf16.mxu0 0
      %2219 = vmatpush2.bf16.msra.mxu0 0
      %2220 = vmatprep.subr.bf16.mxu0 0
      %2221 = vmatpush2.bf16.msra.mxu0 0
      %2222 = vmatprep.subr.bf16.mxu0 0
      %2223 = vmatpush2.bf16.msra.mxu0 0
      %2224 = vmatprep.subr.bf16.mxu0 0
      %2225 = vmatpush2.bf16.msra.mxu0 0
      %2226 = vmatprep.subr.bf16.mxu0 0
      %2227 = vmatpush2.bf16.msra.mxu0 0
      %2228 = vmatprep.subr.bf16.mxu0 0
      %2229 = vmatpush2.bf16.msra.mxu0 0
      %2230 = vmatprep.subr.bf16.mxu0 0
      %2231 = vmatpush2.bf16.msra.mxu0 0
      %2232 = vmatprep.mubr.bf16.mxu0 0
      %2233 = vmatmul.mubr.bf16.gmra.mxu0 %v2198
      %v2234 = vpop.f32.mrf.mxu0
      %v2235 = vadd.f32 %v2183, %v2234
      %v2236 = vpop.f32.mrf.mxu0
      %v2237 = vpop.f32.mrf.mxu0
      %v2238 = vpop.f32.mrf.mxu0
      %2239 = vdwg.mxu0
      %v2242 = vunpack.c.l.s4 1966171168
      %v2243 = vunpack.c.0.s8 %v2242
      %v2244 = vlaneseq
      %v2245 = vshrl.u32 %v2244, 7
      %v2246 = vsub.s32 %v2243, %v2245
      %v2247 = vrot.slane %v2235, %v2246
      %v2248 = vcombine.high %v2247, %v2247
      %v2250 = vunpack.c.l.s4 1966171168
      %v2251 = vunpack.c.0.s8 %v2250
      %v2252 = vlaneseq
      %v2253 = vshrl.u32 %v2252, 7
      %v2254 = vsub.s32 %v2251, %v2253
      %v2255 = vrot.slane %v2247, %v2254
      %v2257 = vunpack.c.l.s4 1966171168
      %v2258 = vunpack.c.0.s8 %v2257
      %v2259 = vlaneseq
      %v2260 = vshrl.u32 %v2259, 7
      %v2261 = vsub.s32 %v2258, %v2260
      %v2262 = vrot.slane %v2248, %v2261
      %v2263 = vlaneseq
      %v2264 = vshrl.u32 %v2263, 7
      %v2265 = vsub.s32 0, %v2264
      %v2266 = vrot.slane %v2255, %v2265
      %v2267 = vlaneseq
      %v2268 = vshrl.u32 %v2267, 7
      %v2269 = vsub.s32 0, %v2268
      %v2270 = vrot.slane %v2262, %v2269
      %v2273 = vadd.f32 %v525, %v2266
      %v2274 = vadd.f32 %v526, %v2266
      %v2275 = vadd.f32 %v527, %v2270
      %v2276 = vadd.f32 %v528, %v2270
      %v2277 = vtanh.pop %v2273
      %v2278 = vtanh.pop %v2274
      %v2279 = vtanh.pop %v2275
      %v2280 = vtanh.pop %v2276
      %v2281 = vmul.f32 %v2277, %v646
      %v2282 = vmul.f32 %v2278, %v646
      %v2283 = vmul.f32 %v2279, %v646
      %v2284 = vmul.f32 %v2280, %v646
      %v2285 = vsel %vm557, %v2281, 0.0
      %2286 = vadd.xlane.f32.xlu0 %v2285
      %v2287 = vpop.xlane.xlu0 %2286
      %v2288 = vsel %vm557, %v2282, 0.0
      %2289 = vadd.xlane.f32.xlu0 %v2288
      %v2290 = vpop.xlane.xlu0 %2289
      %v2291 = vsel %vm557, %v2283, 0.0
      %2292 = vadd.xlane.f32.xlu0 %v2291
      %v2293 = vpop.xlane.xlu0 %2292
      %v2294 = vsel %vm557, %v2284, 0.0
      %2295 = vadd.xlane.f32.xlu0 %v2294
      %v2296 = vpop.xlane.xlu0 %2295
      %v2297 = vadd.f32 %v2287, %v671
      %v2298 = vadd.f32 %v2290, %v671
      %v2299 = vadd.f32 %v2293, %v671
      %v2300 = vadd.f32 %v2296, %v671
      %v2305 = vlaneseq
      %v2306 = vshrl.u32 %v2305, 7
      %v2307 = vsub.s32 %v682, %v2306
      %v2308 = vrot.slane %v2297, %v2307
      %v2309 = vlaneseq
      %v2310 = vshrl.u32 %v2309, 7
      %v2311 = vsub.s32 %v687, %v2310
      %v2312 = vrot.slane %v2298, %v2311
      %v2313 = vsel %vm692, %v2312, %v2308
      %v2314 = vlaneseq
      %v2315 = vshrl.u32 %v2314, 7
      %v2316 = vsub.s32 %v682, %v2315
      %v2317 = vrot.slane %v2299, %v2316
      %v2318 = vlaneseq
      %v2319 = vshrl.u32 %v2318, 7
      %v2320 = vsub.s32 %v687, %v2319
      %v2321 = vrot.slane %v2300, %v2320
      %v2322 = vsel %vm692, %v2321, %v2317
      %v2323 = vsel %vm703, %v2322, %v2313
      %v2325 = vsel %vm706, %v2323, -inf
      %2326 = vmax.xlane.f32.xlu0 %v2325
      %v2327 = vpop.xlane.xlu0 %2326
      %v2329 = vlaneseq
      %v2330 = vshrl.u32 %v2329, 7
      %v2331 = vsub.s32 0, %v2330
      %v2332 = vrot.slane %v2327, %v2331
      %v2333 = vlaneseq
      %v2334 = vshrl.u32 %v2333, 7
      %v2335 = vsub.s32 1, %v2334
      %v2336 = vrot.slane %v2327, %v2335
      %v2339 = vsub.f32 %v2297, %v2332
      %v2340 = vsub.f32 %v2298, %v2332
      %v2341 = vsub.f32 %v2299, %v2336
      %v2342 = vsub.f32 %v2300, %v2336
      %v2343 = vmul.f32 %v2339, 1.442695
      %v2344 = vpow.pop %v2343
      %v2345 = vmul.f32 %v2340, 1.442695
      %v2346 = vpow.pop %v2345
      %v2347 = vmul.f32 %v2341, 1.442695
      %v2348 = vpow.pop %v2347
      %v2349 = vmul.f32 %v2342, 1.442695
      %v2350 = vpow.pop %v2349
      %2355 = vset.pattern.permute.xlu0 0
      %2356 = vperm.xlu0 %2355, %v2344
      %v2357 = vpop.permute.xlu0 %2356
      %2358 = vset.pattern.permute.xlu0 0
      %2359 = vperm.xlu0 %2358, %v2346
      %v2360 = vpop.permute.xlu0 %2359
      %2361 = vset.pattern.permute.xlu0 0
      %2362 = vperm.xlu0 %2361, %v2348
      %v2363 = vpop.permute.xlu0 %2362
      %2364 = vset.pattern.permute.xlu0 0
      %2365 = vperm.xlu0 %2364, %v2350
      %v2366 = vpop.permute.xlu0 %2365
      %v2367 = vlaneseq
      %v2368 = vshrl.u32 %v2367, 7
      %v2369 = vsub.s32 %v682, %v2368
      %v2370 = vrot.slane %v2357, %v2369
      %v2371 = vlaneseq
      %v2372 = vshrl.u32 %v2371, 7
      %v2373 = vsub.s32 %v687, %v2372
      %v2374 = vrot.slane %v2360, %v2373
      %v2375 = vsel %vm692, %v2374, %v2370
      %v2376 = vlaneseq
      %v2377 = vshrl.u32 %v2376, 7
      %v2378 = vsub.s32 %v682, %v2377
      %v2379 = vrot.slane %v2363, %v2378
      %v2380 = vlaneseq
      %v2381 = vshrl.u32 %v2380, 7
      %v2382 = vsub.s32 %v687, %v2381
      %v2383 = vrot.slane %v2366, %v2382
      %v2384 = vsel %vm692, %v2383, %v2379
      %v2385 = vsel %vm703, %v2384, %v2375
      %v2387 = vsel %vm706, %v2385, 0.0
      %2388 = vadd.xlane.f32.xlu0 %v2387
      %v2389 = vpop.xlane.xlu0 %2388
      %v2390 = vrcp.pop %v2389
      %v2392 = vlaneseq
      %v2393 = vshrl.u32 %v2392, 7
      %v2394 = vsub.s32 0, %v2393
      %v2395 = vrot.slane %v2390, %v2394
      %v2396 = vlaneseq
      %v2397 = vshrl.u32 %v2396, 7
      %v2398 = vsub.s32 1, %v2397
      %v2399 = vrot.slane %v2390, %v2398
      %v2402 = vmul.f32 %v2344, %v2395
      %v2403 = vmul.f32 %v2346, %v2395
      %v2404 = vmul.f32 %v2348, %v2399
      %v2405 = vmul.f32 %v2350, %v2399
      %2407 = vset.pattern.permute.xlu0 0
      %2408 = vperm.xlu0 %2407, %v2402
      %v2409 = vpop.permute.xlu0 %2408
      %2412 = vset.pattern.permute.xlu0 0
      %2413 = vperm.xlu0 %2412, %v2403
      %v2414 = vpop.permute.xlu0 %2413
      %2417 = vset.pattern.permute.xlu0 0
      %2418 = vperm.xlu0 %2417, %v2404
      %v2419 = vpop.permute.xlu0 %2418
      %2422 = vset.pattern.permute.xlu0 0
      %2423 = vperm.xlu0 %2422, %v2405
      %v2424 = vpop.permute.xlu0 %2423
      %v2426 = vmul.f32 %v521, %v2409
      %v2427 = vmul.f32 %v522, %v2414
      %v2428 = vmul.f32 %v523, %v2419
      %v2429 = vmul.f32 %v524, %v2424
      %v2430 = vsel %vm557, %v2426, 0.0
      %v2431 = vsel %vm557, %v2427, 0.0
      %v2432 = vadd.f32 %v2430, %v2431
      %v2433 = vrot.slane %v2432, 4
      %v2434 = vadd.f32 %v2432, %v2433
      %v2435 = vrot.slane %v2434, 2
      %v2436 = vadd.f32 %v2434, %v2435
      %v2437 = vrot.slane %v2436, 1
      %v2438 = vadd.f32 %v2436, %v2437
      %v2439 = vsel %vm557, %v2428, 0.0
      %v2440 = vsel %vm557, %v2429, 0.0
      %v2441 = vadd.f32 %v2439, %v2440
      %v2442 = vrot.slane %v2441, 4
      %v2443 = vadd.f32 %v2441, %v2442
      %v2444 = vrot.slane %v2443, 2
      %v2445 = vadd.f32 %v2443, %v2444
      %v2446 = vrot.slane %v2445, 1
      %v2447 = vadd.f32 %v2445, %v2446
      %s2448 = scalar_lea.vmem %s497, 3
      %v2449 = vld [vmem:[%s2448] sm:$0x1]
      %v2450 = vld [vmem:[%s9] sm:$0xf]
      %v2451 = vld [vmem:[%s9 + $0x4] sm:$0xf]
      %v2452 = vld [vmem:[%s9 + $0x8] sm:$0xf]
      %v2453 = vld [vmem:[%s9 + $0xc] sm:$0xf]
      %v2454 = vpack.c.bf16 %v2438, %v2438
      %v2455 = vpack.c.bf16 %v2447, %v2447
      %v2456 = vld [vmem:[%s10] sm:$0xf]
      %v2457 = vld [vmem:[%s10 + $0x4] sm:$0xf]
      %v2458 = vld [vmem:[%s10 + $0x8] sm:$0xf]
      %v2459 = vld [vmem:[%s10 + $0xc] sm:$0xf]
      %v2462 = vunpack.c.l.b16 %v2454
      %v2463 = vunpack.c.l.b16 %v2455
      %v2464 = vsel %vm703, %v2463, %v2462
      %v2465 = vpack.c.b16 %v2464, %v2464
      %v2470 = vunpack.c.l.b16 %v2456
      %v2471 = vunpack.c.l.b16 %v2457
      %v2472 = vunpack.c.l.b16 %v2458
      %v2473 = vunpack.c.l.b16 %v2459
      %v2474 = vpack.c.b16 %v2471, %v2470
      %v2475 = vpack.c.b16 %v2473, %v2472
      %v2479 = vsel %vm557, %v2465, 0
      %2481 = vmatprep.subr.bf16.mxu0 0
      %2482 = vmatpush1.bf16.msra.mxu0 0
      %2483 = vmatprep.subr.bf16.mxu0 0
      %2484 = vmatpush1.bf16.msra.mxu0 0
      %2485 = vmatprep.subr.bf16.mxu0 0
      %2486 = vmatpush1.bf16.msra.mxu0 0
      %2487 = vmatprep.subr.bf16.mxu0 0
      %2488 = vmatpush1.bf16.msra.mxu0 0
      %2489 = vmatprep.subr.bf16.mxu0 0
      %2490 = vmatpush1.bf16.msra.mxu0 0
      %2491 = vmatprep.subr.bf16.mxu0 0
      %2492 = vmatpush1.bf16.msra.mxu0 0
      %2493 = vmatprep.subr.bf16.mxu0 0
      %2494 = vmatpush1.bf16.msra.mxu0 %v2475
      %2495 = vmatprep.subr.bf16.mxu0 0
      %2496 = vmatpush1.bf16.msra.mxu0 %v2474
      %2497 = vmatprep.subr.bf16.mxu0 0
      %2498 = vmatpush2.bf16.msra.mxu0 0
      %2499 = vmatprep.subr.bf16.mxu0 0
      %2500 = vmatpush2.bf16.msra.mxu0 0
      %2501 = vmatprep.subr.bf16.mxu0 0
      %2502 = vmatpush2.bf16.msra.mxu0 0
      %2503 = vmatprep.subr.bf16.mxu0 0
      %2504 = vmatpush2.bf16.msra.mxu0 0
      %2505 = vmatprep.subr.bf16.mxu0 0
      %2506 = vmatpush2.bf16.msra.mxu0 0
      %2507 = vmatprep.subr.bf16.mxu0 0
      %2508 = vmatpush2.bf16.msra.mxu0 0
      %2509 = vmatprep.subr.bf16.mxu0 0
      %2510 = vmatpush2.bf16.msra.mxu0 0
      %2511 = vmatprep.subr.bf16.mxu0 0
      %2512 = vmatpush2.bf16.msra.mxu0 0
      %2513 = vmatprep.mubr.bf16.mxu0 0
      %2514 = vmatmul.mubr.bf16.gmra.mxu0 %v2479
      %v2515 = vpop.f32.mrf.mxu0
      %v2516 = vadd.f32 0.0, %v2515
      %v2517 = vpop.f32.mrf.mxu0
      %v2518 = vpop.f32.mrf.mxu0
      %v2519 = vpop.f32.mrf.mxu0
      %2520 = vdwg.mxu0
      %v2525 = vunpack.c.l.b16 %v2450
      %v2526 = vunpack.c.l.b16 %v2451
      %v2527 = vunpack.c.l.b16 %v2452
      %v2528 = vunpack.c.l.b16 %v2453
      %v2529 = vpack.c.b16 %v2526, %v2525
      %v2530 = vpack.c.b16 %v2528, %v2527
      %v2534 = vsel %vm557, %v2449, 0
      %2536 = vmatprep.subr.bf16.mxu0 0
      %2537 = vmatpush1.bf16.msra.mxu0 0
      %2538 = vmatprep.subr.bf16.mxu0 0
      %2539 = vmatpush1.bf16.msra.mxu0 0
      %2540 = vmatprep.subr.bf16.mxu0 0
      %2541 = vmatpush1.bf16.msra.mxu0 0
      %2542 = vmatprep.subr.bf16.mxu0 0
      %2543 = vmatpush1.bf16.msra.mxu0 0
      %2544 = vmatprep.subr.bf16.mxu0 0
      %2545 = vmatpush1.bf16.msra.mxu0 0
      %2546 = vmatprep.subr.bf16.mxu0 0
      %2547 = vmatpush1.bf16.msra.mxu0 0
      %2548 = vmatprep.subr.bf16.mxu0 0
      %2549 = vmatpush1.bf16.msra.mxu0 %v2530
      %2550 = vmatprep.subr.bf16.mxu0 0
      %2551 = vmatpush1.bf16.msra.mxu0 %v2529
      %2552 = vmatprep.subr.bf16.mxu0 0
      %2553 = vmatpush2.bf16.msra.mxu0 0
      %2554 = vmatprep.subr.bf16.mxu0 0
      %2555 = vmatpush2.bf16.msra.mxu0 0
      %2556 = vmatprep.subr.bf16.mxu0 0
      %2557 = vmatpush2.bf16.msra.mxu0 0
      %2558 = vmatprep.subr.bf16.mxu0 0
      %2559 = vmatpush2.bf16.msra.mxu0 0
      %2560 = vmatprep.subr.bf16.mxu0 0
      %2561 = vmatpush2.bf16.msra.mxu0 0
      %2562 = vmatprep.subr.bf16.mxu0 0
      %2563 = vmatpush2.bf16.msra.mxu0 0
      %2564 = vmatprep.subr.bf16.mxu0 0
      %2565 = vmatpush2.bf16.msra.mxu0 0
      %2566 = vmatprep.subr.bf16.mxu0 0
      %2567 = vmatpush2.bf16.msra.mxu0 0
      %2568 = vmatprep.mubr.bf16.mxu0 0
      %2569 = vmatmul.mubr.bf16.gmra.mxu0 %v2534
      %v2570 = vpop.f32.mrf.mxu0
      %v2571 = vadd.f32 %v2516, %v2570
      %v2572 = vpop.f32.mrf.mxu0
      %v2573 = vpop.f32.mrf.mxu0
      %v2574 = vpop.f32.mrf.mxu0
      %2575 = vdwg.mxu0
      %v2576 = vld [vmem:[%s11] sm:$0x1]
      %v2578 = vlaneseq
      %v2579 = vshrl.u32 %v2578, 7
      %v2580 = vsub.s32 0, %v2579
      %v2581 = vrot.slane %v2576, %v2580
      %v2583 = vadd.f32 %v2571, %v2581
      %v2584 = vld [vmem:[%s12] sm:$0xf]
      %v2585 = vld [vmem:[%s12 + $0x4] sm:$0xf]
      %v2586 = vld [vmem:[%s12 + $0x8] sm:$0xf]
      %v2587 = vld [vmem:[%s12 + $0xc] sm:$0xf]
      %v2592 = vunpack.c.l.b16 %v2584
      %v2593 = vunpack.c.l.b16 %v2585
      %v2594 = vunpack.c.l.b16 %v2586
      %v2595 = vunpack.c.l.b16 %v2587
      %v2596 = vpack.c.b16 %v2593, %v2592
      %v2597 = vpack.c.b16 %v2595, %v2594
      %2600 = vmatprep.subr.bf16.mxu0 0
      %2601 = vmatpush1.bf16.msra.mxu0 0
      %2602 = vmatprep.subr.bf16.mxu0 0
      %2603 = vmatpush1.bf16.msra.mxu0 0
      %2604 = vmatprep.subr.bf16.mxu0 0
      %2605 = vmatpush1.bf16.msra.mxu0 0
      %2606 = vmatprep.subr.bf16.mxu0 0
      %2607 = vmatpush1.bf16.msra.mxu0 0
      %2608 = vmatprep.subr.bf16.mxu0 0
      %2609 = vmatpush1.bf16.msra.mxu0 0
      %2610 = vmatprep.subr.bf16.mxu0 0
      %2611 = vmatpush1.bf16.msra.mxu0 0
      %2612 = vmatprep.subr.bf16.mxu0 0
      %2613 = vmatpush1.bf16.msra.mxu0 %v2597
      %2614 = vmatprep.subr.bf16.mxu0 0
      %2615 = vmatpush1.bf16.msra.mxu0 %v2596
      %2616 = vmatprep.subr.bf16.mxu0 0
      %2617 = vmatpush2.bf16.msra.mxu0 0
      %2618 = vmatprep.subr.bf16.mxu0 0
      %2619 = vmatpush2.bf16.msra.mxu0 0
      %2620 = vmatprep.subr.bf16.mxu0 0
      %2621 = vmatpush2.bf16.msra.mxu0 0
      %2622 = vmatprep.subr.bf16.mxu0 0
      %2623 = vmatpush2.bf16.msra.mxu0 0
      %2624 = vmatprep.subr.bf16.mxu0 0
      %2625 = vmatpush2.bf16.msra.mxu0 0
      %2626 = vmatprep.subr.bf16.mxu0 0
      %2627 = vmatpush2.bf16.msra.mxu0 0
      %2628 = vmatprep.subr.bf16.mxu0 0
      %2629 = vmatpush2.bf16.msra.mxu0 0
      %2630 = vmatprep.subr.bf16.mxu0 0
      %2631 = vmatpush2.bf16.msra.mxu0 0
      %2632 = vmatprep.mubr.bf16.mxu0 0
      %2633 = vmatmul.mubr.bf16.gmra.mxu0 %v2198
      %v2634 = vpop.f32.mrf.mxu0
      %v2635 = vadd.f32 0.0, %v2634
      %v2636 = vpop.f32.mrf.mxu0
      %v2637 = vpop.f32.mrf.mxu0
      %v2638 = vpop.f32.mrf.mxu0
      %2639 = vdwg.mxu0
      %v2640 = vadd.f32 %v2583, %v2635
      %v2641 = vld [vmem:[%s13] sm:$0x1]
      %v2643 = vlaneseq
      %v2644 = vshrl.u32 %v2643, 7
      %v2645 = vsub.s32 0, %v2644
      %v2646 = vrot.slane %v2641, %v2645
      %v2648 = vadd.f32 %v2640, %v2646
      %v2649 = vxor.u32 %v2648, 2147483648
      %v2650 = vmul.f32 %v2649, 1.442695
      %v2651 = vpow.pop %v2650
      %v2652 = vadd.f32 %v2651, 1.0
      %v2653 = vrcp.pop %v2652
      %v2654 = vmul.f32 1.0, %v2653
      %v2655 = vtanh.pop %v2648
      %2657 = vrot.lane.b32.xlu0 %v2172, 32
      %v2658 = vpop.permute.xlu0 %2657
      %v2660 = vmul.f32 %v2654, %v2658
      %2662 = vrot.lane.b32.xlu0 %v2655, 64
      %v2663 = vpop.permute.xlu0 %2662
      %v2665 = vmul.f32 %v2654, %v2663
      %2667 = vrot.lane.b32.xlu0 %v2665, 32
      %v2668 = vpop.permute.xlu0 %2667
      %v2670 = vadd.f32 %v2660, %v2668
      %v2671 = vtanh.pop %v2670
      %2673 = vrot.lane.b32.xlu0 %v2671, 64
      %v2674 = vpop.permute.xlu0 %2673
      %v2676 = vmul.f32 %v2654, %v2674
      %2678 = vrot.lane.b32.xlu0 %v2676, 32
      %v2679 = vpop.permute.xlu0 %2678
      %2681 = vst.msk [vmem:[#allocation2] sm:$0x3] %vm1062, %v2679
      %2683 = vrot.lane.b32.xlu0 %v2670, 96
      %v2684 = vpop.permute.xlu0 %2683
      %2686 = vst.msk [vmem:[#allocation3] sm:$0x3] %vm1062, %v2684
      %s2687 = scalar_lea.vmem %s503, 6
      %2688 = vst.msk [vmem:[%s2687] sm:$0x3] %vm1062, %v2679
      %v2689 = vlaneseq
      %v2690 = vshrl.u32 %v2689, 7
      %v2691 = vsub.s32 %v682, %v2690
      %v2692 = vrot.slane %v2409, %v2691
      %v2693 = vlaneseq
      %v2694 = vshrl.u32 %v2693, 7
      %v2695 = vsub.s32 %v687, %v2694
      %v2696 = vrot.slane %v2414, %v2695
      %v2697 = vsel %vm692, %v2696, %v2692
      %v2698 = vlaneseq
      %v2699 = vshrl.u32 %v2698, 7
      %v2700 = vsub.s32 %v682, %v2699
      %v2701 = vrot.slane %v2419, %v2700
      %v2702 = vlaneseq
      %v2703 = vshrl.u32 %v2702, 7
      %v2704 = vsub.s32 %v687, %v2703
      %v2705 = vrot.slane %v2424, %v2704
      %v2706 = vsel %vm692, %v2705, %v2701
      %v2707 = vsel %vm703, %v2706, %v2697
      %s2709 = scalar_lea.vmem %s509, 6
      %2710 = vst.msk [vmem:[%s2709] sm:$0x3] %vm706, %v2707
      %s2711 = smul.u32 4, %s29
      %p2712 = scmp.lt.s32.totalorder %s2711, 7
      %s2713 = scalar_select %p2712, %s2711, 7
      %s2714 = smul.addr %s2713, 2
      %s2715 = scalar_lea.vmem %s14, %s2714
      %s2716 = smul.u32 4, %s29
      %p2717 = scmp.lt.s32.totalorder %s2716, 7
      %s2718 = scalar_select %p2717, %s2716, 7
      %s2719 = smul.addr %s2718, 2
      %s2720 = scalar_lea.vmem %s15, %s2719
      // Predicated region
      $region81: #{encoder_decoder_forward.10} parent=75 // pred_check
        %p2721 = pneg %p346
      $region82: #{encoder_decoder_forward.10} parent=75 // pred_check_branch
        %2723 = sbr.rel (%p2721) target = $region84
      $region83: #{encoder_decoder_forward.10} parent=75 // pred_region
        %s2724 = smul.u32 4, %s29
      $region84: #{encoder_decoder_forward.10} parent=75 // pred_fallthru
        _
      // Predicated region
      $region85: #{encoder_decoder_forward.10} parent=75 // pred_check
        %p2725 = pneg %p372
      $region86: #{encoder_decoder_forward.10} parent=75 // pred_check_branch
        %2727 = sbr.rel (%p2725) target = $region88
      $region87: #{encoder_decoder_forward.10} parent=75 // pred_region
        %s2728 = smul.u32 4, %s29
      $region88: #{encoder_decoder_forward.10} parent=75 // pred_fallthru
        _
    $region76: #{encoder_decoder_forward.10} parent=5 // pred_fallthru
      _
    %p2729 = scmp.le.s32.totalorder 2, %s24
    // Predicated region
    $region89: #{encoder_decoder_forward.10} parent=5 // pred_check
      %p2730 = pneg %p2729
    $region90: #{encoder_decoder_forward.10} parent=5 // pred_check_branch
      %2732 = sbr.rel (%p2730) target = $region92
    $region91: #{encoder_decoder_forward.10} parent=5 // pred_region
      %s2733 = ssub.s32 %s24, 2
      // Predicated region
      $region93: #{encoder_decoder_forward.10} parent=91 // pred_check
        %p2734 = pneg %p352
      $region94: #{encoder_decoder_forward.10} parent=91 // pred_check_branch
        %2736 = sbr.rel (%p2734) target = $region96
      $region95: #{encoder_decoder_forward.10} parent=91 // pred_region
        %s2737 = smul.u32 4, %s30
        %p2738 = scmp.lt.s32.totalorder %s2737, 7
        %s2739 = scalar_select %p2738, %s2737, 7
        %s2740 = smul.addr %s2739, 2
        %s2741 = scalar_lea.vmem %s14, %s2740
      $region96: #{encoder_decoder_forward.10} parent=91 // pred_fallthru
        _
      // Predicated region
      $region97: #{encoder_decoder_forward.10} parent=91 // pred_check
        %p2742 = pneg %p378
      $region98: #{encoder_decoder_forward.10} parent=91 // pred_check_branch
        %2744 = sbr.rel (%p2742) target = $region100
      $region99: #{encoder_decoder_forward.10} parent=91 // pred_region
        %s2745 = smul.u32 4, %s30
        %p2746 = scmp.lt.s32.totalorder %s2745, 7
        %s2747 = scalar_select %p2746, %s2745, 7
        %s2748 = smul.addr %s2747, 2
        %s2749 = scalar_lea.vmem %s15, %s2748
      $region100: #{encoder_decoder_forward.10} parent=91 // pred_fallthru
        _
    $region92: #{encoder_decoder_forward.10} parent=5 // pred_fallthru
      _
  $region6: #{encoder_decoder_forward.10} parent=0 // loop_footer
    %s28 = sadd.s32 1, %s24
  $region7: #{encoder_decoder_forward.10} parent=0 // loop_footer_branch
    %23 = sbr.rel target = $region3
  $region8: #{encoder_decoder_forward.10} parent=0 // loop_exit
    _

</llo_original>
